<compile_context>
chip_gen: v5e
topology: v5e:2x2
jax: 0.10.0
libtpu: 0.0.40
codegen_flags: <defaults>
</compile_context>

<pallas_src>
import functools

import jax
import jax.numpy as jnp
from jax import lax
from jax.experimental import pallas as pl
from jax.experimental.pallas import tpu as pltpu

LANES = 128


def _round_up(x, m):
    return (x + m - 1) // m * m


# ----------------------------------------------------------------------------
# Pallas kernel 1: conv1 (matmul vs. pool-blocked weight) + bias + ReLU +
# fused 2x2 max-pool.  One image per grid step.
# ----------------------------------------------------------------------------
def _conv_pool_kernel(p_ref, w_ref, b_ref, o_ref):
    patches = p_ref[0]                                        # (S, Kp) bf16
    acc = jnp.dot(patches, w_ref[...],
                  preferred_element_type=jnp.float32)         # (S, 4*128) f32
    # Fused 2x2 max-pool: the 4 lane chunks are the conv at the 4 pool offsets.
    pooled = jnp.maximum(
        jnp.maximum(acc[:, 0 * LANES:1 * LANES], acc[:, 1 * LANES:2 * LANES]),
        jnp.maximum(acc[:, 2 * LANES:3 * LANES], acc[:, 3 * LANES:4 * LANES]))
    pooled = jnp.maximum(pooled + b_ref[...], 0.0)            # bias + ReLU (f32)
    o_ref[0] = pooled.astype(o_ref.dtype)


def conv_relu_pool(patches, w_blk, bias):
    """patches: (N, S, Kp) bf16; w_blk: (Kp, 512) bf16; bias: (1, 128) f32.
    Returns pooled conv activations (N, S, 128) bf16 (S = pooled H*W)."""
    N, S, Kp = patches.shape
    return pl.pallas_call(
        _conv_pool_kernel,
        out_shape=jax.ShapeDtypeStruct((N, S, LANES), jnp.bfloat16),
        grid=(N,),
        in_specs=[
            pl.BlockSpec((1, S, Kp), lambda n: (n, 0, 0)),
            pl.BlockSpec((Kp, 4 * LANES), lambda n: (0, 0)),   # resident weight
            pl.BlockSpec((1, LANES), lambda n: (0, 0)),        # resident bias
        ],
        out_specs=pl.BlockSpec((1, S, LANES), lambda n: (n, 0, 0)),
        compiler_params=pltpu.CompilerParams(
            dimension_semantics=("parallel",)),
    )(patches, w_blk, bias)


# ----------------------------------------------------------------------------
# Pallas kernel 2: conv2 + bias + ReLU + fused pool + flatten + fc1/fc2/fc3,
# all in one call.  One image per grid step; intermediates never leave VMEM.
# ----------------------------------------------------------------------------
def _conv_pool_fc_kernel(p_ref, w2_ref, b2_ref, w1r_ref, bf1_ref,
                         wf2_ref, bf2_ref, wf3_ref, bf3_ref, o_ref, *, n_pos):
    patches = p_ref[0]                                        # (25, Kp) bf16
    acc = jnp.dot(patches, w2_ref[...],
                  preferred_element_type=jnp.float32)         # (25, 512) f32
    a = jnp.maximum(
        jnp.maximum(acc[:, 0 * LANES:1 * LANES], acc[:, 1 * LANES:2 * LANES]),
        jnp.maximum(acc[:, 2 * LANES:3 * LANES], acc[:, 3 * LANES:4 * LANES]))
    a = jnp.maximum(a + b2_ref[...], 0.0)                     # (25, 128) pooled

    # fc1: contraction over (spatial position, channel) with the CHW flatten
    # order folded into w1r at trace time.  Done as 25 accumulated M=1
    # matmuls -> no in-kernel reshape/relayout of the activation.
    y = bf1_ref[...]                                          # (1, 128) f32
    for hw in range(n_pos):
        a_row = a[hw:hw + 1, :].astype(jnp.bfloat16)          # (1, 128)
        y = y + jnp.dot(a_row, w1r_ref[hw],
                        preferred_element_type=jnp.float32)
    y = jnp.maximum(y, 0.0)

    h = jnp.dot(y.astype(jnp.bfloat16), wf2_ref[...],
                preferred_element_type=jnp.float32) + bf2_ref[...]
    h = jnp.maximum(h, 0.0)
    out = jnp.dot(h.astype(jnp.bfloat16), wf3_ref[...],
                  preferred_element_type=jnp.float32) + bf3_ref[...]
    o_ref[0] = out


def conv_pool_fc(patches, w2_blk, b2, w1r, bf1, wf2, bf2, wf3, bf3):
    N, S, Kp = patches.shape
    out = pl.pallas_call(
        functools.partial(_conv_pool_fc_kernel, n_pos=S),
        out_shape=jax.ShapeDtypeStruct((N, 1, LANES), jnp.float32),
        grid=(N,),
        in_specs=[
            pl.BlockSpec((1, S, Kp), lambda n: (n, 0, 0)),
            pl.BlockSpec((Kp, 4 * LANES), lambda n: (0, 0)),
            pl.BlockSpec((1, LANES), lambda n: (0, 0)),
            pl.BlockSpec((S, LANES, LANES), lambda n: (0, 0, 0)),
            pl.BlockSpec((1, LANES), lambda n: (0, 0)),
            pl.BlockSpec((LANES, LANES), lambda n: (0, 0)),
            pl.BlockSpec((1, LANES), lambda n: (0, 0)),
            pl.BlockSpec((LANES, LANES), lambda n: (0, 0)),
            pl.BlockSpec((1, LANES), lambda n: (0, 0)),
        ],
        out_specs=pl.BlockSpec((1, 1, LANES), lambda n: (n, 0, 0)),
        compiler_params=pltpu.CompilerParams(
            dimension_semantics=("parallel",)),
    )(patches, w2_blk, b2, w1r, bf1, wf2, bf2, wf3, bf3)
    return out.reshape(N, LANES)


# ----------------------------------------------------------------------------
# XLA glue: pool-window patch extraction and trace-time weight packing.
# ----------------------------------------------------------------------------
def _pool_patches(x):
    """x: (N, H, W, C) NHWC, H/W even.  Extract one 6x6 window (stride 2) per
    pooled output position, flattened in (u, v, c) order -> (N, OH*OW, 36*C)."""
    N, H, W, C = x.shape
    OH, OW = (H - 6) // 2 + 1, (W - 6) // 2 + 1
    cols = jnp.stack(
        [x[:, u:u + 2 * OH - 1:2, v:v + 2 * OW - 1:2, :]
         for u in range(6) for v in range(6)],
        axis=3)                                               # (N, OH, OW, 36, C)
    return cols.reshape(N, OH * OW, 36 * C), (OH, OW)


def _make_pool_conv_weight(w):
    """w: (OutC, InC, 5, 5) PyTorch conv weight -> (Kp, 4*128) bf16 block
    matrix.  Column block p = ph*2+pw evaluates the conv at pool offset
    (ph, pw) of the shared 6x6 patch (k = (u*6+v)*InC + c)."""
    OutC, InC, KH, KW = w.shape
    wt = jnp.transpose(w, (2, 3, 1, 0))                       # (KH, KW, InC, OutC)
    blocks = []
    for ph in range(2):
        for pw in range(2):
            z = jnp.zeros((6, 6, InC, OutC), w.dtype)
            z = z.at[ph:ph + KH, pw:pw + KW].set(wt)
            z = z.reshape(36 * InC, OutC)
            blocks.append(jnp.pad(z, ((0, 0), (0, LANES - OutC))))
    blk = jnp.concatenate(blocks, axis=1)                     # (36*InC, 512)
    kp = _round_up(36 * InC, LANES)
    return jnp.pad(blk, ((0, kp - 36 * InC), (0, 0))).astype(jnp.bfloat16)


def _pad_bias(b):
    return jnp.pad(b.astype(jnp.float32),
                   (0, LANES - b.shape[0])).reshape(1, LANES)


def _prep_fc_weights(params):
    # fc1: absorb PyTorch's (C, H, W) flatten order: W1[o, c*25+hw] -> [hw, c, o]
    w1 = params["fc1_w"].reshape(120, 16, 25)
    w1 = jnp.transpose(w1, (2, 1, 0))                         # (25, 16, 120)
    w1 = jnp.pad(w1, ((0, 0), (0, LANES - 16), (0, LANES - 120)))
    w2 = jnp.pad(params["fc2_w"].T, ((0, LANES - 120), (0, LANES - 84)))
    w3 = jnp.pad(params["fc3_w"].T, ((0, LANES - 84), (0, LANES - 10)))
    return (w1.astype(jnp.bfloat16), _pad_bias(params["fc1_b"]),
            w2.astype(jnp.bfloat16), _pad_bias(params["fc2_b"]),
            w3.astype(jnp.bfloat16), _pad_bias(params["fc3_b"]))


# ----------------------------------------------------------------------------
# Parameter init (deterministic, PyTorch-style uniform(-1/sqrt(fan_in), ...))
# ----------------------------------------------------------------------------
def _uniform(key, shape, fan_in):
    bound = 1.0 / jnp.sqrt(jnp.asarray(fan_in, jnp.float32))
    return jax.random.uniform(key, shape, jnp.float32, -bound, bound)


def init_params(key):
    ks = jax.random.split(key, 10)
    p = {}
    p["conv1_w"] = _uniform(ks[0], (6, 3, 5, 5), 3 * 5 * 5)
    p["conv1_b"] = _uniform(ks[1], (6,), 3 * 5 * 5)
    p["conv2_w"] = _uniform(ks[2], (16, 6, 5, 5), 6 * 5 * 5)
    p["conv2_b"] = _uniform(ks[3], (16,), 6 * 5 * 5)
    p["fc1_w"] = _uniform(ks[4], (120, 400), 400)   # PyTorch Linear: (out, in)
    p["fc1_b"] = _uniform(ks[5], (120,), 400)
    p["fc2_w"] = _uniform(ks[6], (84, 120), 120)
    p["fc2_b"] = _uniform(ks[7], (84,), 120)
    p["fc3_w"] = _uniform(ks[8], (10, 84), 84)
    p["fc3_b"] = _uniform(ks[9], (10,), 84)
    return p


# ----------------------------------------------------------------------------
# Forward pass (matches Net.forward)
# ----------------------------------------------------------------------------
@jax.jit
def net_forward(params, x_nchw):
    N = x_nchw.shape[0]
    x = jnp.transpose(x_nchw, (0, 2, 3, 1)).astype(jnp.bfloat16)   # NCHW -> NHWC

    # conv1 + ReLU + 2x2 max-pool (single fused pallas_call)
    p1, (oh1, ow1) = _pool_patches(x)                              # (N, 196, 108)
    k1 = _round_up(p1.shape[-1], LANES)
    p1 = jnp.pad(p1, ((0, 0), (0, 0), (0, k1 - p1.shape[-1])))
    w1_blk = _make_pool_conv_weight(params["conv1_w"])             # (128, 512)
    a1 = conv_relu_pool(p1, w1_blk, _pad_bias(params["conv1_b"]))  # (N,196,128) bf16

    # conv2 + ReLU + pool + flatten + fc1 + fc2 + fc3 (single fused pallas_call)
    a1 = a1.reshape(N, oh1, ow1, LANES)[..., :params["conv2_w"].shape[1]]
    p2, _ = _pool_patches(a1)                                      # (N, 25, 216)
    k2 = _round_up(p2.shape[-1], LANES)
    p2 = jnp.pad(p2, ((0, 0), (0, 0), (0, k2 - p2.shape[-1])))
    w2_blk = _make_pool_conv_weight(params["conv2_w"])             # (256, 512)
    fc = _prep_fc_weights(params)
    out = conv_pool_fc(p2, w2_blk, _pad_bias(params["conv2_b"]), *fc)
    return out[:, :10]


# Pure-JAX f32 reference for correctness checking.
@jax.jit
def net_forward_ref(params, x_nchw):
    x = lax.conv_general_dilated(
        x_nchw, params["conv1_w"], window_strides=(1, 1), padding="VALID",
        dimension_numbers=("NCHW", "OIHW", "NCHW"))
    x = jnp.maximum(x + params["conv1_b"][None, :, None, None], 0.0)
    x = lax.reduce_window(x, -jnp.inf, lax.max, (1, 1, 2, 2), (1, 1, 2, 2),
                          "VALID")
    x = lax.conv_general_dilated(
        x, params["conv2_w"], window_strides=(1, 1), padding="VALID",
        dimension_numbers=("NCHW", "OIHW", "NCHW"))
    x = jnp.maximum(x + params["conv2_b"][None, :, None, None], 0.0)
    x = lax.reduce_window(x, -jnp.inf, lax.max, (1, 1, 2, 2), (1, 1, 2, 2),
                          "VALID")
    x = x.reshape(x.shape[0], -1)
    x = jnp.maximum(x @ params["fc1_w"].T + params["fc1_b"], 0.0)
    x = jnp.maximum(x @ params["fc2_w"].T + params["fc2_b"], 0.0)
    return x @ params["fc3_w"].T + params["fc3_b"]


if __name__ == "__main__":
    key = jax.random.PRNGKey(0)
    k_params, k_x = jax.random.split(key)
    params = init_params(k_params)
    # The module's spatial math (16*5*5 flatten) implies 32x32 inputs; batch=2.
    x = jax.random.normal(k_x, (2, 3, 32, 32), dtype=jnp.float32)

    out = jax.block_until_ready(net_forward(params, x))
    ref = jax.block_until_ready(net_forward_ref(params, x))

    assert out.shape == (2, 10), out.shape
    assert bool(jnp.all(jnp.isfinite(out)))
    max_err = float(jnp.max(jnp.abs(out - ref)))
    assert max_err < 1e-1, f"max abs error vs f32 reference: {max_err}"
    print("KERNEL_OK")
</pallas_src>

<mosaic_0001>
module attributes {stable_mosaic.version = 11 : i64} {
  func.func @_conv_pool_kernel(%arg0: i32, %arg1: memref<1x196x128xbf16, #tpu.memory_space<vmem>>, %arg2: memref<128x512xbf16, #tpu.memory_space<vmem>>, %arg3: memref<1x128xf32, #tpu.memory_space<vmem>>, %arg4: memref<1x196x128xbf16, #tpu.memory_space<vmem>>) attributes {dimension_semantics = [#tpu.dimension_semantics<parallel>], iteration_bounds = array<i64: 2>, scalar_prefetch = 0 : i64, scratch_operands = 0 : i64, tpu.core_type = #tpu.core_type<tc>, window_params = [{transform_indices = @transform_0, window_bounds = array<i64: 1, 196, 128>}, {pipeline_mode = #tpu.pipeline_mode<synchronous>, transform_indices = @transform_1, window_bounds = array<i64: 128, 512>}, {pipeline_mode = #tpu.pipeline_mode<synchronous>, transform_indices = @transform_2, window_bounds = array<i64: 1, 128>}, {transform_indices = @transform_3, window_bounds = array<i64: 1, 196, 128>}]} {
    %c0 = arith.constant 0 : index
    %c0_0 = arith.constant 0 : index
    %c0_1 = arith.constant 0 : index
    %0 = vector.load %arg1[%c0, %c0_0, %c0_1] : memref<1x196x128xbf16, #tpu.memory_space<vmem>>, vector<1x196x128xbf16>
    %1 = vector.shape_cast %0 : vector<1x196x128xbf16> to vector<196x128xbf16>
    %c0_2 = arith.constant 0 : index
    %c0_3 = arith.constant 0 : index
    %2 = vector.load %arg2[%c0_2, %c0_3] : memref<128x512xbf16, #tpu.memory_space<vmem>>, vector<128x512xbf16>
    %cst = arith.constant dense<0.000000e+00> : vector<196x512xf32>
    %3 = tpu.matmul %1, %2, %cst {dimension_numbers = #tpu.dot_dimension_numbers<[1], [0], [0], [1], [0, 0, 1, 1], [], []>} : vector<196x128xbf16>, vector<128x512xbf16>, vector<196x512xf32> -> vector<196x512xf32>
    %4 = vector.extract_strided_slice %3 {offsets = [0, 0], sizes = [196, 128], strides = [1, 1]} : vector<196x512xf32> to vector<196x128xf32>
    %5 = vector.extract_strided_slice %3 {offsets = [0, 128], sizes = [196, 128], strides = [1, 1]} : vector<196x512xf32> to vector<196x128xf32>
    %6 = arith.maximumf %4, %5 : vector<196x128xf32>
    %7 = vector.extract_strided_slice %3 {offsets = [0, 256], sizes = [196, 128], strides = [1, 1]} : vector<196x512xf32> to vector<196x128xf32>
    %8 = vector.extract_strided_slice %3 {offsets = [0, 384], sizes = [196, 128], strides = [1, 1]} : vector<196x512xf32> to vector<196x128xf32>
    %9 = arith.maximumf %7, %8 : vector<196x128xf32>
    %10 = arith.maximumf %6, %9 : vector<196x128xf32>
    %c0_4 = arith.constant 0 : index
    %c0_5 = arith.constant 0 : index
    %11 = vector.load %arg3[%c0_4, %c0_5] : memref<1x128xf32, #tpu.memory_space<vmem>>, vector<1x128xf32>
    %12 = vector.broadcast %11 : vector<1x128xf32> to vector<196x128xf32>
    %13 = arith.addf %10, %12 : vector<196x128xf32>
    %cst_6 = arith.constant 0.000000e+00 : f32
    %14 = vector.broadcast %cst_6 : f32 to vector<196x128xf32>
    %15 = arith.maximumf %13, %14 : vector<196x128xf32>
    %16 = arith.truncf %15 : vector<196x128xf32> to vector<196x128xbf16>
    %c0_7 = arith.constant 0 : index
    %c0_8 = arith.constant 0 : index
    %c0_9 = arith.constant 0 : index
    %17 = vector.load %arg4[%c0_7, %c0_8, %c0_9] : memref<1x196x128xbf16, #tpu.memory_space<vmem>>, vector<1x196x128xbf16>
    %18 = vector.shape_cast %17 : vector<1x196x128xbf16> to vector<196x128xbf16>
    %19 = vector.shape_cast %16 : vector<196x128xbf16> to vector<1x196x128xbf16>
    tpu.vector_store %arg4[%c0_7, %c0_8, %c0_9], %19 {strides = array<i32>} : memref<1x196x128xbf16, #tpu.memory_space<vmem>>, vector<1x196x128xbf16>,
    return
  }
  func.func @transform_0(%arg0: i32) -> (i32, i32, i32) {
    %c0_i32 = arith.constant 0 : i32
    %c0_i32_0 = arith.constant 0 : i32
    %c0_i32_1 = arith.constant 0 : i32
    return %arg0, %c0_i32, %c0_i32_0 : i32, i32, i32
  }
  func.func @transform_1(%arg0: i32) -> (i32, i32) {
    %c0_i32 = arith.constant 0 : i32
    %c0_i32_0 = arith.constant 0 : i32
    %c0_i32_1 = arith.constant 0 : i32
    return %c0_i32, %c0_i32_0 : i32, i32
  }
  func.func @transform_2(%arg0: i32) -> (i32, i32) {
    %c0_i32 = arith.constant 0 : i32
    %c0_i32_0 = arith.constant 0 : i32
    %c0_i32_1 = arith.constant 0 : i32
    return %c0_i32, %c0_i32_0 : i32, i32
  }
  func.func @transform_3(%arg0: i32) -> (i32, i32, i32) {
    %c0_i32 = arith.constant 0 : i32
    %c0_i32_0 = arith.constant 0 : i32
    %c0_i32_1 = arith.constant 0 : i32
    return %arg0, %c0_i32, %c0_i32_0 : i32, i32, i32
  }
}

module attributes {stable_mosaic.version = 11 : i64} {
  func.func @_conv_pool_fc_kernel(%arg0: i32, %arg1: memref<1x25x256xbf16, #tpu.memory_space<vmem>>, %arg2: memref<256x512xbf16, #tpu.memory_space<vmem>>, %arg3: memref<1x128xf32, #tpu.memory_space<vmem>>, %arg4: memref<25x128x128xbf16, #tpu.memory_space<vmem>>, %arg5: memref<1x128xf32, #tpu.memory_space<vmem>>, %arg6: memref<128x128xbf16, #tpu.memory_space<vmem>>, %arg7: memref<1x128xf32, #tpu.memory_space<vmem>>, %arg8: memref<128x128xbf16, #tpu.memory_space<vmem>>, %arg9: memref<1x128xf32, #tpu.memory_space<vmem>>, %arg10: memref<1x1x128xf32, #tpu.memory_space<vmem>>) attributes {dimension_semantics = [#tpu.dimension_semantics<parallel>], iteration_bounds = array<i64: 2>, scalar_prefetch = 0 : i64, scratch_operands = 0 : i64, tpu.core_type = #tpu.core_type<tc>, window_params = [{transform_indices = @transform_0, window_bounds = array<i64: 1, 25, 256>}, {pipeline_mode = #tpu.pipeline_mode<synchronous>, transform_indices = @transform_1, window_bounds = array<i64: 256, 512>}, {pipeline_mode = #tpu.pipeline_mode<synchronous>, transform_indices = @transform_2, window_bounds = array<i64: 1, 128>}, {pipeline_mode = #tpu.pipeline_mode<synchronous>, transform_indices = @transform_3, window_bounds = array<i64: 25, 128, 128>}, {pipeline_mode = #tpu.pipeline_mode<synchronous>, transform_indices = @transform_4, window_bounds = array<i64: 1, 128>}, {pipeline_mode = #tpu.pipeline_mode<synchronous>, transform_indices = @transform_5, window_bounds = array<i64: 128, 128>}, {pipeline_mode = #tpu.pipeline_mode<synchronous>, transform_indices = @transform_6, window_bounds = array<i64: 1, 128>}, {pipeline_mode = #tpu.pipeline_mode<synchronous>, transform_indices = @transform_7, window_bounds = array<i64: 128, 128>}, {pipeline_mode = #tpu.pipeline_mode<synchronous>, transform_indices = @transform_8, window_bounds = array<i64: 1, 128>}, {transform_indices = @transform_9, window_bounds = array<i64: 1, 1, 128>}]} {
    %c0 = arith.constant 0 : index
    %c0_0 = arith.constant 0 : index
    %c0_1 = arith.constant 0 : index
    %0 = vector.load %arg1[%c0, %c0_0, %c0_1] : memref<1x25x256xbf16, #tpu.memory_space<vmem>>, vector<1x25x256xbf16>
    %1 = vector.shape_cast %0 : vector<1x25x256xbf16> to vector<25x256xbf16>
    %c0_2 = arith.constant 0 : index
    %c0_3 = arith.constant 0 : index
    %2 = vector.load %arg2[%c0_2, %c0_3] : memref<256x512xbf16, #tpu.memory_space<vmem>>, vector<256x512xbf16>
    %cst = arith.constant dense<0.000000e+00> : vector<25x512xf32>
    %3 = tpu.matmul %1, %2, %cst {dimension_numbers = #tpu.dot_dimension_numbers<[1], [0], [0], [1], [0, 0, 1, 1], [], []>} : vector<25x256xbf16>, vector<256x512xbf16>, vector<25x512xf32> -> vector<25x512xf32>
    %4 = vector.extract_strided_slice %3 {offsets = [0, 0], sizes = [25, 128], strides = [1, 1]} : vector<25x512xf32> to vector<25x128xf32>
    %5 = vector.extract_strided_slice %3 {offsets = [0, 128], sizes = [25, 128], strides = [1, 1]} : vector<25x512xf32> to vector<25x128xf32>
    %6 = arith.maximumf %4, %5 : vector<25x128xf32>
    %7 = vector.extract_strided_slice %3 {offsets = [0, 256], sizes = [25, 128], strides = [1, 1]} : vector<25x512xf32> to vector<25x128xf32>
    %8 = vector.extract_strided_slice %3 {offsets = [0, 384], sizes = [25, 128], strides = [1, 1]} : vector<25x512xf32> to vector<25x128xf32>
    %9 = arith.maximumf %7, %8 : vector<25x128xf32>
    %10 = arith.maximumf %6, %9 : vector<25x128xf32>
    %c0_4 = arith.constant 0 : index
    %c0_5 = arith.constant 0 : index
    %11 = vector.load %arg3[%c0_4, %c0_5] : memref<1x128xf32, #tpu.memory_space<vmem>>, vector<1x128xf32>
    %12 = vector.broadcast %11 : vector<1x128xf32> to vector<25x128xf32>
    %13 = arith.addf %10, %12 : vector<25x128xf32>
    %cst_6 = arith.constant 0.000000e+00 : f32
    %14 = vector.broadcast %cst_6 : f32 to vector<25x128xf32>
    %15 = arith.maximumf %13, %14 : vector<25x128xf32>
    %c0_7 = arith.constant 0 : index
    %c0_8 = arith.constant 0 : index
    %16 = vector.load %arg5[%c0_7, %c0_8] : memref<1x128xf32, #tpu.memory_space<vmem>>, vector<1x128xf32>
    %17 = vector.extract_strided_slice %15 {offsets = [0, 0], sizes = [1, 128], strides = [1, 1]} : vector<25x128xf32> to vector<1x128xf32>
    %18 = arith.truncf %17 : vector<1x128xf32> to vector<1x128xbf16>
    %c0_9 = arith.constant 0 : index
    %c0_10 = arith.constant 0 : index
    %c0_11 = arith.constant 0 : index
    %19 = vector.load %arg4[%c0_9, %c0_10, %c0_11] : memref<25x128x128xbf16, #tpu.memory_space<vmem>>, vector<1x128x128xbf16>
    %20 = vector.shape_cast %19 : vector<1x128x128xbf16> to vector<128x128xbf16>
    %cst_12 = arith.constant dense<0.000000e+00> : vector<1x128xf32>
    %21 = tpu.matmul %18, %20, %cst_12 {dimension_numbers = #tpu.dot_dimension_numbers<[1], [0], [0], [1], [0, 0, 1, 1], [], []>} : vector<1x128xbf16>, vector<128x128xbf16>, vector<1x128xf32> -> vector<1x128xf32>
    %22 = arith.addf %16, %21 : vector<1x128xf32>
    %23 = vector.extract_strided_slice %15 {offsets = [1, 0], sizes = [1, 128], strides = [1, 1]} : vector<25x128xf32> to vector<1x128xf32>
    %24 = arith.truncf %23 : vector<1x128xf32> to vector<1x128xbf16>
    %c1 = arith.constant 1 : index
    %c0_13 = arith.constant 0 : index
    %c0_14 = arith.constant 0 : index
    %25 = vector.load %arg4[%c1, %c0_13, %c0_14] : memref<25x128x128xbf16, #tpu.memory_space<vmem>>, vector<1x128x128xbf16>
    %26 = vector.shape_cast %25 : vector<1x128x128xbf16> to vector<128x128xbf16>
    %cst_15 = arith.constant dense<0.000000e+00> : vector<1x128xf32>
    %27 = tpu.matmul %24, %26, %cst_15 {dimension_numbers = #tpu.dot_dimension_numbers<[1], [0], [0], [1], [0, 0, 1, 1], [], []>} : vector<1x128xbf16>, vector<128x128xbf16>, vector<1x128xf32> -> vector<1x128xf32>
    %28 = arith.addf %22, %27 : vector<1x128xf32>
    %29 = vector.extract_strided_slice %15 {offsets = [2, 0], sizes = [1, 128], strides = [1, 1]} : vector<25x128xf32> to vector<1x128xf32>
    %30 = arith.truncf %29 : vector<1x128xf32> to vector<1x128xbf16>
    %c2 = arith.constant 2 : index
    %c0_16 = arith.constant 0 : index
    %c0_17 = arith.constant 0 : index
    %31 = vector.load %arg4[%c2, %c0_16, %c0_17] : memref<25x128x128xbf16, #tpu.memory_space<vmem>>, vector<1x128x128xbf16>
    %32 = vector.shape_cast %31 : vector<1x128x128xbf16> to vector<128x128xbf16>
    %cst_18 = arith.constant dense<0.000000e+00> : vector<1x128xf32>
    %33 = tpu.matmul %30, %32, %cst_18 {dimension_numbers = #tpu.dot_dimension_numbers<[1], [0], [0], [1], [0, 0, 1, 1], [], []>} : vector<1x128xbf16>, vector<128x128xbf16>, vector<1x128xf32> -> vector<1x128xf32>
    %34 = arith.addf %28, %33 : vector<1x128xf32>
    %35 = vector.extract_strided_slice %15 {offsets = [3, 0], sizes = [1, 128], strides = [1, 1]} : vector<25x128xf32> to vector<1x128xf32>
    %36 = arith.truncf %35 : vector<1x128xf32> to vector<1x128xbf16>
    %c3 = arith.constant 3 : index
    %c0_19 = arith.constant 0 : index
    %c0_20 = arith.constant 0 : index
    %37 = vector.load %arg4[%c3, %c0_19, %c0_20] : memref<25x128x128xbf16, #tpu.memory_space<vmem>>, vector<1x128x128xbf16>
    %38 = vector.shape_cast %37 : vector<1x128x128xbf16> to vector<128x128xbf16>
    %cst_21 = arith.constant dense<0.000000e+00> : vector<1x128xf32>
    %39 = tpu.matmul %36, %38, %cst_21 {dimension_numbers = #tpu.dot_dimension_numbers<[1], [0], [0], [1], [0, 0, 1, 1], [], []>} : vector<1x128xbf16>, vector<128x128xbf16>, vector<1x128xf32> -> vector<1x128xf32>
    %40 = arith.addf %34, %39 : vector<1x128xf32>
    %41 = vector.extract_strided_slice %15 {offsets = [4, 0], sizes = [1, 128], strides = [1, 1]} : vector<25x128xf32> to vector<1x128xf32>
    %42 = arith.truncf %41 : vector<1x128xf32> to vector<1x128xbf16>
    %c4 = arith.constant 4 : index
    %c0_22 = arith.constant 0 : index
    %c0_23 = arith.constant 0 : index
    %43 = vector.load %arg4[%c4, %c0_22, %c0_23] : memref<25x128x128xbf16, #tpu.memory_space<vmem>>, vector<1x128x128xbf16>
    %44 = vector.shape_cast %43 : vector<1x128x128xbf16> to vector<128x128xbf16>
    %cst_24 = arith.constant dense<0.000000e+00> : vector<1x128xf32>
    %45 = tpu.matmul %42, %44, %cst_24 {dimension_numbers = #tpu.dot_dimension_numbers<[1], [0], [0], [1], [0, 0, 1, 1], [], []>} : vector<1x128xbf16>, vector<128x128xbf16>, vector<1x128xf32> -> vector<1x128xf32>
    %46 = arith.addf %40, %45 : vector<1x128xf32>
    %47 = vector.extract_strided_slice %15 {offsets = [5, 0], sizes = [1, 128], strides = [1, 1]} : vector<25x128xf32> to vector<1x128xf32>
    %48 = arith.truncf %47 : vector<1x128xf32> to vector<1x128xbf16>
    %c5 = arith.constant 5 : index
    %c0_25 = arith.constant 0 : index
    %c0_26 = arith.constant 0 : index
    %49 = vector.load %arg4[%c5, %c0_25, %c0_26] : memref<25x128x128xbf16, #tpu.memory_space<vmem>>, vector<1x128x128xbf16>
    %50 = vector.shape_cast %49 : vector<1x128x128xbf16> to vector<128x128xbf16>
    %cst_27 = arith.constant dense<0.000000e+00> : vector<1x128xf32>
    %51 = tpu.matmul %48, %50, %cst_27 {dimension_numbers = #tpu.dot_dimension_numbers<[1], [0], [0], [1], [0, 0, 1, 1], [], []>} : vector<1x128xbf16>, vector<128x128xbf16>, vector<1x128xf32> -> vector<1x128xf32>
    %52 = arith.addf %46, %51 : vector<1x128xf32>
    %53 = vector.extract_strided_slice %15 {offsets = [6, 0], sizes = [1, 128], strides = [1, 1]} : vector<25x128xf32> to vector<1x128xf32>
    %54 = arith.truncf %53 : vector<1x128xf32> to vector<1x128xbf16>
    %c6 = arith.constant 6 : index
    %c0_28 = arith.constant 0 : index
    %c0_29 = arith.constant 0 : index
    %55 = vector.load %arg4[%c6, %c0_28, %c0_29] : memref<25x128x128xbf16, #tpu.memory_space<vmem>>, vector<1x128x128xbf16>
    %56 = vector.shape_cast %55 : vector<1x128x128xbf16> to vector<128x128xbf16>
    %cst_30 = arith.constant dense<0.000000e+00> : vector<1x128xf32>
    %57 = tpu.matmul %54, %56, %cst_30 {dimension_numbers = #tpu.dot_dimension_numbers<[1], [0], [0], [1], [0, 0, 1, 1], [], []>} : vector<1x128xbf16>, vector<128x128xbf16>, vector<1x128xf32> -> vector<1x128xf32>
    %58 = arith.addf %52, %57 : vector<1x128xf32>
    %59 = vector.extract_strided_slice %15 {offsets = [7, 0], sizes = [1, 128], strides = [1, 1]} : vector<25x128xf32> to vector<1x128xf32>
    %60 = arith.truncf %59 : vector<1x128xf32> to vector<1x128xbf16>
    %c7 = arith.constant 7 : index
    %c0_31 = arith.constant 0 : index
    %c0_32 = arith.constant 0 : index
    %61 = vector.load %arg4[%c7, %c0_31, %c0_32] : memref<25x128x128xbf16, #tpu.memory_space<vmem>>, vector<1x128x128xbf16>
    %62 = vector.shape_cast %61 : vector<1x128x128xbf16> to vector<128x128xbf16>
    %cst_33 = arith.constant dense<0.000000e+00> : vector<1x128xf32>
    %63 = tpu.matmul %60, %62, %cst_33 {dimension_numbers = #tpu.dot_dimension_numbers<[1], [0], [0], [1], [0, 0, 1, 1], [], []>} : vector<1x128xbf16>, vector<128x128xbf16>, vector<1x128xf32> -> vector<1x128xf32>
    %64 = arith.addf %58, %63 : vector<1x128xf32>
    %65 = vector.extract_strided_slice %15 {offsets = [8, 0], sizes = [1, 128], strides = [1, 1]} : vector<25x128xf32> to vector<1x128xf32>
    %66 = arith.truncf %65 : vector<1x128xf32> to vector<1x128xbf16>
    %c8 = arith.constant 8 : index
    %c0_34 = arith.constant 0 : index
    %c0_35 = arith.constant 0 : index
    %67 = vector.load %arg4[%c8, %c0_34, %c0_35] : memref<25x128x128xbf16, #tpu.memory_space<vmem>>, vector<1x128x128xbf16>
    %68 = vector.shape_cast %67 : vector<1x128x128xbf16> to vector<128x128xbf16>
    %cst_36 = arith.constant dense<0.000000e+00> : vector<1x128xf32>
    %69 = tpu.matmul %66, %68, %cst_36 {dimension_numbers = #tpu.dot_dimension_numbers<[1], [0], [0], [1], [0, 0, 1, 1], [], []>} : vector<1x128xbf16>, vector<128x128xbf16>, vector<1x128xf32> -> vector<1x128xf32>
    %70 = arith.addf %64, %69 : vector<1x128xf32>
    %71 = vector.extract_strided_slice %15 {offsets = [9, 0], sizes = [1, 128], strides = [1, 1]} : vector<25x128xf32> to vector<1x128xf32>
    %72 = arith.truncf %71 : vector<1x128xf32> to vector<1x128xbf16>
    %c9 = arith.constant 9 : index
    %c0_37 = arith.constant 0 : index
    %c0_38 = arith.constant 0 : index
    %73 = vector.load %arg4[%c9, %c0_37, %c0_38] : memref<25x128x128xbf16, #tpu.memory_space<vmem>>, vector<1x128x128xbf16>
    %74 = vector.shape_cast %73 : vector<1x128x128xbf16> to vector<128x128xbf16>
    %cst_39 = arith.constant dense<0.000000e+00> : vector<1x128xf32>
    %75 = tpu.matmul %72, %74, %cst_39 {dimension_numbers = #tpu.dot_dimension_numbers<[1], [0], [0], [1], [0, 0, 1, 1], [], []>} : vector<1x128xbf16>, vector<128x128xbf16>, vector<1x128xf32> -> vector<1x128xf32>
    %76 = arith.addf %70, %75 : vector<1x128xf32>
    %77 = vector.extract_strided_slice %15 {offsets = [10, 0], sizes = [1, 128], strides = [1, 1]} : vector<25x128xf32> to vector<1x128xf32>
    %78 = arith.truncf %77 : vector<1x128xf32> to vector<1x128xbf16>
    %c10 = arith.constant 10 : index
    %c0_40 = arith.constant 0 : index
    %c0_41 = arith.constant 0 : index
    %79 = vector.load %arg4[%c10, %c0_40, %c0_41] : memref<25x128x128xbf16, #tpu.memory_space<vmem>>, vector<1x128x128xbf16>
    %80 = vector.shape_cast %79 : vector<1x128x128xbf16> to vector<128x128xbf16>
    %cst_42 = arith.constant dense<0.000000e+00> : vector<1x128xf32>
    %81 = tpu.matmul %78, %80, %cst_42 {dimension_numbers = #tpu.dot_dimension_numbers<[1], [0], [0], [1], [0, 0, 1, 1], [], []>} : vector<1x128xbf16>, vector<128x128xbf16>, vector<1x128xf32> -> vector<1x128xf32>
    %82 = arith.addf %76, %81 : vector<1x128xf32>
    %83 = vector.extract_strided_slice %15 {offsets = [11, 0], sizes = [1, 128], strides = [1, 1]} : vector<25x128xf32> to vector<1x128xf32>
    %84 = arith.truncf %83 : vector<1x128xf32> to vector<1x128xbf16>
    %c11 = arith.constant 11 : index
    %c0_43 = arith.constant 0 : index
    %c0_44 = arith.constant 0 : index
    %85 = vector.load %arg4[%c11, %c0_43, %c0_44] : memref<25x128x128xbf16, #tpu.memory_space<vmem>>, vector<1x128x128xbf16>
    %86 = vector.shape_cast %85 : vector<1x128x128xbf16> to vector<128x128xbf16>
    %cst_45 = arith.constant dense<0.000000e+00> : vector<1x128xf32>
    %87 = tpu.matmul %84, %86, %cst_45 {dimension_numbers = #tpu.dot_dimension_numbers<[1], [0], [0], [1], [0, 0, 1, 1], [], []>} : vector<1x128xbf16>, vector<128x128xbf16>, vector<1x128xf32> -> vector<1x128xf32>
    %88 = arith.addf %82, %87 : vector<1x128xf32>
    %89 = vector.extract_strided_slice %15 {offsets = [12, 0], sizes = [1, 128], strides = [1, 1]} : vector<25x128xf32> to vector<1x128xf32>
    %90 = arith.truncf %89 : vector<1x128xf32> to vector<1x128xbf16>
    %c12 = arith.constant 12 : index
    %c0_46 = arith.constant 0 : index
    %c0_47 = arith.constant 0 : index
    %91 = vector.load %arg4[%c12, %c0_46, %c0_47] : memref<25x128x128xbf16, #tpu.memory_space<vmem>>, vector<1x128x128xbf16>
    %92 = vector.shape_cast %91 : vector<1x128x128xbf16> to vector<128x128xbf16>
    %cst_48 = arith.constant dense<0.000000e+00> : vector<1x128xf32>
    %93 = tpu.matmul %90, %92, %cst_48 {dimension_numbers = #tpu.dot_dimension_numbers<[1], [0], [0], [1], [0, 0, 1, 1], [], []>} : vector<1x128xbf16>, vector<128x128xbf16>, vector<1x128xf32> -> vector<1x128xf32>
    %94 = arith.addf %88, %93 : vector<1x128xf32>
    %95 = vector.extract_strided_slice %15 {offsets = [13, 0], sizes = [1, 128], strides = [1, 1]} : vector<25x128xf32> to vector<1x128xf32>
    %96 = arith.truncf %95 : vector<1x128xf32> to vector<1x128xbf16>
    %c13 = arith.constant 13 : index
    %c0_49 = arith.constant 0 : index
    %c0_50 = arith.constant 0 : index
    %97 = vector.load %arg4[%c13, %c0_49, %c0_50] : memref<25x128x128xbf16, #tpu.memory_space<vmem>>, vector<1x128x128xbf16>
    %98 = vector.shape_cast %97 : vector<1x128x128xbf16> to vector<128x128xbf16>
    %cst_51 = arith.constant dense<0.000000e+00> : vector<1x128xf32>
    %99 = tpu.matmul %96, %98, %cst_51 {dimension_numbers = #tpu.dot_dimension_numbers<[1], [0], [0], [1], [0, 0, 1, 1], [], []>} : vector<1x128xbf16>, vector<128x128xbf16>, vector<1x128xf32> -> vector<1x128xf32>
    %100 = arith.addf %94, %99 : vector<1x128xf32>
    %101 = vector.extract_strided_slice %15 {offsets = [14, 0], sizes = [1, 128], strides = [1, 1]} : vector<25x128xf32> to vector<1x128xf32>
    %102 = arith.truncf %101 : vector<1x128xf32> to vector<1x128xbf16>
    %c14 = arith.constant 14 : index
    %c0_52 = arith.constant 0 : index
    %c0_53 = arith.constant 0 : index
    %103 = vector.load %arg4[%c14, %c0_52, %c0_53] : memref<25x128x128xbf16, #tpu.memory_space<vmem>>, vector<1x128x128xbf16>
    %104 = vector.shape_cast %103 : vector<1x128x128xbf16> to vector<128x128xbf16>
    %cst_54 = arith.constant dense<0.000000e+00> : vector<1x128xf32>
    %105 = tpu.matmul %102, %104, %cst_54 {dimension_numbers = #tpu.dot_dimension_numbers<[1], [0], [0], [1], [0, 0, 1, 1], [], []>} : vector<1x128xbf16>, vector<128x128xbf16>, vector<1x128xf32> -> vector<1x128xf32>
    %106 = arith.addf %100, %105 : vector<1x128xf32>
    %107 = vector.extract_strided_slice %15 {offsets = [15, 0], sizes = [1, 128], strides = [1, 1]} : vector<25x128xf32> to vector<1x128xf32>
    %108 = arith.truncf %107 : vector<1x128xf32> to vector<1x128xbf16>
    %c15 = arith.constant 15 : index
    %c0_55 = arith.constant 0 : index
    %c0_56 = arith.constant 0 : index
    %109 = vector.load %arg4[%c15, %c0_55, %c0_56] : memref<25x128x128xbf16, #tpu.memory_space<vmem>>, vector<1x128x128xbf16>
    %110 = vector.shape_cast %109 : vector<1x128x128xbf16> to vector<128x128xbf16>
    %cst_57 = arith.constant dense<0.000000e+00> : vector<1x128xf32>
    %111 = tpu.matmul %108, %110, %cst_57 {dimension_numbers = #tpu.dot_dimension_numbers<[1], [0], [0], [1], [0, 0, 1, 1], [], []>} : vector<1x128xbf16>, vector<128x128xbf16>, vector<1x128xf32> -> vector<1x128xf32>
    %112 = arith.addf %106, %111 : vector<1x128xf32>
    %113 = vector.extract_strided_slice %15 {offsets = [16, 0], sizes = [1, 128], strides = [1, 1]} : vector<25x128xf32> to vector<1x128xf32>
    %114 = arith.truncf %113 : vector<1x128xf32> to vector<1x128xbf16>
    %c16 = arith.constant 16 : index
    %c0_58 = arith.constant 0 : index
    %c0_59 = arith.constant 0 : index
    %115 = vector.load %arg4[%c16, %c0_58, %c0_59] : memref<25x128x128xbf16, #tpu.memory_space<vmem>>, vector<1x128x128xbf16>
    %116 = vector.shape_cast %115 : vector<1x128x128xbf16> to vector<128x128xbf16>
    %cst_60 = arith.constant dense<0.000000e+00> : vector<1x128xf32>
    %117 = tpu.matmul %114, %116, %cst_60 {dimension_numbers = #tpu.dot_dimension_numbers<[1], [0], [0], [1], [0, 0, 1, 1], [], []>} : vector<1x128xbf16>, vector<128x128xbf16>, vector<1x128xf32> -> vector<1x128xf32>
    %118 = arith.addf %112, %117 : vector<1x128xf32>
    %119 = vector.extract_strided_slice %15 {offsets = [17, 0], sizes = [1, 128], strides = [1, 1]} : vector<25x128xf32> to vector<1x128xf32>
    %120 = arith.truncf %119 : vector<1x128xf32> to vector<1x128xbf16>
    %c17 = arith.constant 17 : index
    %c0_61 = arith.constant 0 : index
    %c0_62 = arith.constant 0 : index
    %121 = vector.load %arg4[%c17, %c0_61, %c0_62] : memref<25x128x128xbf16, #tpu.memory_space<vmem>>, vector<1x128x128xbf16>
    %122 = vector.shape_cast %121 : vector<1x128x128xbf16> to vector<128x128xbf16>
    %cst_63 = arith.constant dense<0.000000e+00> : vector<1x128xf32>
    %123 = tpu.matmul %120, %122, %cst_63 {dimension_numbers = #tpu.dot_dimension_numbers<[1], [0], [0], [1], [0, 0, 1, 1], [], []>} : vector<1x128xbf16>, vector<128x128xbf16>, vector<1x128xf32> -> vector<1x128xf32>
    %124 = arith.addf %118, %123 : vector<1x128xf32>
    %125 = vector.extract_strided_slice %15 {offsets = [18, 0], sizes = [1, 128], strides = [1, 1]} : vector<25x128xf32> to vector<1x128xf32>
    %126 = arith.truncf %125 : vector<1x128xf32> to vector<1x128xbf16>
    %c18 = arith.constant 18 : index
    %c0_64 = arith.constant 0 : index
    %c0_65 = arith.constant 0 : index
    %127 = vector.load %arg4[%c18, %c0_64, %c0_65] : memref<25x128x128xbf16, #tpu.memory_space<vmem>>, vector<1x128x128xbf16>
    %128 = vector.shape_cast %127 : vector<1x128x128xbf16> to vector<128x128xbf16>
    %cst_66 = arith.constant dense<0.000000e+00> : vector<1x128xf32>
    %129 = tpu.matmul %126, %128, %cst_66 {dimension_numbers = #tpu.dot_dimension_numbers<[1], [0], [0], [1], [0, 0, 1, 1], [], []>} : vector<1x128xbf16>, vector<128x128xbf16>, vector<1x128xf32> -> vector<1x128xf32>
    %130 = arith.addf %124, %129 : vector<1x128xf32>
    %131 = vector.extract_strided_slice %15 {offsets = [19, 0], sizes = [1, 128], strides = [1, 1]} : vector<25x128xf32> to vector<1x128xf32>
    %132 = arith.truncf %131 : vector<1x128xf32> to vector<1x128xbf16>
    %c19 = arith.constant 19 : index
    %c0_67 = arith.constant 0 : index
    %c0_68 = arith.constant 0 : index
    %133 = vector.load %arg4[%c19, %c0_67, %c0_68] : memref<25x128x128xbf16, #tpu.memory_space<vmem>>, vector<1x128x128xbf16>
    %134 = vector.shape_cast %133 : vector<1x128x128xbf16> to vector<128x128xbf16>
    %cst_69 = arith.constant dense<0.000000e+00> : vector<1x128xf32>
    %135 = tpu.matmul %132, %134, %cst_69 {dimension_numbers = #tpu.dot_dimension_numbers<[1], [0], [0], [1], [0, 0, 1, 1], [], []>} : vector<1x128xbf16>, vector<128x128xbf16>, vector<1x128xf32> -> vector<1x128xf32>
    %136 = arith.addf %130, %135 : vector<1x128xf32>
    %137 = vector.extract_strided_slice %15 {offsets = [20, 0], sizes = [1, 128], strides = [1, 1]} : vector<25x128xf32> to vector<1x128xf32>
    %138 = arith.truncf %137 : vector<1x128xf32> to vector<1x128xbf16>
    %c20 = arith.constant 20 : index
    %c0_70 = arith.constant 0 : index
    %c0_71 = arith.constant 0 : index
    %139 = vector.load %arg4[%c20, %c0_70, %c0_71] : memref<25x128x128xbf16, #tpu.memory_space<vmem>>, vector<1x128x128xbf16>
    %140 = vector.shape_cast %139 : vector<1x128x128xbf16> to vector<128x128xbf16>
    %cst_72 = arith.constant dense<0.000000e+00> : vector<1x128xf32>
    %141 = tpu.matmul %138, %140, %cst_72 {dimension_numbers = #tpu.dot_dimension_numbers<[1], [0], [0], [1], [0, 0, 1, 1], [], []>} : vector<1x128xbf16>, vector<128x128xbf16>, vector<1x128xf32> -> vector<1x128xf32>
    %142 = arith.addf %136, %141 : vector<1x128xf32>
    %143 = vector.extract_strided_slice %15 {offsets = [21, 0], sizes = [1, 128], strides = [1, 1]} : vector<25x128xf32> to vector<1x128xf32>
    %144 = arith.truncf %143 : vector<1x128xf32> to vector<1x128xbf16>
    %c21 = arith.constant 21 : index
    %c0_73 = arith.constant 0 : index
    %c0_74 = arith.constant 0 : index
    %145 = vector.load %arg4[%c21, %c0_73, %c0_74] : memref<25x128x128xbf16, #tpu.memory_space<vmem>>, vector<1x128x128xbf16>
    %146 = vector.shape_cast %145 : vector<1x128x128xbf16> to vector<128x128xbf16>
    %cst_75 = arith.constant dense<0.000000e+00> : vector<1x128xf32>
    %147 = tpu.matmul %144, %146, %cst_75 {dimension_numbers = #tpu.dot_dimension_numbers<[1], [0], [0], [1], [0, 0, 1, 1], [], []>} : vector<1x128xbf16>, vector<128x128xbf16>, vector<1x128xf32> -> vector<1x128xf32>
    %148 = arith.addf %142, %147 : vector<1x128xf32>
    %149 = vector.extract_strided_slice %15 {offsets = [22, 0], sizes = [1, 128], strides = [1, 1]} : vector<25x128xf32> to vector<1x128xf32>
    %150 = arith.truncf %149 : vector<1x128xf32> to vector<1x128xbf16>
    %c22 = arith.constant 22 : index
    %c0_76 = arith.constant 0 : index
    %c0_77 = arith.constant 0 : index
    %151 = vector.load %arg4[%c22, %c0_76, %c0_77] : memref<25x128x128xbf16, #tpu.memory_space<vmem>>, vector<1x128x128xbf16>
    %152 = vector.shape_cast %151 : vector<1x128x128xbf16> to vector<128x128xbf16>
    %cst_78 = arith.constant dense<0.000000e+00> : vector<1x128xf32>
    %153 = tpu.matmul %150, %152, %cst_78 {dimension_numbers = #tpu.dot_dimension_numbers<[1], [0], [0], [1], [0, 0, 1, 1], [], []>} : vector<1x128xbf16>, vector<128x128xbf16>, vector<1x128xf32> -> vector<1x128xf32>
    %154 = arith.addf %148, %153 : vector<1x128xf32>
    %155 = vector.extract_strided_slice %15 {offsets = [23, 0], sizes = [1, 128], strides = [1, 1]} : vector<25x128xf32> to vector<1x128xf32>
    %156 = arith.truncf %155 : vector<1x128xf32> to vector<1x128xbf16>
    %c23 = arith.constant 23 : index
    %c0_79 = arith.constant 0 : index
    %c0_80 = arith.constant 0 : index
    %157 = vector.load %arg4[%c23, %c0_79, %c0_80] : memref<25x128x128xbf16, #tpu.memory_space<vmem>>, vector<1x128x128xbf16>
    %158 = vector.shape_cast %157 : vector<1x128x128xbf16> to vector<128x128xbf16>
    %cst_81 = arith.constant dense<0.000000e+00> : vector<1x128xf32>
    %159 = tpu.matmul %156, %158, %cst_81 {dimension_numbers = #tpu.dot_dimension_numbers<[1], [0], [0], [1], [0, 0, 1, 1], [], []>} : vector<1x128xbf16>, vector<128x128xbf16>, vector<1x128xf32> -> vector<1x128xf32>
    %160 = arith.addf %154, %159 : vector<1x128xf32>
    %161 = vector.extract_strided_slice %15 {offsets = [24, 0], sizes = [1, 128], strides = [1, 1]} : vector<25x128xf32> to vector<1x128xf32>
    %162 = arith.truncf %161 : vector<1x128xf32> to vector<1x128xbf16>
    %c24 = arith.constant 24 : index
    %c0_82 = arith.constant 0 : index
    %c0_83 = arith.constant 0 : index
    %163 = vector.load %arg4[%c24, %c0_82, %c0_83] : memref<25x128x128xbf16, #tpu.memory_space<vmem>>, vector<1x128x128xbf16>
    %164 = vector.shape_cast %163 : vector<1x128x128xbf16> to vector<128x128xbf16>
    %cst_84 = arith.constant dense<0.000000e+00> : vector<1x128xf32>
    %165 = tpu.matmul %162, %164, %cst_84 {dimension_numbers = #tpu.dot_dimension_numbers<[1], [0], [0], [1], [0, 0, 1, 1], [], []>} : vector<1x128xbf16>, vector<128x128xbf16>, vector<1x128xf32> -> vector<1x128xf32>
    %166 = arith.addf %160, %165 : vector<1x128xf32>
    %cst_85 = arith.constant 0.000000e+00 : f32
    %167 = vector.broadcast %cst_85 : f32 to vector<1x128xf32>
    %168 = arith.maximumf %166, %167 : vector<1x128xf32>
    %169 = arith.truncf %168 : vector<1x128xf32> to vector<1x128xbf16>
    %c0_86 = arith.constant 0 : index
    %c0_87 = arith.constant 0 : index
    %170 = vector.load %arg6[%c0_86, %c0_87] : memref<128x128xbf16, #tpu.memory_space<vmem>>, vector<128x128xbf16>
    %cst_88 = arith.constant dense<0.000000e+00> : vector<1x128xf32>
    %171 = tpu.matmul %169, %170, %cst_88 {dimension_numbers = #tpu.dot_dimension_numbers<[1], [0], [0], [1], [0, 0, 1, 1], [], []>} : vector<1x128xbf16>, vector<128x128xbf16>, vector<1x128xf32> -> vector<1x128xf32>
    %c0_89 = arith.constant 0 : index
    %c0_90 = arith.constant 0 : index
    %172 = vector.load %arg7[%c0_89, %c0_90] : memref<1x128xf32, #tpu.memory_space<vmem>>, vector<1x128xf32>
    %173 = arith.addf %171, %172 : vector<1x128xf32>
    %cst_91 = arith.constant 0.000000e+00 : f32
    %174 = vector.broadcast %cst_91 : f32 to vector<1x128xf32>
    %175 = arith.maximumf %173, %174 : vector<1x128xf32>
    %176 = arith.truncf %175 : vector<1x128xf32> to vector<1x128xbf16>
    %c0_92 = arith.constant 0 : index
    %c0_93 = arith.constant 0 : index
    %177 = vector.load %arg8[%c0_92, %c0_93] : memref<128x128xbf16, #tpu.memory_space<vmem>>, vector<128x128xbf16>
    %cst_94 = arith.constant dense<0.000000e+00> : vector<1x128xf32>
    %178 = tpu.matmul %176, %177, %cst_94 {dimension_numbers = #tpu.dot_dimension_numbers<[1], [0], [0], [1], [0, 0, 1, 1], [], []>} : vector<1x128xbf16>, vector<128x128xbf16>, vector<1x128xf32> -> vector<1x128xf32>
    %c0_95 = arith.constant 0 : index
    %c0_96 = arith.constant 0 : index
    %179 = vector.load %arg9[%c0_95, %c0_96] : memref<1x128xf32, #tpu.memory_space<vmem>>, vector<1x128xf32>
    %180 = arith.addf %178, %179 : vector<1x128xf32>
    %c0_97 = arith.constant 0 : index
    %c0_98 = arith.constant 0 : index
    %c0_99 = arith.constant 0 : index
    %181 = vector.load %arg10[%c0_97, %c0_98, %c0_99] : memref<1x1x128xf32, #tpu.memory_space<vmem>>, vector<1x1x128xf32>
    %182 = vector.shape_cast %181 : vector<1x1x128xf32> to vector<1x128xf32>
    %183 = vector.shape_cast %180 : vector<1x128xf32> to vector<1x1x128xf32>
    tpu.vector_store %arg10[%c0_97, %c0_98, %c0_99], %183 {strides = array<i32>} : memref<1x1x128xf32, #tpu.memory_space<vmem>>, vector<1x1x128xf32>,
    return
  }
  func.func @transform_0(%arg0: i32) -> (i32, i32, i32) {
    %c0_i32 = arith.constant 0 : i32
    %c0_i32_0 = arith.constant 0 : i32
    %c0_i32_1 = arith.constant 0 : i32
    return %arg0, %c0_i32, %c0_i32_0 : i32, i32, i32
  }
  func.func @transform_1(%arg0: i32) -> (i32, i32) {
    %c0_i32 = arith.constant 0 : i32
    %c0_i32_0 = arith.constant 0 : i32
    %c0_i32_1 = arith.constant 0 : i32
    return %c0_i32, %c0_i32_0 : i32, i32
  }
  func.func @transform_2(%arg0: i32) -> (i32, i32) {
    %c0_i32 = arith.constant 0 : i32
    %c0_i32_0 = arith.constant 0 : i32
    %c0_i32_1 = arith.constant 0 : i32
    return %c0_i32, %c0_i32_0 : i32, i32
  }
  func.func @transform_3(%arg0: i32) -> (i32, i32, i32) {
    %c0_i32 = arith.constant 0 : i32
    %c0_i32_0 = arith.constant 0 : i32
    %c0_i32_1 = arith.constant 0 : i32
    %c0_i32_2 = arith.constant 0 : i32
    return %c0_i32, %c0_i32_0, %c0_i32_1 : i32, i32, i32
  }
  func.func @transform_4(%arg0: i32) -> (i32, i32) {
    %c0_i32 = arith.constant 0 : i32
    %c0_i32_0 = arith.constant 0 : i32
    %c0_i32_1 = arith.constant 0 : i32
    return %c0_i32, %c0_i32_0 : i32, i32
  }
  func.func @transform_5(%arg0: i32) -> (i32, i32) {
    %c0_i32 = arith.constant 0 : i32
    %c0_i32_0 = arith.constant 0 : i32
    %c0_i32_1 = arith.constant 0 : i32
    return %c0_i32, %c0_i32_0 : i32, i32
  }
  func.func @transform_6(%arg0: i32) -> (i32, i32) {
    %c0_i32 = arith.constant 0 : i32
    %c0_i32_0 = arith.constant 0 : i32
    %c0_i32_1 = arith.constant 0 : i32
    return %c0_i32, %c0_i32_0 : i32, i32
  }
  func.func @transform_7(%arg0: i32) -> (i32, i32) {
    %c0_i32 = arith.constant 0 : i32
    %c0_i32_0 = arith.constant 0 : i32
    %c0_i32_1 = arith.constant 0 : i32
    return %c0_i32, %c0_i32_0 : i32, i32
  }
  func.func @transform_8(%arg0: i32) -> (i32, i32) {
    %c0_i32 = arith.constant 0 : i32
    %c0_i32_0 = arith.constant 0 : i32
    %c0_i32_1 = arith.constant 0 : i32
    return %c0_i32, %c0_i32_0 : i32, i32
  }
  func.func @transform_9(%arg0: i32) -> (i32, i32, i32) {
    %c0_i32 = arith.constant 0 : i32
    %c0_i32_0 = arith.constant 0 : i32
    %c0_i32_1 = arith.constant 0 : i32
    return %arg0, %c0_i32, %c0_i32_0 : i32, i32, i32
  }
}

</mosaic_0001>

<llo_original>
// kernel: net_forward.2
$region0: #{net_forward.2}
  #allocation0 [shape = 'u32[]', space=smem, size = 0x4, offset = 0x4, fixed_abs, tag = 'smem constant byte address 0x4 - core index']
  #allocation1 [shape = 'u32[72,128]{1,0:T(1,128)}', space=vmem, size = 0x9000, scoped, tag = 'internal scratch']
  %s0 = inlined_call_operand.vmem [shape: bf16[2,196,128], index: 0, kind: input, shape index: {}]
  %s1 = inlined_call_operand.vmem [shape: bf16[128,512], index: 1, kind: input, shape index: {}]
  %s2 = inlined_call_operand.vmem [shape: f32[1,128], index: 2, kind: input, shape index: {}]
  %s3 = inlined_call_operand.vmem [shape: bf16[2,196,128], index: 3, kind: output, shape index: {}]
  %s4 = sld [smem:[#allocation0]]
  $region45: #{net_forward.2} parent=0
    _
  %s6 = ssub.s32 1, %s4
  %s7 = scalar_select 0, %s6, %s4
  loop: start=0, step=1, limit=4
  $region2: #{net_forward.2} parent=0 // loop_pre_header
    _
  $region3: #{net_forward.2} parent=0 // loop_header
    %s9 = sphi 0, %s13
    %p10 = scmp.ge.s32.totalorder %s9, 4
    %s19 = sphi 0, %s21
    %s22 = sphi 0, %s19
    %s23 = sphi 0, %s22
    %s39 = sphi 0, %s23
    %s43 = sphi 0, %s43
    %s45 = sphi 0, %s43
    %s46 = sphi 0, %s45
    %s60 = sphi 0, %s46
    %s64 = sphi 0, %s64
    %s66 = sphi 0, %s64
    %s67 = sphi 0, %s66
    %s81 = sphi 0, %s67
    %s87 = sphi 0, %s89
    %s90 = sphi 0, %s87
    %s91 = sphi 0, %s90
    %s107 = sphi 0, %s91
  $region4: #{net_forward.2} parent=0 // loop_header_branch
    %12 = sbr.rel (%p10) target = $region8
  $region5: #{net_forward.2} parent=0 // loop_body
    %s14 = ssub.s32 %s9, 1
    %s15 = ssub.s32 %s9, 2
    %s16 = sadd.s32 %s9, 1
    %s17 = ssub.s32 %s9, %s16
    %p18 = scmp.eq.s32.totalorder %s17, 0
    %s20 = sadd.s32 %s19, 1
    %s21 = scalar_select %p18, %s19, %s20
    %p24 = pneg %p18
    %p25 = scmp.eq.s32.totalorder %s9, 1
    %p26 = por %p24, %p25
    %p27 = scmp.ne.s32.totalorder %s19, %s22
    %p28 = scmp.eq.s32.totalorder %s9, 0
    %p29 = por %p27, %p28
    %p30 = scmp.ne.s32.totalorder %s19, %s22
    %p31 = scmp.eq.s32.totalorder %s14, 1
    %p32 = por %p30, %p31
    %p33 = scmp.ne.s32.totalorder %s22, %s23
    %p34 = scmp.eq.s32.totalorder %s14, 0
    %p35 = por %p33, %p34
    %p36 = scmp.ne.s32.totalorder %s22, %s23
    %p37 = scmp.eq.s32.totalorder %s15, 1
    %p38 = por %p36, %p37
    %p40 = scmp.ne.s32.totalorder %s23, %s39
    %p41 = scmp.eq.s32.totalorder %s15, 0
    %p42 = por %p40, %p41
    %s44 = sadd.s32 %s43, 1
    %p47 = scmp.eq.s32.totalorder %s9, 1
    %p48 = scmp.ne.s32.totalorder %s43, %s45
    %p49 = scmp.eq.s32.totalorder %s9, 0
    %p50 = por %p48, %p49
    %p51 = scmp.ne.s32.totalorder %s43, %s45
    %p52 = scmp.eq.s32.totalorder %s14, 1
    %p53 = por %p51, %p52
    %p54 = scmp.ne.s32.totalorder %s45, %s46
    %p55 = scmp.eq.s32.totalorder %s14, 0
    %p56 = por %p54, %p55
    %p57 = scmp.ne.s32.totalorder %s45, %s46
    %p58 = scmp.eq.s32.totalorder %s15, 1
    %p59 = por %p57, %p58
    %p61 = scmp.ne.s32.totalorder %s46, %s60
    %p62 = scmp.eq.s32.totalorder %s15, 0
    %p63 = por %p61, %p62
    %s65 = sadd.s32 %s64, 1
    %p68 = scmp.eq.s32.totalorder %s9, 1
    %p69 = scmp.ne.s32.totalorder %s64, %s66
    %p70 = scmp.eq.s32.totalorder %s9, 0
    %p71 = por %p69, %p70
    %p72 = scmp.ne.s32.totalorder %s64, %s66
    %p73 = scmp.eq.s32.totalorder %s14, 1
    %p74 = por %p72, %p73
    %p75 = scmp.ne.s32.totalorder %s66, %s67
    %p76 = scmp.eq.s32.totalorder %s14, 0
    %p77 = por %p75, %p76
    %p78 = scmp.ne.s32.totalorder %s66, %s67
    %p79 = scmp.eq.s32.totalorder %s15, 1
    %p80 = por %p78, %p79
    %p82 = scmp.ne.s32.totalorder %s67, %s81
    %p83 = scmp.eq.s32.totalorder %s15, 0
    %p84 = por %p82, %p83
    %s85 = ssub.s32 %s9, %s16
    %p86 = scmp.eq.s32.totalorder %s85, 0
    %s88 = sadd.s32 %s87, 1
    %s89 = scalar_select %p86, %s87, %s88
    %p92 = pneg %p86
    %p93 = scmp.eq.s32.totalorder %s9, 1
    %p94 = por %p92, %p93
    %p95 = scmp.ne.s32.totalorder %s87, %s90
    %p96 = scmp.eq.s32.totalorder %s9, 0
    %p97 = por %p95, %p96
    %p98 = scmp.ne.s32.totalorder %s87, %s90
    %p99 = scmp.eq.s32.totalorder %s14, 1
    %p100 = por %p98, %p99
    %p101 = scmp.ne.s32.totalorder %s90, %s91
    %p102 = scmp.eq.s32.totalorder %s14, 0
    %p103 = por %p101, %p102
    %p104 = scmp.ne.s32.totalorder %s90, %s91
    %p105 = scmp.eq.s32.totalorder %s15, 1
    %p106 = por %p104, %p105
    %p108 = scmp.ne.s32.totalorder %s91, %s107
    %p109 = scmp.eq.s32.totalorder %s15, 0
    %p110 = por %p108, %p109
    %p111 = scmp.le.s32.totalorder 1, %s9
    %p112 = scmp.lt.s32.totalorder %s9, 3
    %p113 = pnand %p111, %p112
    %p114 = pneg %p113
    // Predicated region
    $region9: #{net_forward.2} parent=5 // pred_check
      _
    $region10: #{net_forward.2} parent=5 // pred_check_branch
      %116 = sbr.rel (%p113) target = $region12
    $region11: #{net_forward.2} parent=5 // pred_region
      %s117 = ssub.s32 %s9, 1
      // Predicated region
      $region13: #{net_forward.2} parent=11 // pred_check
        %p118 = pneg %p56
      $region14: #{net_forward.2} parent=11 // pred_check_branch
        %120 = sbr.rel (%p118) target = $region16
      $region15: #{net_forward.2} parent=11 // pred_region
        _
      $region16: #{net_forward.2} parent=11 // pred_fallthru
        _
      // Predicated region
      $region17: #{net_forward.2} parent=11 // pred_check
        %p121 = pneg %p77
      $region18: #{net_forward.2} parent=11 // pred_check_branch
        %123 = sbr.rel (%p121) target = $region20
      $region19: #{net_forward.2} parent=11 // pred_region
        _
      $region20: #{net_forward.2} parent=11 // pred_fallthru
        _
    $region12: #{net_forward.2} parent=5 // pred_fallthru
      _
    %p124 = scmp.lt.s32.totalorder %s9, 2
    // Predicated region
    $region21: #{net_forward.2} parent=5 // pred_check
      %p125 = pneg %p124
    $region22: #{net_forward.2} parent=5 // pred_check_branch
      %127 = sbr.rel (%p125) target = $region24
    $region23: #{net_forward.2} parent=5 // pred_region
      // Predicated region
      $region25: #{net_forward.2} parent=23 // pred_check
        %p128 = pneg %p29
      $region26: #{net_forward.2} parent=23 // pred_check_branch
        %130 = sbr.rel (%p128) target = $region28
      $region27: #{net_forward.2} parent=23 // pred_region
        %p131 = scmp.lt.s32.totalorder %s9, 1
        %s132 = scalar_select %p131, %s9, 1
        %s133 = smul.addr %s132, 25
        %s134 = smul.addr %s133, 4
        %s135 = scalar_lea.vmem %s0, %s134
      $region28: #{net_forward.2} parent=23 // pred_fallthru
        _
    $region24: #{net_forward.2} parent=5 // pred_fallthru
      _
    %p136 = scmp.le.s32.totalorder 1, %s9
    %p137 = scmp.lt.s32.totalorder %s9, 3
    %p138 = pnand %p136, %p137
    %p139 = pneg %p138
    // Predicated region
    $region29: #{net_forward.2} parent=5 // pred_check
      _
    $region30: #{net_forward.2} parent=5 // pred_check_branch
      %141 = sbr.rel (%p138) target = $region32
    $region31: #{net_forward.2} parent=5 // pred_region
      %s142 = ssub.s32 %s9, 1
      %p143 = scmp.lt.s32.totalorder %s14, 1
      %s144 = scalar_select %p143, %s14, 1
      %s145 = smul.addr %s144, 25
      %s146 = smul.addr %s145, 4
      %s147 = scalar_lea.vmem %s0, %s146
      %p148 = pneg %p35
      %p149 = pneg %p32
      %p150 = pneg %p56
      %p151 = pneg %p53
      %p152 = pneg %p77
      %p153 = pneg %p74
      %p154 = pneg %p103
      %p155 = pneg %p100
      %p156 = scmp.lt.s32.totalorder %s14, 1
      %s157 = scalar_select %p156, %s14, 1
      %s158 = smul.addr %s157, 25
      %s159 = smul.addr %s158, 4
      %s160 = scalar_lea.vmem %s3, %s159
      %p161 = scmp.lt.s32.totalorder %s14, 1
      %s162 = scalar_select %p161, %s14, 1
      %s163 = smul.addr %s162, 25
      %s164 = smul.addr %s163, 4
      %s165 = scalar_lea.vmem %s0, %s164
      %p166 = scmp.lt.s32.totalorder %s14, 1
      %s167 = scalar_select %p166, %s14, 1
      %s168 = smul.addr %s167, 25
      %s169 = smul.addr %s168, 4
      %s170 = scalar_lea.vmem %s3, %s169
      %v171 = vld [vmem:[%s165] sm:$0xf]
      %v172 = vld [vmem:[%s165 + $0x4] sm:$0xf]
      %v173 = vld [vmem:[%s165 + $0x8] sm:$0xf]
      %v174 = vld [vmem:[%s165 + $0xc] sm:$0xf]
      %v175 = vld [vmem:[%s165 + $0x10] sm:$0xf]
      %v176 = vld [vmem:[%s165 + $0x14] sm:$0xf]
      %v177 = vld [vmem:[%s165 + $0x18] sm:$0xf]
      %v178 = vld [vmem:[%s165 + $0x1c] sm:$0xf]
      %v179 = vld [vmem:[%s165 + $0x20] sm:$0xf]
      %v180 = vld [vmem:[%s165 + $0x24] sm:$0xf]
      %v181 = vld [vmem:[%s165 + $0x28] sm:$0xf]
      %v182 = vld [vmem:[%s165 + $0x2c] sm:$0xf]
      %v183 = vld [vmem:[%s165 + $0x30] sm:$0xf]
      %v184 = vld [vmem:[%s165 + $0x34] sm:$0xf]
      %v185 = vld [vmem:[%s165 + $0x38] sm:$0xf]
      %v186 = vld [vmem:[%s165 + $0x3c] sm:$0xf]
      %v187 = vld [vmem:[%s165 + $0x40] sm:$0xf]
      %v188 = vld [vmem:[%s165 + $0x44] sm:$0xf]
      %v189 = vld [vmem:[%s165 + $0x48] sm:$0xf]
      %v190 = vld [vmem:[%s165 + $0x4c] sm:$0xf]
      %v191 = vld [vmem:[%s165 + $0x50] sm:$0xf]
      %v192 = vld [vmem:[%s165 + $0x54] sm:$0xf]
      %v193 = vld [vmem:[%s165 + $0x58] sm:$0xf]
      %v194 = vld [vmem:[%s165 + $0x5c] sm:$0xf]
      %v195 = vld [vmem:[%s165 + $0x60] sm:$0x3]
      %v196 = vld [vmem:[%s1] sm:$0xff]
      %v197 = vld [vmem:[%s1 + $0x8] sm:$0xff]
      %v198 = vld [vmem:[%s1 + $0x10] sm:$0xff]
      %v199 = vld [vmem:[%s1 + $0x18] sm:$0xff]
      %v200 = vld [vmem:[%s1 + $0x20] sm:$0xff]
      %v201 = vld [vmem:[%s1 + $0x28] sm:$0xff]
      %v202 = vld [vmem:[%s1 + $0x30] sm:$0xff]
      %v203 = vld [vmem:[%s1 + $0x38] sm:$0xff]
      %v204 = vld [vmem:[%s1 + $0x40] sm:$0xff]
      %v205 = vld [vmem:[%s1 + $0x48] sm:$0xff]
      %v206 = vld [vmem:[%s1 + $0x50] sm:$0xff]
      %v207 = vld [vmem:[%s1 + $0x58] sm:$0xff]
      %v208 = vld [vmem:[%s1 + $0x60] sm:$0xff]
      %v209 = vld [vmem:[%s1 + $0x68] sm:$0xff]
      %v210 = vld [vmem:[%s1 + $0x70] sm:$0xff]
      %v211 = vld [vmem:[%s1 + $0x78] sm:$0xff]
      %v212 = vld [vmem:[%s1 + $0x80] sm:$0xff]
      %v213 = vld [vmem:[%s1 + $0x88] sm:$0xff]
      %v214 = vld [vmem:[%s1 + $0x90] sm:$0xff]
      %v215 = vld [vmem:[%s1 + $0x98] sm:$0xff]
      %v216 = vld [vmem:[%s1 + $0xa0] sm:$0xff]
      %v217 = vld [vmem:[%s1 + $0xa8] sm:$0xff]
      %v218 = vld [vmem:[%s1 + $0xb0] sm:$0xff]
      %v219 = vld [vmem:[%s1 + $0xb8] sm:$0xff]
      %v220 = vld [vmem:[%s1 + $0xc0] sm:$0xff]
      %v221 = vld [vmem:[%s1 + $0xc8] sm:$0xff]
      %v222 = vld [vmem:[%s1 + $0xd0] sm:$0xff]
      %v223 = vld [vmem:[%s1 + $0xd8] sm:$0xff]
      %v224 = vld [vmem:[%s1 + $0xe0] sm:$0xff]
      %v225 = vld [vmem:[%s1 + $0xe8] sm:$0xff]
      %v226 = vld [vmem:[%s1 + $0xf0] sm:$0xff]
      %v227 = vld [vmem:[%s1 + $0xf8] sm:$0xff]
      %v253 = vunpack.c.l.b16 %v171
      %v254 = vunpack.c.l.b16 %v172
      %v255 = vunpack.c.l.b16 %v173
      %v256 = vunpack.c.l.b16 %v174
      %v257 = vunpack.c.l.b16 %v175
      %v258 = vunpack.c.l.b16 %v176
      %v259 = vunpack.c.l.b16 %v177
      %v260 = vunpack.c.l.b16 %v178
      %v261 = vunpack.c.l.b16 %v179
      %v262 = vunpack.c.l.b16 %v180
      %v263 = vunpack.c.l.b16 %v181
      %v264 = vunpack.c.l.b16 %v182
      %v265 = vunpack.c.l.b16 %v183
      %v266 = vunpack.c.l.b16 %v184
      %v267 = vunpack.c.l.b16 %v185
      %v268 = vunpack.c.l.b16 %v186
      %v269 = vunpack.c.l.b16 %v187
      %v270 = vunpack.c.l.b16 %v188
      %v271 = vunpack.c.l.b16 %v189
      %v272 = vunpack.c.l.b16 %v190
      %v273 = vunpack.c.l.b16 %v191
      %v274 = vunpack.c.l.b16 %v192
      %v275 = vunpack.c.l.b16 %v193
      %v276 = vunpack.c.l.b16 %v194
      %v277 = vunpack.c.l.b16 %v195
      %v278 = vpack.c.b16 %v254, %v253
      %v279 = vpack.c.b16 %v256, %v255
      %v280 = vpack.c.b16 %v258, %v257
      %v281 = vpack.c.b16 %v260, %v259
      %v282 = vpack.c.b16 %v262, %v261
      %v283 = vpack.c.b16 %v264, %v263
      %v284 = vpack.c.b16 %v266, %v265
      %v285 = vpack.c.b16 %v268, %v267
      %v286 = vpack.c.b16 %v270, %v269
      %v287 = vpack.c.b16 %v272, %v271
      %v288 = vpack.c.b16 %v274, %v273
      %v289 = vpack.c.b16 %v276, %v275
      %v290 = vpack.c.b16 %v277, %v277
      %v336 = vunpack.c.l.b16 %v196
      %v337 = vunpack.c.h.b16 %v196
      %v338 = vunpack.c.l.b16 %v197
      %v339 = vunpack.c.h.b16 %v197
      %v340 = vunpack.c.l.b16 %v198
      %v341 = vunpack.c.h.b16 %v198
      %v342 = vunpack.c.l.b16 %v199
      %v343 = vunpack.c.h.b16 %v199
      %v344 = vunpack.c.l.b16 %v200
      %v345 = vunpack.c.h.b16 %v200
      %v346 = vunpack.c.l.b16 %v201
      %v347 = vunpack.c.h.b16 %v201
      %v348 = vunpack.c.l.b16 %v202
      %v349 = vunpack.c.h.b16 %v202
      %v350 = vunpack.c.l.b16 %v203
      %v351 = vunpack.c.h.b16 %v203
      %v352 = vunpack.c.l.b16 %v204
      %v353 = vunpack.c.h.b16 %v204
      %v354 = vunpack.c.l.b16 %v205
      %v355 = vunpack.c.h.b16 %v205
      %v356 = vunpack.c.l.b16 %v206
      %v357 = vunpack.c.h.b16 %v206
      %v358 = vunpack.c.l.b16 %v207
      %v359 = vunpack.c.h.b16 %v207
      %v360 = vunpack.c.l.b16 %v208
      %v361 = vunpack.c.h.b16 %v208
      %v362 = vunpack.c.l.b16 %v209
      %v363 = vunpack.c.h.b16 %v209
      %v364 = vunpack.c.l.b16 %v210
      %v365 = vunpack.c.h.b16 %v210
      %v366 = vunpack.c.l.b16 %v211
      %v367 = vunpack.c.h.b16 %v211
      %v368 = vunpack.c.l.b16 %v212
      %v369 = vunpack.c.h.b16 %v212
      %v370 = vunpack.c.l.b16 %v213
      %v371 = vunpack.c.h.b16 %v213
      %v372 = vunpack.c.l.b16 %v214
      %v373 = vunpack.c.h.b16 %v214
      %v374 = vunpack.c.l.b16 %v215
      %v375 = vunpack.c.h.b16 %v215
      %v376 = vunpack.c.l.b16 %v216
      %v377 = vunpack.c.h.b16 %v216
      %v378 = vunpack.c.l.b16 %v217
      %v379 = vunpack.c.h.b16 %v217
      %v380 = vunpack.c.l.b16 %v218
      %v381 = vunpack.c.h.b16 %v218
      %v382 = vunpack.c.l.b16 %v219
      %v383 = vunpack.c.h.b16 %v219
      %v384 = vunpack.c.l.b16 %v220
      %v385 = vunpack.c.h.b16 %v220
      %v386 = vunpack.c.l.b16 %v221
      %v387 = vunpack.c.h.b16 %v221
      %v388 = vunpack.c.l.b16 %v222
      %v389 = vunpack.c.h.b16 %v222
      %v390 = vunpack.c.l.b16 %v223
      %v391 = vunpack.c.h.b16 %v223
      %v392 = vunpack.c.l.b16 %v224
      %v393 = vunpack.c.h.b16 %v224
      %v394 = vunpack.c.l.b16 %v225
      %v395 = vunpack.c.h.b16 %v225
      %v396 = vunpack.c.l.b16 %v226
      %v397 = vunpack.c.h.b16 %v226
      %v398 = vunpack.c.l.b16 %v227
      %v399 = vunpack.c.h.b16 %v227
      %v400 = vpack.c.b16 %v340, %v336
      %v401 = vpack.c.b16 %v341, %v337
      %v402 = vpack.c.b16 %v342, %v338
      %v403 = vpack.c.b16 %v343, %v339
      %v404 = vpack.c.b16 %v348, %v344
      %v405 = vpack.c.b16 %v349, %v345
      %v406 = vpack.c.b16 %v350, %v346
      %v407 = vpack.c.b16 %v351, %v347
      %v408 = vpack.c.b16 %v356, %v352
      %v409 = vpack.c.b16 %v357, %v353
      %v410 = vpack.c.b16 %v358, %v354
      %v411 = vpack.c.b16 %v359, %v355
      %v412 = vpack.c.b16 %v364, %v360
      %v413 = vpack.c.b16 %v365, %v361
      %v414 = vpack.c.b16 %v366, %v362
      %v415 = vpack.c.b16 %v367, %v363
      %v416 = vpack.c.b16 %v372, %v368
      %v417 = vpack.c.b16 %v373, %v369
      %v418 = vpack.c.b16 %v374, %v370
      %v419 = vpack.c.b16 %v375, %v371
      %v420 = vpack.c.b16 %v380, %v376
      %v421 = vpack.c.b16 %v381, %v377
      %v422 = vpack.c.b16 %v382, %v378
      %v423 = vpack.c.b16 %v383, %v379
      %v424 = vpack.c.b16 %v388, %v384
      %v425 = vpack.c.b16 %v389, %v385
      %v426 = vpack.c.b16 %v390, %v386
      %v427 = vpack.c.b16 %v391, %v387
      %v428 = vpack.c.b16 %v396, %v392
      %v429 = vpack.c.b16 %v397, %v393
      %v430 = vpack.c.b16 %v398, %v394
      %v431 = vpack.c.b16 %v399, %v395
      %464 = vmatpush.bf16.msra.mxu0 %v428
      %465 = vmatpush.bf16.msra.mxu0 %v424
      %466 = vmatpush.bf16.msra.mxu0 %v420
      %467 = vmatpush.bf16.msra.mxu0 %v416
      %468 = vmatpush.bf16.msra.mxu0 %v412
      %469 = vmatpush.bf16.msra.mxu0 %v408
      %470 = vmatpush.bf16.msra.mxu0 %v404
      %471 = vmatpush.bf16.msra.mxu0 %v400
      %472 = vmatmul.bf16.gmra.mxu0 %v278
      %v473 = vpop.f32.mrf.mxu0
      %v474 = vadd.f32 0.0, %v473
      %v475 = vpop.f32.mrf.mxu0
      %v476 = vadd.f32 0.0, %v475
      %477 = vmatmul.bf16.gmra.mxu0 %v279
      %v478 = vpop.f32.mrf.mxu0
      %v479 = vadd.f32 0.0, %v478
      %v480 = vpop.f32.mrf.mxu0
      %v481 = vadd.f32 0.0, %v480
      %482 = vmatmul.bf16.gmra.mxu0 %v280
      %v483 = vpop.f32.mrf.mxu0
      %v484 = vadd.f32 0.0, %v483
      %v485 = vpop.f32.mrf.mxu0
      %v486 = vadd.f32 0.0, %v485
      %487 = vmatmul.bf16.gmra.mxu0 %v281
      %v488 = vpop.f32.mrf.mxu0
      %v489 = vadd.f32 0.0, %v488
      %v490 = vpop.f32.mrf.mxu0
      %v491 = vadd.f32 0.0, %v490
      %492 = vmatmul.bf16.gmra.mxu0 %v282
      %v493 = vpop.f32.mrf.mxu0
      %v494 = vadd.f32 0.0, %v493
      %v495 = vpop.f32.mrf.mxu0
      %v496 = vadd.f32 0.0, %v495
      %497 = vmatmul.bf16.gmra.mxu0 %v283
      %v498 = vpop.f32.mrf.mxu0
      %v499 = vadd.f32 0.0, %v498
      %v500 = vpop.f32.mrf.mxu0
      %v501 = vadd.f32 0.0, %v500
      %502 = vmatmul.bf16.gmra.mxu0 %v284
      %v503 = vpop.f32.mrf.mxu0
      %v504 = vadd.f32 0.0, %v503
      %v505 = vpop.f32.mrf.mxu0
      %v506 = vadd.f32 0.0, %v505
      %507 = vmatmul.bf16.gmra.mxu0 %v285
      %v508 = vpop.f32.mrf.mxu0
      %v509 = vadd.f32 0.0, %v508
      %v510 = vpop.f32.mrf.mxu0
      %v511 = vadd.f32 0.0, %v510
      %512 = vmatmul.bf16.gmra.mxu0 %v286
      %v513 = vpop.f32.mrf.mxu0
      %v514 = vadd.f32 0.0, %v513
      %v515 = vpop.f32.mrf.mxu0
      %v516 = vadd.f32 0.0, %v515
      %517 = vmatmul.bf16.gmra.mxu0 %v287
      %v518 = vpop.f32.mrf.mxu0
      %v519 = vadd.f32 0.0, %v518
      %v520 = vpop.f32.mrf.mxu0
      %v521 = vadd.f32 0.0, %v520
      %522 = vmatmul.bf16.gmra.mxu0 %v288
      %v523 = vpop.f32.mrf.mxu0
      %v524 = vadd.f32 0.0, %v523
      %v525 = vpop.f32.mrf.mxu0
      %v526 = vadd.f32 0.0, %v525
      %527 = vmatmul.bf16.gmra.mxu0 %v289
      %v528 = vpop.f32.mrf.mxu0
      %v529 = vadd.f32 0.0, %v528
      %v530 = vpop.f32.mrf.mxu0
      %v531 = vadd.f32 0.0, %v530
      %532 = vmatmul.bf16.gmra.mxu0 %v290
      %v533 = vpop.f32.mrf.mxu0
      %v534 = vadd.f32 0.0, %v533
      %v535 = vpop.f32.mrf.mxu0
      %536 = vdwg.mxu0
      %537 = vmatpush.bf16.msra.mxu0 %v429
      %538 = vmatpush.bf16.msra.mxu0 %v425
      %539 = vmatpush.bf16.msra.mxu0 %v421
      %540 = vmatpush.bf16.msra.mxu0 %v417
      %541 = vmatpush.bf16.msra.mxu0 %v413
      %542 = vmatpush.bf16.msra.mxu0 %v409
      %543 = vmatpush.bf16.msra.mxu0 %v405
      %544 = vmatpush.bf16.msra.mxu0 %v401
      %545 = vmatmul.bf16.gmra.mxu0 %v278
      %v546 = vpop.f32.mrf.mxu0
      %v547 = vadd.f32 0.0, %v546
      %v548 = vpop.f32.mrf.mxu0
      %v549 = vadd.f32 0.0, %v548
      %550 = vmatmul.bf16.gmra.mxu0 %v279
      %v551 = vpop.f32.mrf.mxu0
      %v552 = vadd.f32 0.0, %v551
      %v553 = vpop.f32.mrf.mxu0
      %v554 = vadd.f32 0.0, %v553
      %555 = vmatmul.bf16.gmra.mxu0 %v280
      %v556 = vpop.f32.mrf.mxu0
      %v557 = vadd.f32 0.0, %v556
      %v558 = vpop.f32.mrf.mxu0
      %v559 = vadd.f32 0.0, %v558
      %560 = vmatmul.bf16.gmra.mxu0 %v281
      %v561 = vpop.f32.mrf.mxu0
      %v562 = vadd.f32 0.0, %v561
      %v563 = vpop.f32.mrf.mxu0
      %v564 = vadd.f32 0.0, %v563
      %565 = vmatmul.bf16.gmra.mxu0 %v282
      %v566 = vpop.f32.mrf.mxu0
      %v567 = vadd.f32 0.0, %v566
      %v568 = vpop.f32.mrf.mxu0
      %v569 = vadd.f32 0.0, %v568
      %570 = vmatmul.bf16.gmra.mxu0 %v283
      %v571 = vpop.f32.mrf.mxu0
      %v572 = vadd.f32 0.0, %v571
      %v573 = vpop.f32.mrf.mxu0
      %v574 = vadd.f32 0.0, %v573
      %575 = vmatmul.bf16.gmra.mxu0 %v284
      %v576 = vpop.f32.mrf.mxu0
      %v577 = vadd.f32 0.0, %v576
      %v578 = vpop.f32.mrf.mxu0
      %v579 = vadd.f32 0.0, %v578
      %580 = vmatmul.bf16.gmra.mxu0 %v285
      %v581 = vpop.f32.mrf.mxu0
      %v582 = vadd.f32 0.0, %v581
      %v583 = vpop.f32.mrf.mxu0
      %v584 = vadd.f32 0.0, %v583
      %585 = vmatmul.bf16.gmra.mxu0 %v286
      %v586 = vpop.f32.mrf.mxu0
      %v587 = vadd.f32 0.0, %v586
      %v588 = vpop.f32.mrf.mxu0
      %v589 = vadd.f32 0.0, %v588
      %590 = vmatmul.bf16.gmra.mxu0 %v287
      %v591 = vpop.f32.mrf.mxu0
      %v592 = vadd.f32 0.0, %v591
      %v593 = vpop.f32.mrf.mxu0
      %v594 = vadd.f32 0.0, %v593
      %595 = vmatmul.bf16.gmra.mxu0 %v288
      %v596 = vpop.f32.mrf.mxu0
      %v597 = vadd.f32 0.0, %v596
      %v598 = vpop.f32.mrf.mxu0
      %v599 = vadd.f32 0.0, %v598
      %600 = vmatmul.bf16.gmra.mxu0 %v289
      %v601 = vpop.f32.mrf.mxu0
      %v602 = vadd.f32 0.0, %v601
      %v603 = vpop.f32.mrf.mxu0
      %v604 = vadd.f32 0.0, %v603
      %605 = vmatmul.bf16.gmra.mxu0 %v290
      %v606 = vpop.f32.mrf.mxu0
      %v607 = vadd.f32 0.0, %v606
      %v608 = vpop.f32.mrf.mxu0
      %609 = vdwg.mxu0
      %610 = vmatpush.bf16.msra.mxu0 %v430
      %611 = vmatpush.bf16.msra.mxu0 %v426
      %612 = vmatpush.bf16.msra.mxu0 %v422
      %613 = vmatpush.bf16.msra.mxu0 %v418
      %614 = vmatpush.bf16.msra.mxu0 %v414
      %615 = vmatpush.bf16.msra.mxu0 %v410
      %616 = vmatpush.bf16.msra.mxu0 %v406
      %617 = vmatpush.bf16.msra.mxu0 %v402
      %618 = vmatmul.bf16.gmra.mxu0 %v278
      %v619 = vpop.f32.mrf.mxu0
      %v620 = vadd.f32 0.0, %v619
      %v621 = vpop.f32.mrf.mxu0
      %v622 = vadd.f32 0.0, %v621
      %623 = vmatmul.bf16.gmra.mxu0 %v279
      %v624 = vpop.f32.mrf.mxu0
      %v625 = vadd.f32 0.0, %v624
      %v626 = vpop.f32.mrf.mxu0
      %v627 = vadd.f32 0.0, %v626
      %628 = vmatmul.bf16.gmra.mxu0 %v280
      %v629 = vpop.f32.mrf.mxu0
      %v630 = vadd.f32 0.0, %v629
      %v631 = vpop.f32.mrf.mxu0
      %v632 = vadd.f32 0.0, %v631
      %633 = vmatmul.bf16.gmra.mxu0 %v281
      %v634 = vpop.f32.mrf.mxu0
      %v635 = vadd.f32 0.0, %v634
      %v636 = vpop.f32.mrf.mxu0
      %v637 = vadd.f32 0.0, %v636
      %638 = vmatmul.bf16.gmra.mxu0 %v282
      %v639 = vpop.f32.mrf.mxu0
      %v640 = vadd.f32 0.0, %v639
      %v641 = vpop.f32.mrf.mxu0
      %v642 = vadd.f32 0.0, %v641
      %643 = vmatmul.bf16.gmra.mxu0 %v283
      %v644 = vpop.f32.mrf.mxu0
      %v645 = vadd.f32 0.0, %v644
      %v646 = vpop.f32.mrf.mxu0
      %v647 = vadd.f32 0.0, %v646
      %648 = vmatmul.bf16.gmra.mxu0 %v284
      %v649 = vpop.f32.mrf.mxu0
      %v650 = vadd.f32 0.0, %v649
      %v651 = vpop.f32.mrf.mxu0
      %v652 = vadd.f32 0.0, %v651
      %653 = vmatmul.bf16.gmra.mxu0 %v285
      %v654 = vpop.f32.mrf.mxu0
      %v655 = vadd.f32 0.0, %v654
      %v656 = vpop.f32.mrf.mxu0
      %v657 = vadd.f32 0.0, %v656
      %658 = vmatmul.bf16.gmra.mxu0 %v286
      %v659 = vpop.f32.mrf.mxu0
      %v660 = vadd.f32 0.0, %v659
      %v661 = vpop.f32.mrf.mxu0
      %v662 = vadd.f32 0.0, %v661
      %663 = vmatmul.bf16.gmra.mxu0 %v287
      %v664 = vpop.f32.mrf.mxu0
      %v665 = vadd.f32 0.0, %v664
      %v666 = vpop.f32.mrf.mxu0
      %v667 = vadd.f32 0.0, %v666
      %668 = vmatmul.bf16.gmra.mxu0 %v288
      %v669 = vpop.f32.mrf.mxu0
      %v670 = vadd.f32 0.0, %v669
      %v671 = vpop.f32.mrf.mxu0
      %v672 = vadd.f32 0.0, %v671
      %673 = vmatmul.bf16.gmra.mxu0 %v289
      %v674 = vpop.f32.mrf.mxu0
      %v675 = vadd.f32 0.0, %v674
      %v676 = vpop.f32.mrf.mxu0
      %v677 = vadd.f32 0.0, %v676
      %678 = vmatmul.bf16.gmra.mxu0 %v290
      %v679 = vpop.f32.mrf.mxu0
      %v680 = vadd.f32 0.0, %v679
      %v681 = vpop.f32.mrf.mxu0
      %682 = vdwg.mxu0
      %683 = vmatpush.bf16.msra.mxu0 %v431
      %684 = vmatpush.bf16.msra.mxu0 %v427
      %685 = vmatpush.bf16.msra.mxu0 %v423
      %686 = vmatpush.bf16.msra.mxu0 %v419
      %687 = vmatpush.bf16.msra.mxu0 %v415
      %688 = vmatpush.bf16.msra.mxu0 %v411
      %689 = vmatpush.bf16.msra.mxu0 %v407
      %690 = vmatpush.bf16.msra.mxu0 %v403
      %691 = vmatmul.bf16.gmra.mxu0 %v278
      %v692 = vpop.f32.mrf.mxu0
      %v693 = vadd.f32 0.0, %v692
      %v694 = vpop.f32.mrf.mxu0
      %v695 = vadd.f32 0.0, %v694
      %696 = vmatmul.bf16.gmra.mxu0 %v279
      %v697 = vpop.f32.mrf.mxu0
      %v698 = vadd.f32 0.0, %v697
      %v699 = vpop.f32.mrf.mxu0
      %v700 = vadd.f32 0.0, %v699
      %701 = vmatmul.bf16.gmra.mxu0 %v280
      %v702 = vpop.f32.mrf.mxu0
      %v703 = vadd.f32 0.0, %v702
      %v704 = vpop.f32.mrf.mxu0
      %v705 = vadd.f32 0.0, %v704
      %706 = vmatmul.bf16.gmra.mxu0 %v281
      %v707 = vpop.f32.mrf.mxu0
      %v708 = vadd.f32 0.0, %v707
      %v709 = vpop.f32.mrf.mxu0
      %v710 = vadd.f32 0.0, %v709
      %711 = vmatmul.bf16.gmra.mxu0 %v282
      %v712 = vpop.f32.mrf.mxu0
      %v713 = vadd.f32 0.0, %v712
      %v714 = vpop.f32.mrf.mxu0
      %v715 = vadd.f32 0.0, %v714
      %716 = vmatmul.bf16.gmra.mxu0 %v283
      %v717 = vpop.f32.mrf.mxu0
      %v718 = vadd.f32 0.0, %v717
      %v719 = vpop.f32.mrf.mxu0
      %v720 = vadd.f32 0.0, %v719
      %721 = vmatmul.bf16.gmra.mxu0 %v284
      %v722 = vpop.f32.mrf.mxu0
      %v723 = vadd.f32 0.0, %v722
      %v724 = vpop.f32.mrf.mxu0
      %v725 = vadd.f32 0.0, %v724
      %726 = vmatmul.bf16.gmra.mxu0 %v285
      %v727 = vpop.f32.mrf.mxu0
      %v728 = vadd.f32 0.0, %v727
      %v729 = vpop.f32.mrf.mxu0
      %v730 = vadd.f32 0.0, %v729
      %731 = vmatmul.bf16.gmra.mxu0 %v286
      %v732 = vpop.f32.mrf.mxu0
      %v733 = vadd.f32 0.0, %v732
      %v734 = vpop.f32.mrf.mxu0
      %v735 = vadd.f32 0.0, %v734
      %736 = vmatmul.bf16.gmra.mxu0 %v287
      %v737 = vpop.f32.mrf.mxu0
      %v738 = vadd.f32 0.0, %v737
      %v739 = vpop.f32.mrf.mxu0
      %v740 = vadd.f32 0.0, %v739
      %741 = vmatmul.bf16.gmra.mxu0 %v288
      %v742 = vpop.f32.mrf.mxu0
      %v743 = vadd.f32 0.0, %v742
      %v744 = vpop.f32.mrf.mxu0
      %v745 = vadd.f32 0.0, %v744
      %746 = vmatmul.bf16.gmra.mxu0 %v289
      %v747 = vpop.f32.mrf.mxu0
      %v748 = vadd.f32 0.0, %v747
      %v749 = vpop.f32.mrf.mxu0
      %v750 = vadd.f32 0.0, %v749
      %751 = vmatmul.bf16.gmra.mxu0 %v290
      %v752 = vpop.f32.mrf.mxu0
      %v753 = vadd.f32 0.0, %v752
      %v754 = vpop.f32.mrf.mxu0
      %755 = vdwg.mxu0
      %v756 = vmax.f32 %v474, %v547
      %v757 = vmax.f32 %v476, %v549
      %v758 = vmax.f32 %v479, %v552
      %v759 = vmax.f32 %v481, %v554
      %v760 = vmax.f32 %v484, %v557
      %v761 = vmax.f32 %v486, %v559
      %v762 = vmax.f32 %v489, %v562
      %v763 = vmax.f32 %v491, %v564
      %v764 = vmax.f32 %v494, %v567
      %v765 = vmax.f32 %v496, %v569
      %v766 = vmax.f32 %v499, %v572
      %v767 = vmax.f32 %v501, %v574
      %v768 = vmax.f32 %v504, %v577
      %v769 = vmax.f32 %v506, %v579
      %v770 = vmax.f32 %v509, %v582
      %v771 = vmax.f32 %v511, %v584
      %v772 = vmax.f32 %v514, %v587
      %v773 = vmax.f32 %v516, %v589
      %v774 = vmax.f32 %v519, %v592
      %v775 = vmax.f32 %v521, %v594
      %v776 = vmax.f32 %v524, %v597
      %v777 = vmax.f32 %v526, %v599
      %v778 = vmax.f32 %v529, %v602
      %v779 = vmax.f32 %v531, %v604
      %v780 = vmax.f32 %v534, %v607
      %v781 = vmax.f32 %v620, %v693
      %v782 = vmax.f32 %v622, %v695
      %v783 = vmax.f32 %v625, %v698
      %v784 = vmax.f32 %v627, %v700
      %v785 = vmax.f32 %v630, %v703
      %v786 = vmax.f32 %v632, %v705
      %v787 = vmax.f32 %v635, %v708
      %v788 = vmax.f32 %v637, %v710
      %v789 = vmax.f32 %v640, %v713
      %v790 = vmax.f32 %v642, %v715
      %v791 = vmax.f32 %v645, %v718
      %v792 = vmax.f32 %v647, %v720
      %v793 = vmax.f32 %v650, %v723
      %v794 = vmax.f32 %v652, %v725
      %v795 = vmax.f32 %v655, %v728
      %v796 = vmax.f32 %v657, %v730
      %v797 = vmax.f32 %v660, %v733
      %v798 = vmax.f32 %v662, %v735
      %v799 = vmax.f32 %v665, %v738
      %v800 = vmax.f32 %v667, %v740
      %v801 = vmax.f32 %v670, %v743
      %v802 = vmax.f32 %v672, %v745
      %v803 = vmax.f32 %v675, %v748
      %v804 = vmax.f32 %v677, %v750
      %v805 = vmax.f32 %v680, %v753
      %v806 = vmax.f32 %v756, %v781
      %v807 = vmax.f32 %v757, %v782
      %v808 = vmax.f32 %v758, %v783
      %v809 = vmax.f32 %v759, %v784
      %v810 = vmax.f32 %v760, %v785
      %v811 = vmax.f32 %v761, %v786
      %v812 = vmax.f32 %v762, %v787
      %v813 = vmax.f32 %v763, %v788
      %v814 = vmax.f32 %v764, %v789
      %v815 = vmax.f32 %v765, %v790
      %v816 = vmax.f32 %v766, %v791
      %v817 = vmax.f32 %v767, %v792
      %v818 = vmax.f32 %v768, %v793
      %v819 = vmax.f32 %v769, %v794
      %v820 = vmax.f32 %v770, %v795
      %v821 = vmax.f32 %v771, %v796
      %v822 = vmax.f32 %v772, %v797
      %v823 = vmax.f32 %v773, %v798
      %v824 = vmax.f32 %v774, %v799
      %v825 = vmax.f32 %v775, %v800
      %v826 = vmax.f32 %v776, %v801
      %v827 = vmax.f32 %v777, %v802
      %v828 = vmax.f32 %v778, %v803
      %v829 = vmax.f32 %v779, %v804
      %v830 = vmax.f32 %v780, %v805
      %v831 = vld [vmem:[%s2] sm:$0x1]
      %v833 = vperm.slane %v831, 0
      %v835 = vadd.f32 %v806, %v833
      %v836 = vadd.f32 %v807, %v833
      %v837 = vadd.f32 %v808, %v833
      %v838 = vadd.f32 %v809, %v833
      %v839 = vadd.f32 %v810, %v833
      %v840 = vadd.f32 %v811, %v833
      %v841 = vadd.f32 %v812, %v833
      %v842 = vadd.f32 %v813, %v833
      %v843 = vadd.f32 %v814, %v833
      %v844 = vadd.f32 %v815, %v833
      %v845 = vadd.f32 %v816, %v833
      %v846 = vadd.f32 %v817, %v833
      %v847 = vadd.f32 %v818, %v833
      %v848 = vadd.f32 %v819, %v833
      %v849 = vadd.f32 %v820, %v833
      %v850 = vadd.f32 %v821, %v833
      %v851 = vadd.f32 %v822, %v833
      %v852 = vadd.f32 %v823, %v833
      %v853 = vadd.f32 %v824, %v833
      %v854 = vadd.f32 %v825, %v833
      %v855 = vadd.f32 %v826, %v833
      %v856 = vadd.f32 %v827, %v833
      %v857 = vadd.f32 %v828, %v833
      %v858 = vadd.f32 %v829, %v833
      %v859 = vadd.f32 %v830, %v833
      %v860 = vmax.f32 %v835, 0.0
      %v861 = vmax.f32 %v836, 0.0
      %v862 = vmax.f32 %v837, 0.0
      %v863 = vmax.f32 %v838, 0.0
      %v864 = vmax.f32 %v839, 0.0
      %v865 = vmax.f32 %v840, 0.0
      %v866 = vmax.f32 %v841, 0.0
      %v867 = vmax.f32 %v842, 0.0
      %v868 = vmax.f32 %v843, 0.0
      %v869 = vmax.f32 %v844, 0.0
      %v870 = vmax.f32 %v845, 0.0
      %v871 = vmax.f32 %v846, 0.0
      %v872 = vmax.f32 %v847, 0.0
      %v873 = vmax.f32 %v848, 0.0
      %v874 = vmax.f32 %v849, 0.0
      %v875 = vmax.f32 %v850, 0.0
      %v876 = vmax.f32 %v851, 0.0
      %v877 = vmax.f32 %v852, 0.0
      %v878 = vmax.f32 %v853, 0.0
      %v879 = vmax.f32 %v854, 0.0
      %v880 = vmax.f32 %v855, 0.0
      %v881 = vmax.f32 %v856, 0.0
      %v882 = vmax.f32 %v857, 0.0
      %v883 = vmax.f32 %v858, 0.0
      %v884 = vmax.f32 %v859, 0.0
      %v885 = vpack.c.bf16 %v860, %v860
      %v886 = vpack.c.bf16 %v861, %v861
      %v887 = vpack.c.bf16 %v862, %v862
      %v888 = vpack.c.bf16 %v863, %v863
      %v889 = vpack.c.bf16 %v864, %v864
      %v890 = vpack.c.bf16 %v865, %v865
      %v891 = vpack.c.bf16 %v866, %v866
      %v892 = vpack.c.bf16 %v867, %v867
      %v893 = vpack.c.bf16 %v868, %v868
      %v894 = vpack.c.bf16 %v869, %v869
      %v895 = vpack.c.bf16 %v870, %v870
      %v896 = vpack.c.bf16 %v871, %v871
      %v897 = vpack.c.bf16 %v872, %v872
      %v898 = vpack.c.bf16 %v873, %v873
      %v899 = vpack.c.bf16 %v874, %v874
      %v900 = vpack.c.bf16 %v875, %v875
      %v901 = vpack.c.bf16 %v876, %v876
      %v902 = vpack.c.bf16 %v877, %v877
      %v903 = vpack.c.bf16 %v878, %v878
      %v904 = vpack.c.bf16 %v879, %v879
      %v905 = vpack.c.bf16 %v880, %v880
      %v906 = vpack.c.bf16 %v881, %v881
      %v907 = vpack.c.bf16 %v882, %v882
      %v908 = vpack.c.bf16 %v883, %v883
      %v909 = vpack.c.bf16 %v884, %v884
      %910 = vst [vmem:[%s170] sm:$0xf] %v885
      %911 = vst [vmem:[%s170 + $0x4] sm:$0xf] %v886
      %912 = vst [vmem:[%s170 + $0x8] sm:$0xf] %v887
      %913 = vst [vmem:[%s170 + $0xc] sm:$0xf] %v888
      %914 = vst [vmem:[%s170 + $0x10] sm:$0xf] %v889
      %915 = vst [vmem:[%s170 + $0x14] sm:$0xf] %v890
      %916 = vst [vmem:[%s170 + $0x18] sm:$0xf] %v891
      %917 = vst [vmem:[%s170 + $0x1c] sm:$0xf] %v892
      %918 = vst [vmem:[%s170 + $0x20] sm:$0xf] %v893
      %919 = vst [vmem:[%s170 + $0x24] sm:$0xf] %v894
      %920 = vst [vmem:[%s170 + $0x28] sm:$0xf] %v895
      %921 = vst [vmem:[%s170 + $0x2c] sm:$0xf] %v896
      %922 = vst [vmem:[%s170 + $0x30] sm:$0xf] %v897
      %923 = vst [vmem:[%s170 + $0x34] sm:$0xf] %v898
      %924 = vst [vmem:[%s170 + $0x38] sm:$0xf] %v899
      %925 = vst [vmem:[%s170 + $0x3c] sm:$0xf] %v900
      %926 = vst [vmem:[%s170 + $0x40] sm:$0xf] %v901
      %927 = vst [vmem:[%s170 + $0x44] sm:$0xf] %v902
      %928 = vst [vmem:[%s170 + $0x48] sm:$0xf] %v903
      %929 = vst [vmem:[%s170 + $0x4c] sm:$0xf] %v904
      %930 = vst [vmem:[%s170 + $0x50] sm:$0xf] %v905
      %931 = vst [vmem:[%s170 + $0x54] sm:$0xf] %v906
      %932 = vst [vmem:[%s170 + $0x58] sm:$0xf] %v907
      %933 = vst [vmem:[%s170 + $0x5c] sm:$0xf] %v908
      %934 = vst [vmem:[%s170 + $0x60] sm:$0x3] %v909
      %p935 = scmp.lt.s32.totalorder %s14, 1
      %s936 = scalar_select %p935, %s14, 1
      %s937 = smul.addr %s936, 25
      %s938 = smul.addr %s937, 4
      %s939 = scalar_lea.vmem %s3, %s938
      // Predicated region
      $region33: #{net_forward.2} parent=31 // pred_check
        %p940 = pneg %p100
      $region34: #{net_forward.2} parent=31 // pred_check_branch
        %942 = sbr.rel (%p940) target = $region36
      $region35: #{net_forward.2} parent=31 // pred_region
        _
      $region36: #{net_forward.2} parent=31 // pred_fallthru
        _
    $region32: #{net_forward.2} parent=5 // pred_fallthru
      _
    %p943 = scmp.le.s32.totalorder 2, %s9
    // Predicated region
    $region37: #{net_forward.2} parent=5 // pred_check
      %p944 = pneg %p943
    $region38: #{net_forward.2} parent=5 // pred_check_branch
      %946 = sbr.rel (%p944) target = $region40
    $region39: #{net_forward.2} parent=5 // pred_region
      %s947 = ssub.s32 %s9, 2
      // Predicated region
      $region41: #{net_forward.2} parent=39 // pred_check
        %p948 = pneg %p106
      $region42: #{net_forward.2} parent=39 // pred_check_branch
        %950 = sbr.rel (%p948) target = $region44
      $region43: #{net_forward.2} parent=39 // pred_region
        %p951 = scmp.lt.s32.totalorder %s15, 1
        %s952 = scalar_select %p951, %s15, 1
        %s953 = smul.addr %s952, 25
        %s954 = smul.addr %s953, 4
        %s955 = scalar_lea.vmem %s3, %s954
      $region44: #{net_forward.2} parent=39 // pred_fallthru
        _
    $region40: #{net_forward.2} parent=5 // pred_fallthru
      _
  $region6: #{net_forward.2} parent=0 // loop_footer
    %s13 = sadd.s32 1, %s9
  $region7: #{net_forward.2} parent=0 // loop_footer_branch
    %8 = sbr.rel target = $region3
  $region8: #{net_forward.2} parent=0 // loop_exit
    _

// kernel: net_forward.3
$region0: #{net_forward.3}
  #allocation0 [shape = 'u32[]', space=smem, size = 0x4, offset = 0x4, fixed_abs, tag = 'smem constant byte address 0x4 - core index']
  #allocation1 [shape = 'u32[72,128]{1,0:T(1,128)}', space=vmem, size = 0x9000, scoped, tag = 'internal scratch']
  %s0 = inlined_call_operand.vmem [shape: bf16[2,25,256], index: 0, kind: input, shape index: {}]
  %s1 = inlined_call_operand.vmem [shape: bf16[256,512], index: 1, kind: input, shape index: {}]
  %s2 = inlined_call_operand.vmem [shape: f32[1,128], index: 2, kind: input, shape index: {}]
  %s3 = inlined_call_operand.vmem [shape: bf16[25,128,128], index: 3, kind: input, shape index: {}]
  %s4 = inlined_call_operand.vmem [shape: f32[1,128], index: 4, kind: input, shape index: {}]
  %s5 = inlined_call_operand.vmem [shape: bf16[128,128], index: 5, kind: input, shape index: {}]
  %s6 = inlined_call_operand.vmem [shape: f32[1,128], index: 6, kind: input, shape index: {}]
  %s7 = inlined_call_operand.vmem [shape: bf16[128,128], index: 7, kind: input, shape index: {}]
  %s8 = inlined_call_operand.vmem [shape: f32[1,128], index: 8, kind: input, shape index: {}]
  %s9 = inlined_call_operand.hbm [shape: f32[2,1,128], index: 9, kind: output, shape index: {}]
  %s10 = sld [smem:[#allocation0]]
  $region69: #{net_forward.3} parent=0
    _
  %s12 = ssub.s32 1, %s10
  %s13 = scalar_select 0, %s12, %s10
  $region1: #{net_forward.3} parent=0
    #allocation2 [shape = 'u8[1024]{0}', space=vmem, size = 0x400, scoped, tag = 'output window, operand 0']
    #allocation3 [shape = 's32[2]{0}', space=sflag, size = 0x8, scoped, tag = 'scoped memory for net_forward.3']
    %14 = vsyncpa [#allocation3], 0
    %s15 = scalar_lea.sflag [#allocation3], 1
    %16 = vsyncpa %s15, 0
    loop: start=0, step=1, limit=4
    $region2: #{net_forward.3} parent=1 // loop_pre_header
      _
    $region3: #{net_forward.3} parent=1 // loop_header
      %s18 = sphi 0, %s22
      %p19 = scmp.ge.s32.totalorder %s18, 4
      %s28 = sphi 0, %s30
      %s31 = sphi 0, %s28
      %s32 = sphi 0, %s31
      %s48 = sphi 0, %s32
      %s52 = sphi 0, %s52
      %s54 = sphi 0, %s52
      %s55 = sphi 0, %s54
      %s69 = sphi 0, %s55
      %s73 = sphi 0, %s73
      %s75 = sphi 0, %s73
      %s76 = sphi 0, %s75
      %s90 = sphi 0, %s76
      %s94 = sphi 0, %s94
      %s96 = sphi 0, %s94
      %s97 = sphi 0, %s96
      %s111 = sphi 0, %s97
      %s115 = sphi 0, %s115
      %s117 = sphi 0, %s115
      %s118 = sphi 0, %s117
      %s132 = sphi 0, %s118
      %s136 = sphi 0, %s136
      %s138 = sphi 0, %s136
      %s139 = sphi 0, %s138
      %s153 = sphi 0, %s139
      %s157 = sphi 0, %s157
      %s159 = sphi 0, %s157
      %s160 = sphi 0, %s159
      %s174 = sphi 0, %s160
      %s178 = sphi 0, %s178
      %s180 = sphi 0, %s178
      %s181 = sphi 0, %s180
      %s195 = sphi 0, %s181
      %s199 = sphi 0, %s199
      %s201 = sphi 0, %s199
      %s202 = sphi 0, %s201
      %s216 = sphi 0, %s202
      %s222 = sphi 0, %s224
      %s225 = sphi 0, %s222
      %s226 = sphi 0, %s225
      %s242 = sphi 0, %s226
    $region4: #{net_forward.3} parent=1 // loop_header_branch
      %21 = sbr.rel (%p19) target = $region8
    $region5: #{net_forward.3} parent=1 // loop_body
      %s23 = ssub.s32 %s18, 1
      %s24 = ssub.s32 %s18, 2
      %s25 = sadd.s32 %s18, 1
      %s26 = ssub.s32 %s18, %s25
      %p27 = scmp.eq.s32.totalorder %s26, 0
      %s29 = sadd.s32 %s28, 1
      %s30 = scalar_select %p27, %s28, %s29
      %p33 = pneg %p27
      %p34 = scmp.eq.s32.totalorder %s18, 1
      %p35 = por %p33, %p34
      %p36 = scmp.ne.s32.totalorder %s28, %s31
      %p37 = scmp.eq.s32.totalorder %s18, 0
      %p38 = por %p36, %p37
      %p39 = scmp.ne.s32.totalorder %s28, %s31
      %p40 = scmp.eq.s32.totalorder %s23, 1
      %p41 = por %p39, %p40
      %p42 = scmp.ne.s32.totalorder %s31, %s32
      %p43 = scmp.eq.s32.totalorder %s23, 0
      %p44 = por %p42, %p43
      %p45 = scmp.ne.s32.totalorder %s31, %s32
      %p46 = scmp.eq.s32.totalorder %s24, 1
      %p47 = por %p45, %p46
      %p49 = scmp.ne.s32.totalorder %s32, %s48
      %p50 = scmp.eq.s32.totalorder %s24, 0
      %p51 = por %p49, %p50
      %s53 = sadd.s32 %s52, 1
      %p56 = scmp.eq.s32.totalorder %s18, 1
      %p57 = scmp.ne.s32.totalorder %s52, %s54
      %p58 = scmp.eq.s32.totalorder %s18, 0
      %p59 = por %p57, %p58
      %p60 = scmp.ne.s32.totalorder %s52, %s54
      %p61 = scmp.eq.s32.totalorder %s23, 1
      %p62 = por %p60, %p61
      %p63 = scmp.ne.s32.totalorder %s54, %s55
      %p64 = scmp.eq.s32.totalorder %s23, 0
      %p65 = por %p63, %p64
      %p66 = scmp.ne.s32.totalorder %s54, %s55
      %p67 = scmp.eq.s32.totalorder %s24, 1
      %p68 = por %p66, %p67
      %p70 = scmp.ne.s32.totalorder %s55, %s69
      %p71 = scmp.eq.s32.totalorder %s24, 0
      %p72 = por %p70, %p71
      %s74 = sadd.s32 %s73, 1
      %p77 = scmp.eq.s32.totalorder %s18, 1
      %p78 = scmp.ne.s32.totalorder %s73, %s75
      %p79 = scmp.eq.s32.totalorder %s18, 0
      %p80 = por %p78, %p79
      %p81 = scmp.ne.s32.totalorder %s73, %s75
      %p82 = scmp.eq.s32.totalorder %s23, 1
      %p83 = por %p81, %p82
      %p84 = scmp.ne.s32.totalorder %s75, %s76
      %p85 = scmp.eq.s32.totalorder %s23, 0
      %p86 = por %p84, %p85
      %p87 = scmp.ne.s32.totalorder %s75, %s76
      %p88 = scmp.eq.s32.totalorder %s24, 1
      %p89 = por %p87, %p88
      %p91 = scmp.ne.s32.totalorder %s76, %s90
      %p92 = scmp.eq.s32.totalorder %s24, 0
      %p93 = por %p91, %p92
      %s95 = sadd.s32 %s94, 1
      %p98 = scmp.eq.s32.totalorder %s18, 1
      %p99 = scmp.ne.s32.totalorder %s94, %s96
      %p100 = scmp.eq.s32.totalorder %s18, 0
      %p101 = por %p99, %p100
      %p102 = scmp.ne.s32.totalorder %s94, %s96
      %p103 = scmp.eq.s32.totalorder %s23, 1
      %p104 = por %p102, %p103
      %p105 = scmp.ne.s32.totalorder %s96, %s97
      %p106 = scmp.eq.s32.totalorder %s23, 0
      %p107 = por %p105, %p106
      %p108 = scmp.ne.s32.totalorder %s96, %s97
      %p109 = scmp.eq.s32.totalorder %s24, 1
      %p110 = por %p108, %p109
      %p112 = scmp.ne.s32.totalorder %s97, %s111
      %p113 = scmp.eq.s32.totalorder %s24, 0
      %p114 = por %p112, %p113
      %s116 = sadd.s32 %s115, 1
      %p119 = scmp.eq.s32.totalorder %s18, 1
      %p120 = scmp.ne.s32.totalorder %s115, %s117
      %p121 = scmp.eq.s32.totalorder %s18, 0
      %p122 = por %p120, %p121
      %p123 = scmp.ne.s32.totalorder %s115, %s117
      %p124 = scmp.eq.s32.totalorder %s23, 1
      %p125 = por %p123, %p124
      %p126 = scmp.ne.s32.totalorder %s117, %s118
      %p127 = scmp.eq.s32.totalorder %s23, 0
      %p128 = por %p126, %p127
      %p129 = scmp.ne.s32.totalorder %s117, %s118
      %p130 = scmp.eq.s32.totalorder %s24, 1
      %p131 = por %p129, %p130
      %p133 = scmp.ne.s32.totalorder %s118, %s132
      %p134 = scmp.eq.s32.totalorder %s24, 0
      %p135 = por %p133, %p134
      %s137 = sadd.s32 %s136, 1
      %p140 = scmp.eq.s32.totalorder %s18, 1
      %p141 = scmp.ne.s32.totalorder %s136, %s138
      %p142 = scmp.eq.s32.totalorder %s18, 0
      %p143 = por %p141, %p142
      %p144 = scmp.ne.s32.totalorder %s136, %s138
      %p145 = scmp.eq.s32.totalorder %s23, 1
      %p146 = por %p144, %p145
      %p147 = scmp.ne.s32.totalorder %s138, %s139
      %p148 = scmp.eq.s32.totalorder %s23, 0
      %p149 = por %p147, %p148
      %p150 = scmp.ne.s32.totalorder %s138, %s139
      %p151 = scmp.eq.s32.totalorder %s24, 1
      %p152 = por %p150, %p151
      %p154 = scmp.ne.s32.totalorder %s139, %s153
      %p155 = scmp.eq.s32.totalorder %s24, 0
      %p156 = por %p154, %p155
      %s158 = sadd.s32 %s157, 1
      %p161 = scmp.eq.s32.totalorder %s18, 1
      %p162 = scmp.ne.s32.totalorder %s157, %s159
      %p163 = scmp.eq.s32.totalorder %s18, 0
      %p164 = por %p162, %p163
      %p165 = scmp.ne.s32.totalorder %s157, %s159
      %p166 = scmp.eq.s32.totalorder %s23, 1
      %p167 = por %p165, %p166
      %p168 = scmp.ne.s32.totalorder %s159, %s160
      %p169 = scmp.eq.s32.totalorder %s23, 0
      %p170 = por %p168, %p169
      %p171 = scmp.ne.s32.totalorder %s159, %s160
      %p172 = scmp.eq.s32.totalorder %s24, 1
      %p173 = por %p171, %p172
      %p175 = scmp.ne.s32.totalorder %s160, %s174
      %p176 = scmp.eq.s32.totalorder %s24, 0
      %p177 = por %p175, %p176
      %s179 = sadd.s32 %s178, 1
      %p182 = scmp.eq.s32.totalorder %s18, 1
      %p183 = scmp.ne.s32.totalorder %s178, %s180
      %p184 = scmp.eq.s32.totalorder %s18, 0
      %p185 = por %p183, %p184
      %p186 = scmp.ne.s32.totalorder %s178, %s180
      %p187 = scmp.eq.s32.totalorder %s23, 1
      %p188 = por %p186, %p187
      %p189 = scmp.ne.s32.totalorder %s180, %s181
      %p190 = scmp.eq.s32.totalorder %s23, 0
      %p191 = por %p189, %p190
      %p192 = scmp.ne.s32.totalorder %s180, %s181
      %p193 = scmp.eq.s32.totalorder %s24, 1
      %p194 = por %p192, %p193
      %p196 = scmp.ne.s32.totalorder %s181, %s195
      %p197 = scmp.eq.s32.totalorder %s24, 0
      %p198 = por %p196, %p197
      %s200 = sadd.s32 %s199, 1
      %p203 = scmp.eq.s32.totalorder %s18, 1
      %p204 = scmp.ne.s32.totalorder %s199, %s201
      %p205 = scmp.eq.s32.totalorder %s18, 0
      %p206 = por %p204, %p205
      %p207 = scmp.ne.s32.totalorder %s199, %s201
      %p208 = scmp.eq.s32.totalorder %s23, 1
      %p209 = por %p207, %p208
      %p210 = scmp.ne.s32.totalorder %s201, %s202
      %p211 = scmp.eq.s32.totalorder %s23, 0
      %p212 = por %p210, %p211
      %p213 = scmp.ne.s32.totalorder %s201, %s202
      %p214 = scmp.eq.s32.totalorder %s24, 1
      %p215 = por %p213, %p214
      %p217 = scmp.ne.s32.totalorder %s202, %s216
      %p218 = scmp.eq.s32.totalorder %s24, 0
      %p219 = por %p217, %p218
      %s220 = ssub.s32 %s18, %s25
      %p221 = scmp.eq.s32.totalorder %s220, 0
      %s223 = sadd.s32 %s222, 1
      %s224 = scalar_select %p221, %s222, %s223
      %p227 = pneg %p221
      %p228 = scmp.eq.s32.totalorder %s18, 1
      %p229 = por %p227, %p228
      %p230 = scmp.ne.s32.totalorder %s222, %s225
      %p231 = scmp.eq.s32.totalorder %s18, 0
      %p232 = por %p230, %p231
      %p233 = scmp.ne.s32.totalorder %s222, %s225
      %p234 = scmp.eq.s32.totalorder %s23, 1
      %p235 = por %p233, %p234
      %p236 = scmp.ne.s32.totalorder %s225, %s226
      %p237 = scmp.eq.s32.totalorder %s23, 0
      %p238 = por %p236, %p237
      %p239 = scmp.ne.s32.totalorder %s225, %s226
      %p240 = scmp.eq.s32.totalorder %s24, 1
      %p241 = por %p239, %p240
      %p243 = scmp.ne.s32.totalorder %s226, %s242
      %p244 = scmp.eq.s32.totalorder %s24, 0
      %p245 = por %p243, %p244
      %p246 = scmp.le.s32.totalorder 1, %s18
      %p247 = scmp.lt.s32.totalorder %s18, 3
      %p248 = pnand %p246, %p247
      %p249 = pneg %p248
      // Predicated region
      $region9: #{net_forward.3} parent=5 // pred_check
        _
      $region10: #{net_forward.3} parent=5 // pred_check_branch
        %251 = sbr.rel (%p248) target = $region12
      $region11: #{net_forward.3} parent=5 // pred_region
        %s252 = ssub.s32 %s18, 1
        // Predicated region
        $region13: #{net_forward.3} parent=11 // pred_check
          %p253 = pneg %p65
        $region14: #{net_forward.3} parent=11 // pred_check_branch
          %255 = sbr.rel (%p253) target = $region16
        $region15: #{net_forward.3} parent=11 // pred_region
          _
        $region16: #{net_forward.3} parent=11 // pred_fallthru
          _
        // Predicated region
        $region17: #{net_forward.3} parent=11 // pred_check
          %p256 = pneg %p86
        $region18: #{net_forward.3} parent=11 // pred_check_branch
          %258 = sbr.rel (%p256) target = $region20
        $region19: #{net_forward.3} parent=11 // pred_region
          _
        $region20: #{net_forward.3} parent=11 // pred_fallthru
          _
        // Predicated region
        $region21: #{net_forward.3} parent=11 // pred_check
          %p259 = pneg %p107
        $region22: #{net_forward.3} parent=11 // pred_check_branch
          %261 = sbr.rel (%p259) target = $region24
        $region23: #{net_forward.3} parent=11 // pred_region
          _
        $region24: #{net_forward.3} parent=11 // pred_fallthru
          _
        // Predicated region
        $region25: #{net_forward.3} parent=11 // pred_check
          %p262 = pneg %p128
        $region26: #{net_forward.3} parent=11 // pred_check_branch
          %264 = sbr.rel (%p262) target = $region28
        $region27: #{net_forward.3} parent=11 // pred_region
          _
        $region28: #{net_forward.3} parent=11 // pred_fallthru
          _
        // Predicated region
        $region29: #{net_forward.3} parent=11 // pred_check
          %p265 = pneg %p149
        $region30: #{net_forward.3} parent=11 // pred_check_branch
          %267 = sbr.rel (%p265) target = $region32
        $region31: #{net_forward.3} parent=11 // pred_region
          _
        $region32: #{net_forward.3} parent=11 // pred_fallthru
          _
        // Predicated region
        $region33: #{net_forward.3} parent=11 // pred_check
          %p268 = pneg %p170
        $region34: #{net_forward.3} parent=11 // pred_check_branch
          %270 = sbr.rel (%p268) target = $region36
        $region35: #{net_forward.3} parent=11 // pred_region
          _
        $region36: #{net_forward.3} parent=11 // pred_fallthru
          _
        // Predicated region
        $region37: #{net_forward.3} parent=11 // pred_check
          %p271 = pneg %p191
        $region38: #{net_forward.3} parent=11 // pred_check_branch
          %273 = sbr.rel (%p271) target = $region40
        $region39: #{net_forward.3} parent=11 // pred_region
          _
        $region40: #{net_forward.3} parent=11 // pred_fallthru
          _
        // Predicated region
        $region41: #{net_forward.3} parent=11 // pred_check
          %p274 = pneg %p212
        $region42: #{net_forward.3} parent=11 // pred_check_branch
          %276 = sbr.rel (%p274) target = $region44
        $region43: #{net_forward.3} parent=11 // pred_region
          _
        $region44: #{net_forward.3} parent=11 // pred_fallthru
          _
      $region12: #{net_forward.3} parent=5 // pred_fallthru
        _
      %p277 = scmp.lt.s32.totalorder %s18, 2
      // Predicated region
      $region45: #{net_forward.3} parent=5 // pred_check
        %p278 = pneg %p277
      $region46: #{net_forward.3} parent=5 // pred_check_branch
        %280 = sbr.rel (%p278) target = $region48
      $region47: #{net_forward.3} parent=5 // pred_region
        // Predicated region
        $region49: #{net_forward.3} parent=47 // pred_check
          %p281 = pneg %p38
        $region50: #{net_forward.3} parent=47 // pred_check_branch
          %283 = sbr.rel (%p281) target = $region52
        $region51: #{net_forward.3} parent=47 // pred_region
          %p284 = scmp.lt.s32.totalorder %s18, 1
          %s285 = scalar_select %p284, %s18, 1
          %s286 = smul.addr %s285, 8
          %s287 = smul.addr %s286, 4
          %s288 = scalar_lea.vmem %s0, %s287
        $region52: #{net_forward.3} parent=47 // pred_fallthru
          _
      $region48: #{net_forward.3} parent=5 // pred_fallthru
        _
      %p289 = scmp.le.s32.totalorder 1, %s18
      %p290 = scmp.lt.s32.totalorder %s18, 3
      %p291 = pnand %p289, %p290
      %p292 = pneg %p291
      // Predicated region
      $region53: #{net_forward.3} parent=5 // pred_check
        _
      $region54: #{net_forward.3} parent=5 // pred_check_branch
        %294 = sbr.rel (%p291) target = $region56
      $region55: #{net_forward.3} parent=5 // pred_region
        %s295 = ssub.s32 %s18, 1
        %p296 = scmp.lt.s32.totalorder %s23, 1
        %s297 = scalar_select %p296, %s23, 1
        %s298 = smul.addr %s297, 8
        %s299 = smul.addr %s298, 4
        %s300 = scalar_lea.vmem %s0, %s299
        %p301 = pneg %p44
        %p302 = pneg %p41
        %p303 = pneg %p65
        %p304 = pneg %p62
        %p305 = pneg %p86
        %p306 = pneg %p83
        %p307 = pneg %p107
        %p308 = pneg %p104
        %p309 = pneg %p128
        %p310 = pneg %p125
        %p311 = pneg %p149
        %p312 = pneg %p146
        %p313 = pneg %p170
        %p314 = pneg %p167
        %p315 = pneg %p191
        %p316 = pneg %p188
        %p317 = pneg %p212
        %p318 = pneg %p209
        %p319 = pneg %p238
        %p320 = pneg %p235
        %s321 = sand.u32 %s225, 1
        %s322 = scalar_lea.sflag [#allocation3], %s321
        %s323 = sand.u32 %s225, 1
        %s324 = scalar_lea.vmem [#allocation2], %s323
        %p325 = scmp.lt.s32.totalorder %s23, 1
        %s326 = scalar_select %p325, %s23, 1
        %s327 = smul.addr %s326, 8
        %s328 = smul.addr %s327, 4
        %s329 = scalar_lea.vmem %s0, %s328
        %v330 = vld [vmem:[%s329] sm:$0xff]
        %v331 = vld [vmem:[%s329 + $0x8] sm:$0xff]
        %v332 = vld [vmem:[%s329 + $0x10] sm:$0xff]
        %v333 = vld [vmem:[%s329 + $0x18] sm:$0x11]
        %v334 = vld [vmem:[%s1] sm:$0xff]
        %v335 = vld [vmem:[%s1 + $0x8] sm:$0xff]
        %v336 = vld [vmem:[%s1 + $0x10] sm:$0xff]
        %v337 = vld [vmem:[%s1 + $0x18] sm:$0xff]
        %v338 = vld [vmem:[%s1 + $0x20] sm:$0xff]
        %v339 = vld [vmem:[%s1 + $0x28] sm:$0xff]
        %v340 = vld [vmem:[%s1 + $0x30] sm:$0xff]
        %v341 = vld [vmem:[%s1 + $0x38] sm:$0xff]
        %v342 = vld [vmem:[%s1 + $0x40] sm:$0xff]
        %v343 = vld [vmem:[%s1 + $0x48] sm:$0xff]
        %v344 = vld [vmem:[%s1 + $0x50] sm:$0xff]
        %v345 = vld [vmem:[%s1 + $0x58] sm:$0xff]
        %v346 = vld [vmem:[%s1 + $0x60] sm:$0xff]
        %v347 = vld [vmem:[%s1 + $0x68] sm:$0xff]
        %v348 = vld [vmem:[%s1 + $0x70] sm:$0xff]
        %v349 = vld [vmem:[%s1 + $0x78] sm:$0xff]
        %v350 = vld [vmem:[%s1 + $0x80] sm:$0xff]
        %v351 = vld [vmem:[%s1 + $0x88] sm:$0xff]
        %v352 = vld [vmem:[%s1 + $0x90] sm:$0xff]
        %v353 = vld [vmem:[%s1 + $0x98] sm:$0xff]
        %v354 = vld [vmem:[%s1 + $0xa0] sm:$0xff]
        %v355 = vld [vmem:[%s1 + $0xa8] sm:$0xff]
        %v356 = vld [vmem:[%s1 + $0xb0] sm:$0xff]
        %v357 = vld [vmem:[%s1 + $0xb8] sm:$0xff]
        %v358 = vld [vmem:[%s1 + $0xc0] sm:$0xff]
        %v359 = vld [vmem:[%s1 + $0xc8] sm:$0xff]
        %v360 = vld [vmem:[%s1 + $0xd0] sm:$0xff]
        %v361 = vld [vmem:[%s1 + $0xd8] sm:$0xff]
        %v362 = vld [vmem:[%s1 + $0xe0] sm:$0xff]
        %v363 = vld [vmem:[%s1 + $0xe8] sm:$0xff]
        %v364 = vld [vmem:[%s1 + $0xf0] sm:$0xff]
        %v365 = vld [vmem:[%s1 + $0xf8] sm:$0xff]
        %v366 = vld [vmem:[%s1 + $0x100] sm:$0xff]
        %v367 = vld [vmem:[%s1 + $0x108] sm:$0xff]
        %v368 = vld [vmem:[%s1 + $0x110] sm:$0xff]
        %v369 = vld [vmem:[%s1 + $0x118] sm:$0xff]
        %v370 = vld [vmem:[%s1 + $0x120] sm:$0xff]
        %v371 = vld [vmem:[%s1 + $0x128] sm:$0xff]
        %v372 = vld [vmem:[%s1 + $0x130] sm:$0xff]
        %v373 = vld [vmem:[%s1 + $0x138] sm:$0xff]
        %v374 = vld [vmem:[%s1 + $0x140] sm:$0xff]
        %v375 = vld [vmem:[%s1 + $0x148] sm:$0xff]
        %v376 = vld [vmem:[%s1 + $0x150] sm:$0xff]
        %v377 = vld [vmem:[%s1 + $0x158] sm:$0xff]
        %v378 = vld [vmem:[%s1 + $0x160] sm:$0xff]
        %v379 = vld [vmem:[%s1 + $0x168] sm:$0xff]
        %v380 = vld [vmem:[%s1 + $0x170] sm:$0xff]
        %v381 = vld [vmem:[%s1 + $0x178] sm:$0xff]
        %v382 = vld [vmem:[%s1 + $0x180] sm:$0xff]
        %v383 = vld [vmem:[%s1 + $0x188] sm:$0xff]
        %v384 = vld [vmem:[%s1 + $0x190] sm:$0xff]
        %v385 = vld [vmem:[%s1 + $0x198] sm:$0xff]
        %v386 = vld [vmem:[%s1 + $0x1a0] sm:$0xff]
        %v387 = vld [vmem:[%s1 + $0x1a8] sm:$0xff]
        %v388 = vld [vmem:[%s1 + $0x1b0] sm:$0xff]
        %v389 = vld [vmem:[%s1 + $0x1b8] sm:$0xff]
        %v390 = vld [vmem:[%s1 + $0x1c0] sm:$0xff]
        %v391 = vld [vmem:[%s1 + $0x1c8] sm:$0xff]
        %v392 = vld [vmem:[%s1 + $0x1d0] sm:$0xff]
        %v393 = vld [vmem:[%s1 + $0x1d8] sm:$0xff]
        %v394 = vld [vmem:[%s1 + $0x1e0] sm:$0xff]
        %v395 = vld [vmem:[%s1 + $0x1e8] sm:$0xff]
        %v396 = vld [vmem:[%s1 + $0x1f0] sm:$0xff]
        %v397 = vld [vmem:[%s1 + $0x1f8] sm:$0xff]
        %v402 = vunpack.c.l.b16 %v330
        %v403 = vunpack.c.h.b16 %v330
        %v404 = vunpack.c.l.b16 %v331
        %v405 = vunpack.c.h.b16 %v331
        %v406 = vunpack.c.l.b16 %v332
        %v407 = vunpack.c.h.b16 %v332
        %v408 = vunpack.c.l.b16 %v333
        %v409 = vunpack.c.h.b16 %v333
        %v410 = vpack.c.b16 %v404, %v402
        %v411 = vpack.c.b16 %v405, %v403
        %v412 = vpack.c.b16 %v408, %v406
        %v413 = vpack.c.b16 %v409, %v407
        %v482 = vunpack.c.l.b16 %v334
        %v483 = vunpack.c.h.b16 %v334
        %v484 = vunpack.c.l.b16 %v335
        %v485 = vunpack.c.h.b16 %v335
        %v486 = vunpack.c.l.b16 %v336
        %v487 = vunpack.c.h.b16 %v336
        %v488 = vunpack.c.l.b16 %v337
        %v489 = vunpack.c.h.b16 %v337
        %v490 = vunpack.c.l.b16 %v338
        %v491 = vunpack.c.h.b16 %v338
        %v492 = vunpack.c.l.b16 %v339
        %v493 = vunpack.c.h.b16 %v339
        %v494 = vunpack.c.l.b16 %v340
        %v495 = vunpack.c.h.b16 %v340
        %v496 = vunpack.c.l.b16 %v341
        %v497 = vunpack.c.h.b16 %v341
        %v498 = vunpack.c.l.b16 %v342
        %v499 = vunpack.c.h.b16 %v342
        %v500 = vunpack.c.l.b16 %v343
        %v501 = vunpack.c.h.b16 %v343
        %v502 = vunpack.c.l.b16 %v344
        %v503 = vunpack.c.h.b16 %v344
        %v504 = vunpack.c.l.b16 %v345
        %v505 = vunpack.c.h.b16 %v345
        %v506 = vunpack.c.l.b16 %v346
        %v507 = vunpack.c.h.b16 %v346
        %v508 = vunpack.c.l.b16 %v347
        %v509 = vunpack.c.h.b16 %v347
        %v510 = vunpack.c.l.b16 %v348
        %v511 = vunpack.c.h.b16 %v348
        %v512 = vunpack.c.l.b16 %v349
        %v513 = vunpack.c.h.b16 %v349
        %v514 = vunpack.c.l.b16 %v350
        %v515 = vunpack.c.h.b16 %v350
        %v516 = vunpack.c.l.b16 %v351
        %v517 = vunpack.c.h.b16 %v351
        %v518 = vunpack.c.l.b16 %v352
        %v519 = vunpack.c.h.b16 %v352
        %v520 = vunpack.c.l.b16 %v353
        %v521 = vunpack.c.h.b16 %v353
        %v522 = vunpack.c.l.b16 %v354
        %v523 = vunpack.c.h.b16 %v354
        %v524 = vunpack.c.l.b16 %v355
        %v525 = vunpack.c.h.b16 %v355
        %v526 = vunpack.c.l.b16 %v356
        %v527 = vunpack.c.h.b16 %v356
        %v528 = vunpack.c.l.b16 %v357
        %v529 = vunpack.c.h.b16 %v357
        %v530 = vunpack.c.l.b16 %v358
        %v531 = vunpack.c.h.b16 %v358
        %v532 = vunpack.c.l.b16 %v359
        %v533 = vunpack.c.h.b16 %v359
        %v534 = vunpack.c.l.b16 %v360
        %v535 = vunpack.c.h.b16 %v360
        %v536 = vunpack.c.l.b16 %v361
        %v537 = vunpack.c.h.b16 %v361
        %v538 = vunpack.c.l.b16 %v362
        %v539 = vunpack.c.h.b16 %v362
        %v540 = vunpack.c.l.b16 %v363
        %v541 = vunpack.c.h.b16 %v363
        %v542 = vunpack.c.l.b16 %v364
        %v543 = vunpack.c.h.b16 %v364
        %v544 = vunpack.c.l.b16 %v365
        %v545 = vunpack.c.h.b16 %v365
        %v546 = vunpack.c.l.b16 %v366
        %v547 = vunpack.c.h.b16 %v366
        %v548 = vunpack.c.l.b16 %v367
        %v549 = vunpack.c.h.b16 %v367
        %v550 = vunpack.c.l.b16 %v368
        %v551 = vunpack.c.h.b16 %v368
        %v552 = vunpack.c.l.b16 %v369
        %v553 = vunpack.c.h.b16 %v369
        %v554 = vunpack.c.l.b16 %v370
        %v555 = vunpack.c.h.b16 %v370
        %v556 = vunpack.c.l.b16 %v371
        %v557 = vunpack.c.h.b16 %v371
        %v558 = vunpack.c.l.b16 %v372
        %v559 = vunpack.c.h.b16 %v372
        %v560 = vunpack.c.l.b16 %v373
        %v561 = vunpack.c.h.b16 %v373
        %v562 = vunpack.c.l.b16 %v374
        %v563 = vunpack.c.h.b16 %v374
        %v564 = vunpack.c.l.b16 %v375
        %v565 = vunpack.c.h.b16 %v375
        %v566 = vunpack.c.l.b16 %v376
        %v567 = vunpack.c.h.b16 %v376
        %v568 = vunpack.c.l.b16 %v377
        %v569 = vunpack.c.h.b16 %v377
        %v570 = vunpack.c.l.b16 %v378
        %v571 = vunpack.c.h.b16 %v378
        %v572 = vunpack.c.l.b16 %v379
        %v573 = vunpack.c.h.b16 %v379
        %v574 = vunpack.c.l.b16 %v380
        %v575 = vunpack.c.h.b16 %v380
        %v576 = vunpack.c.l.b16 %v381
        %v577 = vunpack.c.h.b16 %v381
        %v578 = vunpack.c.l.b16 %v382
        %v579 = vunpack.c.h.b16 %v382
        %v580 = vunpack.c.l.b16 %v383
        %v581 = vunpack.c.h.b16 %v383
        %v582 = vunpack.c.l.b16 %v384
        %v583 = vunpack.c.h.b16 %v384
        %v584 = vunpack.c.l.b16 %v385
        %v585 = vunpack.c.h.b16 %v385
        %v586 = vunpack.c.l.b16 %v386
        %v587 = vunpack.c.h.b16 %v386
        %v588 = vunpack.c.l.b16 %v387
        %v589 = vunpack.c.h.b16 %v387
        %v590 = vunpack.c.l.b16 %v388
        %v591 = vunpack.c.h.b16 %v388
        %v592 = vunpack.c.l.b16 %v389
        %v593 = vunpack.c.h.b16 %v389
        %v594 = vunpack.c.l.b16 %v390
        %v595 = vunpack.c.h.b16 %v390
        %v596 = vunpack.c.l.b16 %v391
        %v597 = vunpack.c.h.b16 %v391
        %v598 = vunpack.c.l.b16 %v392
        %v599 = vunpack.c.h.b16 %v392
        %v600 = vunpack.c.l.b16 %v393
        %v601 = vunpack.c.h.b16 %v393
        %v602 = vunpack.c.l.b16 %v394
        %v603 = vunpack.c.h.b16 %v394
        %v604 = vunpack.c.l.b16 %v395
        %v605 = vunpack.c.h.b16 %v395
        %v606 = vunpack.c.l.b16 %v396
        %v607 = vunpack.c.h.b16 %v396
        %v608 = vunpack.c.l.b16 %v397
        %v609 = vunpack.c.h.b16 %v397
        %v610 = vpack.c.b16 %v486, %v482
        %v611 = vpack.c.b16 %v487, %v483
        %v612 = vpack.c.b16 %v488, %v484
        %v613 = vpack.c.b16 %v489, %v485
        %v614 = vpack.c.b16 %v494, %v490
        %v615 = vpack.c.b16 %v495, %v491
        %v616 = vpack.c.b16 %v496, %v492
        %v617 = vpack.c.b16 %v497, %v493
        %v618 = vpack.c.b16 %v502, %v498
        %v619 = vpack.c.b16 %v503, %v499
        %v620 = vpack.c.b16 %v504, %v500
        %v621 = vpack.c.b16 %v505, %v501
        %v622 = vpack.c.b16 %v510, %v506
        %v623 = vpack.c.b16 %v511, %v507
        %v624 = vpack.c.b16 %v512, %v508
        %v625 = vpack.c.b16 %v513, %v509
        %v626 = vpack.c.b16 %v518, %v514
        %v627 = vpack.c.b16 %v519, %v515
        %v628 = vpack.c.b16 %v520, %v516
        %v629 = vpack.c.b16 %v521, %v517
        %v630 = vpack.c.b16 %v526, %v522
        %v631 = vpack.c.b16 %v527, %v523
        %v632 = vpack.c.b16 %v528, %v524
        %v633 = vpack.c.b16 %v529, %v525
        %v634 = vpack.c.b16 %v534, %v530
        %v635 = vpack.c.b16 %v535, %v531
        %v636 = vpack.c.b16 %v536, %v532
        %v637 = vpack.c.b16 %v537, %v533
        %v638 = vpack.c.b16 %v542, %v538
        %v639 = vpack.c.b16 %v543, %v539
        %v640 = vpack.c.b16 %v544, %v540
        %v641 = vpack.c.b16 %v545, %v541
        %v642 = vpack.c.b16 %v550, %v546
        %v643 = vpack.c.b16 %v551, %v547
        %v644 = vpack.c.b16 %v552, %v548
        %v645 = vpack.c.b16 %v553, %v549
        %v646 = vpack.c.b16 %v558, %v554
        %v647 = vpack.c.b16 %v559, %v555
        %v648 = vpack.c.b16 %v560, %v556
        %v649 = vpack.c.b16 %v561, %v557
        %v650 = vpack.c.b16 %v566, %v562
        %v651 = vpack.c.b16 %v567, %v563
        %v652 = vpack.c.b16 %v568, %v564
        %v653 = vpack.c.b16 %v569, %v565
        %v654 = vpack.c.b16 %v574, %v570
        %v655 = vpack.c.b16 %v575, %v571
        %v656 = vpack.c.b16 %v576, %v572
        %v657 = vpack.c.b16 %v577, %v573
        %v658 = vpack.c.b16 %v582, %v578
        %v659 = vpack.c.b16 %v583, %v579
        %v660 = vpack.c.b16 %v584, %v580
        %v661 = vpack.c.b16 %v585, %v581
        %v662 = vpack.c.b16 %v590, %v586
        %v663 = vpack.c.b16 %v591, %v587
        %v664 = vpack.c.b16 %v592, %v588
        %v665 = vpack.c.b16 %v593, %v589
        %v666 = vpack.c.b16 %v598, %v594
        %v667 = vpack.c.b16 %v599, %v595
        %v668 = vpack.c.b16 %v600, %v596
        %v669 = vpack.c.b16 %v601, %v597
        %v670 = vpack.c.b16 %v606, %v602
        %v671 = vpack.c.b16 %v607, %v603
        %v672 = vpack.c.b16 %v608, %v604
        %v673 = vpack.c.b16 %v609, %v605
        %738 = vmatpush.bf16.msra.mxu0 %v638
        %739 = vmatpush.bf16.msra.mxu0 %v634
        %740 = vmatpush.bf16.msra.mxu0 %v630
        %741 = vmatpush.bf16.msra.mxu0 %v626
        %742 = vmatpush.bf16.msra.mxu0 %v622
        %743 = vmatpush.bf16.msra.mxu0 %v618
        %744 = vmatpush.bf16.msra.mxu0 %v614
        %745 = vmatpush.bf16.msra.mxu0 %v610
        %746 = vmatmul.bf16.gmra.mxu0 %v410
        %v747 = vpop.f32.mrf.mxu0
        %v748 = vadd.f32 0.0, %v747
        %v749 = vpop.f32.mrf.mxu0
        %v750 = vadd.f32 0.0, %v749
        %751 = vmatmul.bf16.gmra.mxu0 %v412
        %v752 = vpop.f32.mrf.mxu0
        %v753 = vadd.f32 0.0, %v752
        %v754 = vpop.f32.mrf.mxu0
        %v755 = vadd.f32 0.0, %v754
        %756 = vdwg.mxu0
        %757 = vmatpush.bf16.msra.mxu0 %v670
        %758 = vmatpush.bf16.msra.mxu0 %v666
        %759 = vmatpush.bf16.msra.mxu0 %v662
        %760 = vmatpush.bf16.msra.mxu0 %v658
        %761 = vmatpush.bf16.msra.mxu0 %v654
        %762 = vmatpush.bf16.msra.mxu0 %v650
        %763 = vmatpush.bf16.msra.mxu0 %v646
        %764 = vmatpush.bf16.msra.mxu0 %v642
        %765 = vmatmul.bf16.gmra.mxu0 %v411
        %v766 = vpop.f32.mrf.mxu0
        %v767 = vadd.f32 %v748, %v766
        %v768 = vpop.f32.mrf.mxu0
        %v769 = vadd.f32 %v750, %v768
        %770 = vmatmul.bf16.gmra.mxu0 %v413
        %v771 = vpop.f32.mrf.mxu0
        %v772 = vadd.f32 %v753, %v771
        %v773 = vpop.f32.mrf.mxu0
        %v774 = vadd.f32 %v755, %v773
        %775 = vdwg.mxu0
        %776 = vmatpush.bf16.msra.mxu0 %v639
        %777 = vmatpush.bf16.msra.mxu0 %v635
        %778 = vmatpush.bf16.msra.mxu0 %v631
        %779 = vmatpush.bf16.msra.mxu0 %v627
        %780 = vmatpush.bf16.msra.mxu0 %v623
        %781 = vmatpush.bf16.msra.mxu0 %v619
        %782 = vmatpush.bf16.msra.mxu0 %v615
        %783 = vmatpush.bf16.msra.mxu0 %v611
        %784 = vmatmul.bf16.gmra.mxu0 %v410
        %v785 = vpop.f32.mrf.mxu0
        %v786 = vadd.f32 0.0, %v785
        %v787 = vpop.f32.mrf.mxu0
        %v788 = vadd.f32 0.0, %v787
        %789 = vmatmul.bf16.gmra.mxu0 %v412
        %v790 = vpop.f32.mrf.mxu0
        %v791 = vadd.f32 0.0, %v790
        %v792 = vpop.f32.mrf.mxu0
        %v793 = vadd.f32 0.0, %v792
        %794 = vdwg.mxu0
        %795 = vmatpush.bf16.msra.mxu0 %v671
        %796 = vmatpush.bf16.msra.mxu0 %v667
        %797 = vmatpush.bf16.msra.mxu0 %v663
        %798 = vmatpush.bf16.msra.mxu0 %v659
        %799 = vmatpush.bf16.msra.mxu0 %v655
        %800 = vmatpush.bf16.msra.mxu0 %v651
        %801 = vmatpush.bf16.msra.mxu0 %v647
        %802 = vmatpush.bf16.msra.mxu0 %v643
        %803 = vmatmul.bf16.gmra.mxu0 %v411
        %v804 = vpop.f32.mrf.mxu0
        %v805 = vadd.f32 %v786, %v804
        %v806 = vpop.f32.mrf.mxu0
        %v807 = vadd.f32 %v788, %v806
        %808 = vmatmul.bf16.gmra.mxu0 %v413
        %v809 = vpop.f32.mrf.mxu0
        %v810 = vadd.f32 %v791, %v809
        %v811 = vpop.f32.mrf.mxu0
        %v812 = vadd.f32 %v793, %v811
        %813 = vdwg.mxu0
        %814 = vmatpush.bf16.msra.mxu0 %v640
        %815 = vmatpush.bf16.msra.mxu0 %v636
        %816 = vmatpush.bf16.msra.mxu0 %v632
        %817 = vmatpush.bf16.msra.mxu0 %v628
        %818 = vmatpush.bf16.msra.mxu0 %v624
        %819 = vmatpush.bf16.msra.mxu0 %v620
        %820 = vmatpush.bf16.msra.mxu0 %v616
        %821 = vmatpush.bf16.msra.mxu0 %v612
        %822 = vmatmul.bf16.gmra.mxu0 %v410
        %v823 = vpop.f32.mrf.mxu0
        %v824 = vadd.f32 0.0, %v823
        %v825 = vpop.f32.mrf.mxu0
        %v826 = vadd.f32 0.0, %v825
        %827 = vmatmul.bf16.gmra.mxu0 %v412
        %v828 = vpop.f32.mrf.mxu0
        %v829 = vadd.f32 0.0, %v828
        %v830 = vpop.f32.mrf.mxu0
        %v831 = vadd.f32 0.0, %v830
        %832 = vdwg.mxu0
        %833 = vmatpush.bf16.msra.mxu0 %v672
        %834 = vmatpush.bf16.msra.mxu0 %v668
        %835 = vmatpush.bf16.msra.mxu0 %v664
        %836 = vmatpush.bf16.msra.mxu0 %v660
        %837 = vmatpush.bf16.msra.mxu0 %v656
        %838 = vmatpush.bf16.msra.mxu0 %v652
        %839 = vmatpush.bf16.msra.mxu0 %v648
        %840 = vmatpush.bf16.msra.mxu0 %v644
        %841 = vmatmul.bf16.gmra.mxu0 %v411
        %v842 = vpop.f32.mrf.mxu0
        %v843 = vadd.f32 %v824, %v842
        %v844 = vpop.f32.mrf.mxu0
        %v845 = vadd.f32 %v826, %v844
        %846 = vmatmul.bf16.gmra.mxu0 %v413
        %v847 = vpop.f32.mrf.mxu0
        %v848 = vadd.f32 %v829, %v847
        %v849 = vpop.f32.mrf.mxu0
        %v850 = vadd.f32 %v831, %v849
        %851 = vdwg.mxu0
        %852 = vmatpush.bf16.msra.mxu0 %v641
        %853 = vmatpush.bf16.msra.mxu0 %v637
        %854 = vmatpush.bf16.msra.mxu0 %v633
        %855 = vmatpush.bf16.msra.mxu0 %v629
        %856 = vmatpush.bf16.msra.mxu0 %v625
        %857 = vmatpush.bf16.msra.mxu0 %v621
        %858 = vmatpush.bf16.msra.mxu0 %v617
        %859 = vmatpush.bf16.msra.mxu0 %v613
        %860 = vmatmul.bf16.gmra.mxu0 %v410
        %v861 = vpop.f32.mrf.mxu0
        %v862 = vadd.f32 0.0, %v861
        %v863 = vpop.f32.mrf.mxu0
        %v864 = vadd.f32 0.0, %v863
        %865 = vmatmul.bf16.gmra.mxu0 %v412
        %v866 = vpop.f32.mrf.mxu0
        %v867 = vadd.f32 0.0, %v866
        %v868 = vpop.f32.mrf.mxu0
        %v869 = vadd.f32 0.0, %v868
        %870 = vdwg.mxu0
        %871 = vmatpush.bf16.msra.mxu0 %v673
        %872 = vmatpush.bf16.msra.mxu0 %v669
        %873 = vmatpush.bf16.msra.mxu0 %v665
        %874 = vmatpush.bf16.msra.mxu0 %v661
        %875 = vmatpush.bf16.msra.mxu0 %v657
        %876 = vmatpush.bf16.msra.mxu0 %v653
        %877 = vmatpush.bf16.msra.mxu0 %v649
        %878 = vmatpush.bf16.msra.mxu0 %v645
        %879 = vmatmul.bf16.gmra.mxu0 %v411
        %v880 = vpop.f32.mrf.mxu0
        %v881 = vadd.f32 %v862, %v880
        %v882 = vpop.f32.mrf.mxu0
        %v883 = vadd.f32 %v864, %v882
        %884 = vmatmul.bf16.gmra.mxu0 %v413
        %v885 = vpop.f32.mrf.mxu0
        %v886 = vadd.f32 %v867, %v885
        %v887 = vpop.f32.mrf.mxu0
        %v888 = vadd.f32 %v869, %v887
        %889 = vdwg.mxu0
        %v890 = vmax.f32 %v767, %v805
        %v891 = vmax.f32 %v769, %v807
        %v892 = vmax.f32 %v772, %v810
        %v893 = vmax.f32 %v774, %v812
        %v894 = vmax.f32 %v843, %v881
        %v895 = vmax.f32 %v845, %v883
        %v896 = vmax.f32 %v848, %v886
        %v897 = vmax.f32 %v850, %v888
        %v898 = vmax.f32 %v890, %v894
        %v899 = vmax.f32 %v891, %v895
        %v900 = vmax.f32 %v892, %v896
        %v901 = vmax.f32 %v893, %v897
        %v902 = vld [vmem:[%s2] sm:$0x1]
        %v904 = vperm.slane %v902, 0
        %v906 = vadd.f32 %v898, %v904
        %v907 = vadd.f32 %v899, %v904
        %v908 = vadd.f32 %v900, %v904
        %v909 = vadd.f32 %v901, %v904
        %v910 = vmax.f32 %v906, 0.0
        %v911 = vmax.f32 %v907, 0.0
        %v912 = vmax.f32 %v908, 0.0
        %v913 = vmax.f32 %v909, 0.0
        %v914 = vld [vmem:[%s4] sm:$0x1]
        %v915 = vpack.c.bf16 %v910, %v910
        %v916 = vld [vmem:[%s3] sm:$0xf]
        %v917 = vld [vmem:[%s3 + $0x4] sm:$0xf]
        %v918 = vld [vmem:[%s3 + $0x8] sm:$0xf]
        %v919 = vld [vmem:[%s3 + $0xc] sm:$0xf]
        %v920 = vld [vmem:[%s3 + $0x10] sm:$0xf]
        %v921 = vld [vmem:[%s3 + $0x14] sm:$0xf]
        %v922 = vld [vmem:[%s3 + $0x18] sm:$0xf]
        %v923 = vld [vmem:[%s3 + $0x1c] sm:$0xf]
        %v924 = vld [vmem:[%s3 + $0x20] sm:$0xf]
        %v925 = vld [vmem:[%s3 + $0x24] sm:$0xf]
        %v926 = vld [vmem:[%s3 + $0x28] sm:$0xf]
        %v927 = vld [vmem:[%s3 + $0x2c] sm:$0xf]
        %v928 = vld [vmem:[%s3 + $0x30] sm:$0xf]
        %v929 = vld [vmem:[%s3 + $0x34] sm:$0xf]
        %v930 = vld [vmem:[%s3 + $0x38] sm:$0xf]
        %v931 = vld [vmem:[%s3 + $0x3c] sm:$0xf]
        %v948 = vunpack.c.l.b16 %v916
        %v949 = vunpack.c.l.b16 %v917
        %v950 = vunpack.c.l.b16 %v918
        %v951 = vunpack.c.l.b16 %v919
        %v952 = vunpack.c.l.b16 %v920
        %v953 = vunpack.c.l.b16 %v921
        %v954 = vunpack.c.l.b16 %v922
        %v955 = vunpack.c.l.b16 %v923
        %v956 = vunpack.c.l.b16 %v924
        %v957 = vunpack.c.l.b16 %v925
        %v958 = vunpack.c.l.b16 %v926
        %v959 = vunpack.c.l.b16 %v927
        %v960 = vunpack.c.l.b16 %v928
        %v961 = vunpack.c.l.b16 %v929
        %v962 = vunpack.c.l.b16 %v930
        %v963 = vunpack.c.l.b16 %v931
        %v964 = vpack.c.b16 %v949, %v948
        %v965 = vpack.c.b16 %v951, %v950
        %v966 = vpack.c.b16 %v953, %v952
        %v967 = vpack.c.b16 %v955, %v954
        %v968 = vpack.c.b16 %v957, %v956
        %v969 = vpack.c.b16 %v959, %v958
        %v970 = vpack.c.b16 %v961, %v960
        %v971 = vpack.c.b16 %v963, %v962
        %980 = vmatpush.bf16.msra.mxu0 %v971
        %981 = vmatpush.bf16.msra.mxu0 %v970
        %982 = vmatpush.bf16.msra.mxu0 %v969
        %983 = vmatpush.bf16.msra.mxu0 %v968
        %984 = vmatpush.bf16.msra.mxu0 %v967
        %985 = vmatpush.bf16.msra.mxu0 %v966
        %986 = vmatpush.bf16.msra.mxu0 %v965
        %987 = vmatpush.bf16.msra.mxu0 %v964
        %988 = vmatmul.bf16.gmra.mxu0 %v915
        %v989 = vpop.f32.mrf.mxu0
        %v990 = vadd.f32 0.0, %v989
        %v991 = vpop.f32.mrf.mxu0
        %992 = vdwg.mxu0
        %v993 = vadd.f32 %v914, %v990
        %s994 = scalar_lea.vmem %s3, 64
        %v995 = vld [vmem:[%s994] sm:$0xf]
        %v996 = vld [vmem:[%s994 + $0x4] sm:$0xf]
        %v997 = vld [vmem:[%s994 + $0x8] sm:$0xf]
        %v998 = vld [vmem:[%s994 + $0xc] sm:$0xf]
        %v999 = vld [vmem:[%s994 + $0x10] sm:$0xf]
        %v1000 = vld [vmem:[%s994 + $0x14] sm:$0xf]
        %v1001 = vld [vmem:[%s994 + $0x18] sm:$0xf]
        %v1002 = vld [vmem:[%s994 + $0x1c] sm:$0xf]
        %v1003 = vld [vmem:[%s994 + $0x20] sm:$0xf]
        %v1004 = vld [vmem:[%s994 + $0x24] sm:$0xf]
        %v1005 = vld [vmem:[%s994 + $0x28] sm:$0xf]
        %v1006 = vld [vmem:[%s994 + $0x2c] sm:$0xf]
        %v1007 = vld [vmem:[%s994 + $0x30] sm:$0xf]
        %v1008 = vld [vmem:[%s994 + $0x34] sm:$0xf]
        %v1009 = vld [vmem:[%s994 + $0x38] sm:$0xf]
        %v1010 = vld [vmem:[%s994 + $0x3c] sm:$0xf]
        %v1012 = vshrl.u32 %v915, 16
        %v1031 = vunpack.c.l.b16 %v995
        %v1032 = vunpack.c.l.b16 %v996
        %v1033 = vunpack.c.l.b16 %v997
        %v1034 = vunpack.c.l.b16 %v998
        %v1035 = vunpack.c.l.b16 %v999
        %v1036 = vunpack.c.l.b16 %v1000
        %v1037 = vunpack.c.l.b16 %v1001
        %v1038 = vunpack.c.l.b16 %v1002
        %v1039 = vunpack.c.l.b16 %v1003
        %v1040 = vunpack.c.l.b16 %v1004
        %v1041 = vunpack.c.l.b16 %v1005
        %v1042 = vunpack.c.l.b16 %v1006
        %v1043 = vunpack.c.l.b16 %v1007
        %v1044 = vunpack.c.l.b16 %v1008
        %v1045 = vunpack.c.l.b16 %v1009
        %v1046 = vunpack.c.l.b16 %v1010
        %v1047 = vpack.c.b16 %v1032, %v1031
        %v1048 = vpack.c.b16 %v1034, %v1033
        %v1049 = vpack.c.b16 %v1036, %v1035
        %v1050 = vpack.c.b16 %v1038, %v1037
        %v1051 = vpack.c.b16 %v1040, %v1039
        %v1052 = vpack.c.b16 %v1042, %v1041
        %v1053 = vpack.c.b16 %v1044, %v1043
        %v1054 = vpack.c.b16 %v1046, %v1045
        %1063 = vmatpush.bf16.msra.mxu0 %v1054
        %1064 = vmatpush.bf16.msra.mxu0 %v1053
        %1065 = vmatpush.bf16.msra.mxu0 %v1052
        %1066 = vmatpush.bf16.msra.mxu0 %v1051
        %1067 = vmatpush.bf16.msra.mxu0 %v1050
        %1068 = vmatpush.bf16.msra.mxu0 %v1049
        %1069 = vmatpush.bf16.msra.mxu0 %v1048
        %1070 = vmatpush.bf16.msra.mxu0 %v1047
        %1071 = vmatmul.bf16.gmra.mxu0 %v1012
        %v1072 = vpop.f32.mrf.mxu0
        %v1073 = vadd.f32 0.0, %v1072
        %v1074 = vpop.f32.mrf.mxu0
        %1075 = vdwg.mxu0
        %v1076 = vadd.f32 %v993, %v1073
        %s1077 = scalar_lea.vmem %s3, 128
        %v1078 = vld [vmem:[%s1077] sm:$0xf]
        %v1079 = vld [vmem:[%s1077 + $0x4] sm:$0xf]
        %v1080 = vld [vmem:[%s1077 + $0x8] sm:$0xf]
        %v1081 = vld [vmem:[%s1077 + $0xc] sm:$0xf]
        %v1082 = vld [vmem:[%s1077 + $0x10] sm:$0xf]
        %v1083 = vld [vmem:[%s1077 + $0x14] sm:$0xf]
        %v1084 = vld [vmem:[%s1077 + $0x18] sm:$0xf]
        %v1085 = vld [vmem:[%s1077 + $0x1c] sm:$0xf]
        %v1086 = vld [vmem:[%s1077 + $0x20] sm:$0xf]
        %v1087 = vld [vmem:[%s1077 + $0x24] sm:$0xf]
        %v1088 = vld [vmem:[%s1077 + $0x28] sm:$0xf]
        %v1089 = vld [vmem:[%s1077 + $0x2c] sm:$0xf]
        %v1090 = vld [vmem:[%s1077 + $0x30] sm:$0xf]
        %v1091 = vld [vmem:[%s1077 + $0x34] sm:$0xf]
        %v1092 = vld [vmem:[%s1077 + $0x38] sm:$0xf]
        %v1093 = vld [vmem:[%s1077 + $0x3c] sm:$0xf]
        %v1095 = vrot.slane %v915, 1
        %v1113 = vunpack.c.l.b16 %v1078
        %v1114 = vunpack.c.l.b16 %v1079
        %v1115 = vunpack.c.l.b16 %v1080
        %v1116 = vunpack.c.l.b16 %v1081
        %v1117 = vunpack.c.l.b16 %v1082
        %v1118 = vunpack.c.l.b16 %v1083
        %v1119 = vunpack.c.l.b16 %v1084
        %v1120 = vunpack.c.l.b16 %v1085
        %v1121 = vunpack.c.l.b16 %v1086
        %v1122 = vunpack.c.l.b16 %v1087
        %v1123 = vunpack.c.l.b16 %v1088
        %v1124 = vunpack.c.l.b16 %v1089
        %v1125 = vunpack.c.l.b16 %v1090
        %v1126 = vunpack.c.l.b16 %v1091
        %v1127 = vunpack.c.l.b16 %v1092
        %v1128 = vunpack.c.l.b16 %v1093
        %v1129 = vpack.c.b16 %v1114, %v1113
        %v1130 = vpack.c.b16 %v1116, %v1115
        %v1131 = vpack.c.b16 %v1118, %v1117
        %v1132 = vpack.c.b16 %v1120, %v1119
        %v1133 = vpack.c.b16 %v1122, %v1121
        %v1134 = vpack.c.b16 %v1124, %v1123
        %v1135 = vpack.c.b16 %v1126, %v1125
        %v1136 = vpack.c.b16 %v1128, %v1127
        %1145 = vmatpush.bf16.msra.mxu0 %v1136
        %1146 = vmatpush.bf16.msra.mxu0 %v1135
        %1147 = vmatpush.bf16.msra.mxu0 %v1134
        %1148 = vmatpush.bf16.msra.mxu0 %v1133
        %1149 = vmatpush.bf16.msra.mxu0 %v1132
        %1150 = vmatpush.bf16.msra.mxu0 %v1131
        %1151 = vmatpush.bf16.msra.mxu0 %v1130
        %1152 = vmatpush.bf16.msra.mxu0 %v1129
        %1153 = vmatmul.bf16.gmra.mxu0 %v1095
        %v1154 = vpop.f32.mrf.mxu0
        %v1155 = vadd.f32 0.0, %v1154
        %v1156 = vpop.f32.mrf.mxu0
        %1157 = vdwg.mxu0
        %v1158 = vadd.f32 %v1076, %v1155
        %s1159 = scalar_lea.vmem %s3, 192
        %v1160 = vld [vmem:[%s1159] sm:$0xf]
        %v1161 = vld [vmem:[%s1159 + $0x4] sm:$0xf]
        %v1162 = vld [vmem:[%s1159 + $0x8] sm:$0xf]
        %v1163 = vld [vmem:[%s1159 + $0xc] sm:$0xf]
        %v1164 = vld [vmem:[%s1159 + $0x10] sm:$0xf]
        %v1165 = vld [vmem:[%s1159 + $0x14] sm:$0xf]
        %v1166 = vld [vmem:[%s1159 + $0x18] sm:$0xf]
        %v1167 = vld [vmem:[%s1159 + $0x1c] sm:$0xf]
        %v1168 = vld [vmem:[%s1159 + $0x20] sm:$0xf]
        %v1169 = vld [vmem:[%s1159 + $0x24] sm:$0xf]
        %v1170 = vld [vmem:[%s1159 + $0x28] sm:$0xf]
        %v1171 = vld [vmem:[%s1159 + $0x2c] sm:$0xf]
        %v1172 = vld [vmem:[%s1159 + $0x30] sm:$0xf]
        %v1173 = vld [vmem:[%s1159 + $0x34] sm:$0xf]
        %v1174 = vld [vmem:[%s1159 + $0x38] sm:$0xf]
        %v1175 = vld [vmem:[%s1159 + $0x3c] sm:$0xf]
        %v1176 = vrot.slane %v1012, 1
        %v1194 = vunpack.c.l.b16 %v1160
        %v1195 = vunpack.c.l.b16 %v1161
        %v1196 = vunpack.c.l.b16 %v1162
        %v1197 = vunpack.c.l.b16 %v1163
        %v1198 = vunpack.c.l.b16 %v1164
        %v1199 = vunpack.c.l.b16 %v1165
        %v1200 = vunpack.c.l.b16 %v1166
        %v1201 = vunpack.c.l.b16 %v1167
        %v1202 = vunpack.c.l.b16 %v1168
        %v1203 = vunpack.c.l.b16 %v1169
        %v1204 = vunpack.c.l.b16 %v1170
        %v1205 = vunpack.c.l.b16 %v1171
        %v1206 = vunpack.c.l.b16 %v1172
        %v1207 = vunpack.c.l.b16 %v1173
        %v1208 = vunpack.c.l.b16 %v1174
        %v1209 = vunpack.c.l.b16 %v1175
        %v1210 = vpack.c.b16 %v1195, %v1194
        %v1211 = vpack.c.b16 %v1197, %v1196
        %v1212 = vpack.c.b16 %v1199, %v1198
        %v1213 = vpack.c.b16 %v1201, %v1200
        %v1214 = vpack.c.b16 %v1203, %v1202
        %v1215 = vpack.c.b16 %v1205, %v1204
        %v1216 = vpack.c.b16 %v1207, %v1206
        %v1217 = vpack.c.b16 %v1209, %v1208
        %1226 = vmatpush.bf16.msra.mxu0 %v1217
        %1227 = vmatpush.bf16.msra.mxu0 %v1216
        %1228 = vmatpush.bf16.msra.mxu0 %v1215
        %1229 = vmatpush.bf16.msra.mxu0 %v1214
        %1230 = vmatpush.bf16.msra.mxu0 %v1213
        %1231 = vmatpush.bf16.msra.mxu0 %v1212
        %1232 = vmatpush.bf16.msra.mxu0 %v1211
        %1233 = vmatpush.bf16.msra.mxu0 %v1210
        %1234 = vmatmul.bf16.gmra.mxu0 %v1176
        %v1235 = vpop.f32.mrf.mxu0
        %v1236 = vadd.f32 0.0, %v1235
        %v1237 = vpop.f32.mrf.mxu0
        %1238 = vdwg.mxu0
        %v1239 = vadd.f32 %v1158, %v1236
        %s1240 = scalar_lea.vmem %s3, 256
        %v1241 = vld [vmem:[%s1240] sm:$0xf]
        %v1242 = vld [vmem:[%s1240 + $0x4] sm:$0xf]
        %v1243 = vld [vmem:[%s1240 + $0x8] sm:$0xf]
        %v1244 = vld [vmem:[%s1240 + $0xc] sm:$0xf]
        %v1245 = vld [vmem:[%s1240 + $0x10] sm:$0xf]
        %v1246 = vld [vmem:[%s1240 + $0x14] sm:$0xf]
        %v1247 = vld [vmem:[%s1240 + $0x18] sm:$0xf]
        %v1248 = vld [vmem:[%s1240 + $0x1c] sm:$0xf]
        %v1249 = vld [vmem:[%s1240 + $0x20] sm:$0xf]
        %v1250 = vld [vmem:[%s1240 + $0x24] sm:$0xf]
        %v1251 = vld [vmem:[%s1240 + $0x28] sm:$0xf]
        %v1252 = vld [vmem:[%s1240 + $0x2c] sm:$0xf]
        %v1253 = vld [vmem:[%s1240 + $0x30] sm:$0xf]
        %v1254 = vld [vmem:[%s1240 + $0x34] sm:$0xf]
        %v1255 = vld [vmem:[%s1240 + $0x38] sm:$0xf]
        %v1256 = vld [vmem:[%s1240 + $0x3c] sm:$0xf]
        %v1257 = vrot.slane %v915, 2
        %v1275 = vunpack.c.l.b16 %v1241
        %v1276 = vunpack.c.l.b16 %v1242
        %v1277 = vunpack.c.l.b16 %v1243
        %v1278 = vunpack.c.l.b16 %v1244
        %v1279 = vunpack.c.l.b16 %v1245
        %v1280 = vunpack.c.l.b16 %v1246
        %v1281 = vunpack.c.l.b16 %v1247
        %v1282 = vunpack.c.l.b16 %v1248
        %v1283 = vunpack.c.l.b16 %v1249
        %v1284 = vunpack.c.l.b16 %v1250
        %v1285 = vunpack.c.l.b16 %v1251
        %v1286 = vunpack.c.l.b16 %v1252
        %v1287 = vunpack.c.l.b16 %v1253
        %v1288 = vunpack.c.l.b16 %v1254
        %v1289 = vunpack.c.l.b16 %v1255
        %v1290 = vunpack.c.l.b16 %v1256
        %v1291 = vpack.c.b16 %v1276, %v1275
        %v1292 = vpack.c.b16 %v1278, %v1277
        %v1293 = vpack.c.b16 %v1280, %v1279
        %v1294 = vpack.c.b16 %v1282, %v1281
        %v1295 = vpack.c.b16 %v1284, %v1283
        %v1296 = vpack.c.b16 %v1286, %v1285
        %v1297 = vpack.c.b16 %v1288, %v1287
        %v1298 = vpack.c.b16 %v1290, %v1289
        %1307 = vmatpush.bf16.msra.mxu0 %v1298
        %1308 = vmatpush.bf16.msra.mxu0 %v1297
        %1309 = vmatpush.bf16.msra.mxu0 %v1296
        %1310 = vmatpush.bf16.msra.mxu0 %v1295
        %1311 = vmatpush.bf16.msra.mxu0 %v1294
        %1312 = vmatpush.bf16.msra.mxu0 %v1293
        %1313 = vmatpush.bf16.msra.mxu0 %v1292
        %1314 = vmatpush.bf16.msra.mxu0 %v1291
        %1315 = vmatmul.bf16.gmra.mxu0 %v1257
        %v1316 = vpop.f32.mrf.mxu0
        %v1317 = vadd.f32 0.0, %v1316
        %v1318 = vpop.f32.mrf.mxu0
        %1319 = vdwg.mxu0
        %v1320 = vadd.f32 %v1239, %v1317
        %s1321 = scalar_lea.vmem %s3, 320
        %v1322 = vld [vmem:[%s1321] sm:$0xf]
        %v1323 = vld [vmem:[%s1321 + $0x4] sm:$0xf]
        %v1324 = vld [vmem:[%s1321 + $0x8] sm:$0xf]
        %v1325 = vld [vmem:[%s1321 + $0xc] sm:$0xf]
        %v1326 = vld [vmem:[%s1321 + $0x10] sm:$0xf]
        %v1327 = vld [vmem:[%s1321 + $0x14] sm:$0xf]
        %v1328 = vld [vmem:[%s1321 + $0x18] sm:$0xf]
        %v1329 = vld [vmem:[%s1321 + $0x1c] sm:$0xf]
        %v1330 = vld [vmem:[%s1321 + $0x20] sm:$0xf]
        %v1331 = vld [vmem:[%s1321 + $0x24] sm:$0xf]
        %v1332 = vld [vmem:[%s1321 + $0x28] sm:$0xf]
        %v1333 = vld [vmem:[%s1321 + $0x2c] sm:$0xf]
        %v1334 = vld [vmem:[%s1321 + $0x30] sm:$0xf]
        %v1335 = vld [vmem:[%s1321 + $0x34] sm:$0xf]
        %v1336 = vld [vmem:[%s1321 + $0x38] sm:$0xf]
        %v1337 = vld [vmem:[%s1321 + $0x3c] sm:$0xf]
        %v1338 = vrot.slane %v1012, 2
        %v1356 = vunpack.c.l.b16 %v1322
        %v1357 = vunpack.c.l.b16 %v1323
        %v1358 = vunpack.c.l.b16 %v1324
        %v1359 = vunpack.c.l.b16 %v1325
        %v1360 = vunpack.c.l.b16 %v1326
        %v1361 = vunpack.c.l.b16 %v1327
        %v1362 = vunpack.c.l.b16 %v1328
        %v1363 = vunpack.c.l.b16 %v1329
        %v1364 = vunpack.c.l.b16 %v1330
        %v1365 = vunpack.c.l.b16 %v1331
        %v1366 = vunpack.c.l.b16 %v1332
        %v1367 = vunpack.c.l.b16 %v1333
        %v1368 = vunpack.c.l.b16 %v1334
        %v1369 = vunpack.c.l.b16 %v1335
        %v1370 = vunpack.c.l.b16 %v1336
        %v1371 = vunpack.c.l.b16 %v1337
        %v1372 = vpack.c.b16 %v1357, %v1356
        %v1373 = vpack.c.b16 %v1359, %v1358
        %v1374 = vpack.c.b16 %v1361, %v1360
        %v1375 = vpack.c.b16 %v1363, %v1362
        %v1376 = vpack.c.b16 %v1365, %v1364
        %v1377 = vpack.c.b16 %v1367, %v1366
        %v1378 = vpack.c.b16 %v1369, %v1368
        %v1379 = vpack.c.b16 %v1371, %v1370
        %1388 = vmatpush.bf16.msra.mxu0 %v1379
        %1389 = vmatpush.bf16.msra.mxu0 %v1378
        %1390 = vmatpush.bf16.msra.mxu0 %v1377
        %1391 = vmatpush.bf16.msra.mxu0 %v1376
        %1392 = vmatpush.bf16.msra.mxu0 %v1375
        %1393 = vmatpush.bf16.msra.mxu0 %v1374
        %1394 = vmatpush.bf16.msra.mxu0 %v1373
        %1395 = vmatpush.bf16.msra.mxu0 %v1372
        %1396 = vmatmul.bf16.gmra.mxu0 %v1338
        %v1397 = vpop.f32.mrf.mxu0
        %v1398 = vadd.f32 0.0, %v1397
        %v1399 = vpop.f32.mrf.mxu0
        %1400 = vdwg.mxu0
        %v1401 = vadd.f32 %v1320, %v1398
        %s1402 = scalar_lea.vmem %s3, 384
        %v1403 = vld [vmem:[%s1402] sm:$0xf]
        %v1404 = vld [vmem:[%s1402 + $0x4] sm:$0xf]
        %v1405 = vld [vmem:[%s1402 + $0x8] sm:$0xf]
        %v1406 = vld [vmem:[%s1402 + $0xc] sm:$0xf]
        %v1407 = vld [vmem:[%s1402 + $0x10] sm:$0xf]
        %v1408 = vld [vmem:[%s1402 + $0x14] sm:$0xf]
        %v1409 = vld [vmem:[%s1402 + $0x18] sm:$0xf]
        %v1410 = vld [vmem:[%s1402 + $0x1c] sm:$0xf]
        %v1411 = vld [vmem:[%s1402 + $0x20] sm:$0xf]
        %v1412 = vld [vmem:[%s1402 + $0x24] sm:$0xf]
        %v1413 = vld [vmem:[%s1402 + $0x28] sm:$0xf]
        %v1414 = vld [vmem:[%s1402 + $0x2c] sm:$0xf]
        %v1415 = vld [vmem:[%s1402 + $0x30] sm:$0xf]
        %v1416 = vld [vmem:[%s1402 + $0x34] sm:$0xf]
        %v1417 = vld [vmem:[%s1402 + $0x38] sm:$0xf]
        %v1418 = vld [vmem:[%s1402 + $0x3c] sm:$0xf]
        %v1419 = vrot.slane %v915, 3
        %v1437 = vunpack.c.l.b16 %v1403
        %v1438 = vunpack.c.l.b16 %v1404
        %v1439 = vunpack.c.l.b16 %v1405
        %v1440 = vunpack.c.l.b16 %v1406
        %v1441 = vunpack.c.l.b16 %v1407
        %v1442 = vunpack.c.l.b16 %v1408
        %v1443 = vunpack.c.l.b16 %v1409
        %v1444 = vunpack.c.l.b16 %v1410
        %v1445 = vunpack.c.l.b16 %v1411
        %v1446 = vunpack.c.l.b16 %v1412
        %v1447 = vunpack.c.l.b16 %v1413
        %v1448 = vunpack.c.l.b16 %v1414
        %v1449 = vunpack.c.l.b16 %v1415
        %v1450 = vunpack.c.l.b16 %v1416
        %v1451 = vunpack.c.l.b16 %v1417
        %v1452 = vunpack.c.l.b16 %v1418
        %v1453 = vpack.c.b16 %v1438, %v1437
        %v1454 = vpack.c.b16 %v1440, %v1439
        %v1455 = vpack.c.b16 %v1442, %v1441
        %v1456 = vpack.c.b16 %v1444, %v1443
        %v1457 = vpack.c.b16 %v1446, %v1445
        %v1458 = vpack.c.b16 %v1448, %v1447
        %v1459 = vpack.c.b16 %v1450, %v1449
        %v1460 = vpack.c.b16 %v1452, %v1451
        %1469 = vmatpush.bf16.msra.mxu0 %v1460
        %1470 = vmatpush.bf16.msra.mxu0 %v1459
        %1471 = vmatpush.bf16.msra.mxu0 %v1458
        %1472 = vmatpush.bf16.msra.mxu0 %v1457
        %1473 = vmatpush.bf16.msra.mxu0 %v1456
        %1474 = vmatpush.bf16.msra.mxu0 %v1455
        %1475 = vmatpush.bf16.msra.mxu0 %v1454
        %1476 = vmatpush.bf16.msra.mxu0 %v1453
        %1477 = vmatmul.bf16.gmra.mxu0 %v1419
        %v1478 = vpop.f32.mrf.mxu0
        %v1479 = vadd.f32 0.0, %v1478
        %v1480 = vpop.f32.mrf.mxu0
        %1481 = vdwg.mxu0
        %v1482 = vadd.f32 %v1401, %v1479
        %s1483 = scalar_lea.vmem %s3, 448
        %v1484 = vld [vmem:[%s1483] sm:$0xf]
        %v1485 = vld [vmem:[%s1483 + $0x4] sm:$0xf]
        %v1486 = vld [vmem:[%s1483 + $0x8] sm:$0xf]
        %v1487 = vld [vmem:[%s1483 + $0xc] sm:$0xf]
        %v1488 = vld [vmem:[%s1483 + $0x10] sm:$0xf]
        %v1489 = vld [vmem:[%s1483 + $0x14] sm:$0xf]
        %v1490 = vld [vmem:[%s1483 + $0x18] sm:$0xf]
        %v1491 = vld [vmem:[%s1483 + $0x1c] sm:$0xf]
        %v1492 = vld [vmem:[%s1483 + $0x20] sm:$0xf]
        %v1493 = vld [vmem:[%s1483 + $0x24] sm:$0xf]
        %v1494 = vld [vmem:[%s1483 + $0x28] sm:$0xf]
        %v1495 = vld [vmem:[%s1483 + $0x2c] sm:$0xf]
        %v1496 = vld [vmem:[%s1483 + $0x30] sm:$0xf]
        %v1497 = vld [vmem:[%s1483 + $0x34] sm:$0xf]
        %v1498 = vld [vmem:[%s1483 + $0x38] sm:$0xf]
        %v1499 = vld [vmem:[%s1483 + $0x3c] sm:$0xf]
        %v1500 = vrot.slane %v1012, 3
        %v1518 = vunpack.c.l.b16 %v1484
        %v1519 = vunpack.c.l.b16 %v1485
        %v1520 = vunpack.c.l.b16 %v1486
        %v1521 = vunpack.c.l.b16 %v1487
        %v1522 = vunpack.c.l.b16 %v1488
        %v1523 = vunpack.c.l.b16 %v1489
        %v1524 = vunpack.c.l.b16 %v1490
        %v1525 = vunpack.c.l.b16 %v1491
        %v1526 = vunpack.c.l.b16 %v1492
        %v1527 = vunpack.c.l.b16 %v1493
        %v1528 = vunpack.c.l.b16 %v1494
        %v1529 = vunpack.c.l.b16 %v1495
        %v1530 = vunpack.c.l.b16 %v1496
        %v1531 = vunpack.c.l.b16 %v1497
        %v1532 = vunpack.c.l.b16 %v1498
        %v1533 = vunpack.c.l.b16 %v1499
        %v1534 = vpack.c.b16 %v1519, %v1518
        %v1535 = vpack.c.b16 %v1521, %v1520
        %v1536 = vpack.c.b16 %v1523, %v1522
        %v1537 = vpack.c.b16 %v1525, %v1524
        %v1538 = vpack.c.b16 %v1527, %v1526
        %v1539 = vpack.c.b16 %v1529, %v1528
        %v1540 = vpack.c.b16 %v1531, %v1530
        %v1541 = vpack.c.b16 %v1533, %v1532
        %1550 = vmatpush.bf16.msra.mxu0 %v1541
        %1551 = vmatpush.bf16.msra.mxu0 %v1540
        %1552 = vmatpush.bf16.msra.mxu0 %v1539
        %1553 = vmatpush.bf16.msra.mxu0 %v1538
        %1554 = vmatpush.bf16.msra.mxu0 %v1537
        %1555 = vmatpush.bf16.msra.mxu0 %v1536
        %1556 = vmatpush.bf16.msra.mxu0 %v1535
        %1557 = vmatpush.bf16.msra.mxu0 %v1534
        %1558 = vmatmul.bf16.gmra.mxu0 %v1500
        %v1559 = vpop.f32.mrf.mxu0
        %v1560 = vadd.f32 0.0, %v1559
        %v1561 = vpop.f32.mrf.mxu0
        %1562 = vdwg.mxu0
        %v1563 = vadd.f32 %v1482, %v1560
        %v1564 = vpack.c.bf16 %v911, %v911
        %s1565 = scalar_lea.vmem %s3, 512
        %v1566 = vld [vmem:[%s1565] sm:$0xf]
        %v1567 = vld [vmem:[%s1565 + $0x4] sm:$0xf]
        %v1568 = vld [vmem:[%s1565 + $0x8] sm:$0xf]
        %v1569 = vld [vmem:[%s1565 + $0xc] sm:$0xf]
        %v1570 = vld [vmem:[%s1565 + $0x10] sm:$0xf]
        %v1571 = vld [vmem:[%s1565 + $0x14] sm:$0xf]
        %v1572 = vld [vmem:[%s1565 + $0x18] sm:$0xf]
        %v1573 = vld [vmem:[%s1565 + $0x1c] sm:$0xf]
        %v1574 = vld [vmem:[%s1565 + $0x20] sm:$0xf]
        %v1575 = vld [vmem:[%s1565 + $0x24] sm:$0xf]
        %v1576 = vld [vmem:[%s1565 + $0x28] sm:$0xf]
        %v1577 = vld [vmem:[%s1565 + $0x2c] sm:$0xf]
        %v1578 = vld [vmem:[%s1565 + $0x30] sm:$0xf]
        %v1579 = vld [vmem:[%s1565 + $0x34] sm:$0xf]
        %v1580 = vld [vmem:[%s1565 + $0x38] sm:$0xf]
        %v1581 = vld [vmem:[%s1565 + $0x3c] sm:$0xf]
        %v1598 = vunpack.c.l.b16 %v1566
        %v1599 = vunpack.c.l.b16 %v1567
        %v1600 = vunpack.c.l.b16 %v1568
        %v1601 = vunpack.c.l.b16 %v1569
        %v1602 = vunpack.c.l.b16 %v1570
        %v1603 = vunpack.c.l.b16 %v1571
        %v1604 = vunpack.c.l.b16 %v1572
        %v1605 = vunpack.c.l.b16 %v1573
        %v1606 = vunpack.c.l.b16 %v1574
        %v1607 = vunpack.c.l.b16 %v1575
        %v1608 = vunpack.c.l.b16 %v1576
        %v1609 = vunpack.c.l.b16 %v1577
        %v1610 = vunpack.c.l.b16 %v1578
        %v1611 = vunpack.c.l.b16 %v1579
        %v1612 = vunpack.c.l.b16 %v1580
        %v1613 = vunpack.c.l.b16 %v1581
        %v1614 = vpack.c.b16 %v1599, %v1598
        %v1615 = vpack.c.b16 %v1601, %v1600
        %v1616 = vpack.c.b16 %v1603, %v1602
        %v1617 = vpack.c.b16 %v1605, %v1604
        %v1618 = vpack.c.b16 %v1607, %v1606
        %v1619 = vpack.c.b16 %v1609, %v1608
        %v1620 = vpack.c.b16 %v1611, %v1610
        %v1621 = vpack.c.b16 %v1613, %v1612
        %1630 = vmatpush.bf16.msra.mxu0 %v1621
        %1631 = vmatpush.bf16.msra.mxu0 %v1620
        %1632 = vmatpush.bf16.msra.mxu0 %v1619
        %1633 = vmatpush.bf16.msra.mxu0 %v1618
        %1634 = vmatpush.bf16.msra.mxu0 %v1617
        %1635 = vmatpush.bf16.msra.mxu0 %v1616
        %1636 = vmatpush.bf16.msra.mxu0 %v1615
        %1637 = vmatpush.bf16.msra.mxu0 %v1614
        %1638 = vmatmul.bf16.gmra.mxu0 %v1564
        %v1639 = vpop.f32.mrf.mxu0
        %v1640 = vadd.f32 0.0, %v1639
        %v1641 = vpop.f32.mrf.mxu0
        %1642 = vdwg.mxu0
        %v1643 = vadd.f32 %v1563, %v1640
        %s1644 = scalar_lea.vmem %s3, 576
        %v1645 = vld [vmem:[%s1644] sm:$0xf]
        %v1646 = vld [vmem:[%s1644 + $0x4] sm:$0xf]
        %v1647 = vld [vmem:[%s1644 + $0x8] sm:$0xf]
        %v1648 = vld [vmem:[%s1644 + $0xc] sm:$0xf]
        %v1649 = vld [vmem:[%s1644 + $0x10] sm:$0xf]
        %v1650 = vld [vmem:[%s1644 + $0x14] sm:$0xf]
        %v1651 = vld [vmem:[%s1644 + $0x18] sm:$0xf]
        %v1652 = vld [vmem:[%s1644 + $0x1c] sm:$0xf]
        %v1653 = vld [vmem:[%s1644 + $0x20] sm:$0xf]
        %v1654 = vld [vmem:[%s1644 + $0x24] sm:$0xf]
        %v1655 = vld [vmem:[%s1644 + $0x28] sm:$0xf]
        %v1656 = vld [vmem:[%s1644 + $0x2c] sm:$0xf]
        %v1657 = vld [vmem:[%s1644 + $0x30] sm:$0xf]
        %v1658 = vld [vmem:[%s1644 + $0x34] sm:$0xf]
        %v1659 = vld [vmem:[%s1644 + $0x38] sm:$0xf]
        %v1660 = vld [vmem:[%s1644 + $0x3c] sm:$0xf]
        %v1662 = vshrl.u32 %v1564, 16
        %v1681 = vunpack.c.l.b16 %v1645
        %v1682 = vunpack.c.l.b16 %v1646
        %v1683 = vunpack.c.l.b16 %v1647
        %v1684 = vunpack.c.l.b16 %v1648
        %v1685 = vunpack.c.l.b16 %v1649
        %v1686 = vunpack.c.l.b16 %v1650
        %v1687 = vunpack.c.l.b16 %v1651
        %v1688 = vunpack.c.l.b16 %v1652
        %v1689 = vunpack.c.l.b16 %v1653
        %v1690 = vunpack.c.l.b16 %v1654
        %v1691 = vunpack.c.l.b16 %v1655
        %v1692 = vunpack.c.l.b16 %v1656
        %v1693 = vunpack.c.l.b16 %v1657
        %v1694 = vunpack.c.l.b16 %v1658
        %v1695 = vunpack.c.l.b16 %v1659
        %v1696 = vunpack.c.l.b16 %v1660
        %v1697 = vpack.c.b16 %v1682, %v1681
        %v1698 = vpack.c.b16 %v1684, %v1683
        %v1699 = vpack.c.b16 %v1686, %v1685
        %v1700 = vpack.c.b16 %v1688, %v1687
        %v1701 = vpack.c.b16 %v1690, %v1689
        %v1702 = vpack.c.b16 %v1692, %v1691
        %v1703 = vpack.c.b16 %v1694, %v1693
        %v1704 = vpack.c.b16 %v1696, %v1695
        %1713 = vmatpush.bf16.msra.mxu0 %v1704
        %1714 = vmatpush.bf16.msra.mxu0 %v1703
        %1715 = vmatpush.bf16.msra.mxu0 %v1702
        %1716 = vmatpush.bf16.msra.mxu0 %v1701
        %1717 = vmatpush.bf16.msra.mxu0 %v1700
        %1718 = vmatpush.bf16.msra.mxu0 %v1699
        %1719 = vmatpush.bf16.msra.mxu0 %v1698
        %1720 = vmatpush.bf16.msra.mxu0 %v1697
        %1721 = vmatmul.bf16.gmra.mxu0 %v1662
        %v1722 = vpop.f32.mrf.mxu0
        %v1723 = vadd.f32 0.0, %v1722
        %v1724 = vpop.f32.mrf.mxu0
        %1725 = vdwg.mxu0
        %v1726 = vadd.f32 %v1643, %v1723
        %s1727 = scalar_lea.vmem %s3, 640
        %v1728 = vld [vmem:[%s1727] sm:$0xf]
        %v1729 = vld [vmem:[%s1727 + $0x4] sm:$0xf]
        %v1730 = vld [vmem:[%s1727 + $0x8] sm:$0xf]
        %v1731 = vld [vmem:[%s1727 + $0xc] sm:$0xf]
        %v1732 = vld [vmem:[%s1727 + $0x10] sm:$0xf]
        %v1733 = vld [vmem:[%s1727 + $0x14] sm:$0xf]
        %v1734 = vld [vmem:[%s1727 + $0x18] sm:$0xf]
        %v1735 = vld [vmem:[%s1727 + $0x1c] sm:$0xf]
        %v1736 = vld [vmem:[%s1727 + $0x20] sm:$0xf]
        %v1737 = vld [vmem:[%s1727 + $0x24] sm:$0xf]
        %v1738 = vld [vmem:[%s1727 + $0x28] sm:$0xf]
        %v1739 = vld [vmem:[%s1727 + $0x2c] sm:$0xf]
        %v1740 = vld [vmem:[%s1727 + $0x30] sm:$0xf]
        %v1741 = vld [vmem:[%s1727 + $0x34] sm:$0xf]
        %v1742 = vld [vmem:[%s1727 + $0x38] sm:$0xf]
        %v1743 = vld [vmem:[%s1727 + $0x3c] sm:$0xf]
        %v1745 = vrot.slane %v1564, 1
        %v1763 = vunpack.c.l.b16 %v1728
        %v1764 = vunpack.c.l.b16 %v1729
        %v1765 = vunpack.c.l.b16 %v1730
        %v1766 = vunpack.c.l.b16 %v1731
        %v1767 = vunpack.c.l.b16 %v1732
        %v1768 = vunpack.c.l.b16 %v1733
        %v1769 = vunpack.c.l.b16 %v1734
        %v1770 = vunpack.c.l.b16 %v1735
        %v1771 = vunpack.c.l.b16 %v1736
        %v1772 = vunpack.c.l.b16 %v1737
        %v1773 = vunpack.c.l.b16 %v1738
        %v1774 = vunpack.c.l.b16 %v1739
        %v1775 = vunpack.c.l.b16 %v1740
        %v1776 = vunpack.c.l.b16 %v1741
        %v1777 = vunpack.c.l.b16 %v1742
        %v1778 = vunpack.c.l.b16 %v1743
        %v1779 = vpack.c.b16 %v1764, %v1763
        %v1780 = vpack.c.b16 %v1766, %v1765
        %v1781 = vpack.c.b16 %v1768, %v1767
        %v1782 = vpack.c.b16 %v1770, %v1769
        %v1783 = vpack.c.b16 %v1772, %v1771
        %v1784 = vpack.c.b16 %v1774, %v1773
        %v1785 = vpack.c.b16 %v1776, %v1775
        %v1786 = vpack.c.b16 %v1778, %v1777
        %1795 = vmatpush.bf16.msra.mxu0 %v1786
        %1796 = vmatpush.bf16.msra.mxu0 %v1785
        %1797 = vmatpush.bf16.msra.mxu0 %v1784
        %1798 = vmatpush.bf16.msra.mxu0 %v1783
        %1799 = vmatpush.bf16.msra.mxu0 %v1782
        %1800 = vmatpush.bf16.msra.mxu0 %v1781
        %1801 = vmatpush.bf16.msra.mxu0 %v1780
        %1802 = vmatpush.bf16.msra.mxu0 %v1779
        %1803 = vmatmul.bf16.gmra.mxu0 %v1745
        %v1804 = vpop.f32.mrf.mxu0
        %v1805 = vadd.f32 0.0, %v1804
        %v1806 = vpop.f32.mrf.mxu0
        %1807 = vdwg.mxu0
        %v1808 = vadd.f32 %v1726, %v1805
        %s1809 = scalar_lea.vmem %s3, 704
        %v1810 = vld [vmem:[%s1809] sm:$0xf]
        %v1811 = vld [vmem:[%s1809 + $0x4] sm:$0xf]
        %v1812 = vld [vmem:[%s1809 + $0x8] sm:$0xf]
        %v1813 = vld [vmem:[%s1809 + $0xc] sm:$0xf]
        %v1814 = vld [vmem:[%s1809 + $0x10] sm:$0xf]
        %v1815 = vld [vmem:[%s1809 + $0x14] sm:$0xf]
        %v1816 = vld [vmem:[%s1809 + $0x18] sm:$0xf]
        %v1817 = vld [vmem:[%s1809 + $0x1c] sm:$0xf]
        %v1818 = vld [vmem:[%s1809 + $0x20] sm:$0xf]
        %v1819 = vld [vmem:[%s1809 + $0x24] sm:$0xf]
        %v1820 = vld [vmem:[%s1809 + $0x28] sm:$0xf]
        %v1821 = vld [vmem:[%s1809 + $0x2c] sm:$0xf]
        %v1822 = vld [vmem:[%s1809 + $0x30] sm:$0xf]
        %v1823 = vld [vmem:[%s1809 + $0x34] sm:$0xf]
        %v1824 = vld [vmem:[%s1809 + $0x38] sm:$0xf]
        %v1825 = vld [vmem:[%s1809 + $0x3c] sm:$0xf]
        %v1826 = vrot.slane %v1662, 1
        %v1844 = vunpack.c.l.b16 %v1810
        %v1845 = vunpack.c.l.b16 %v1811
        %v1846 = vunpack.c.l.b16 %v1812
        %v1847 = vunpack.c.l.b16 %v1813
        %v1848 = vunpack.c.l.b16 %v1814
        %v1849 = vunpack.c.l.b16 %v1815
        %v1850 = vunpack.c.l.b16 %v1816
        %v1851 = vunpack.c.l.b16 %v1817
        %v1852 = vunpack.c.l.b16 %v1818
        %v1853 = vunpack.c.l.b16 %v1819
        %v1854 = vunpack.c.l.b16 %v1820
        %v1855 = vunpack.c.l.b16 %v1821
        %v1856 = vunpack.c.l.b16 %v1822
        %v1857 = vunpack.c.l.b16 %v1823
        %v1858 = vunpack.c.l.b16 %v1824
        %v1859 = vunpack.c.l.b16 %v1825
        %v1860 = vpack.c.b16 %v1845, %v1844
        %v1861 = vpack.c.b16 %v1847, %v1846
        %v1862 = vpack.c.b16 %v1849, %v1848
        %v1863 = vpack.c.b16 %v1851, %v1850
        %v1864 = vpack.c.b16 %v1853, %v1852
        %v1865 = vpack.c.b16 %v1855, %v1854
        %v1866 = vpack.c.b16 %v1857, %v1856
        %v1867 = vpack.c.b16 %v1859, %v1858
        %1876 = vmatpush.bf16.msra.mxu0 %v1867
        %1877 = vmatpush.bf16.msra.mxu0 %v1866
        %1878 = vmatpush.bf16.msra.mxu0 %v1865
        %1879 = vmatpush.bf16.msra.mxu0 %v1864
        %1880 = vmatpush.bf16.msra.mxu0 %v1863
        %1881 = vmatpush.bf16.msra.mxu0 %v1862
        %1882 = vmatpush.bf16.msra.mxu0 %v1861
        %1883 = vmatpush.bf16.msra.mxu0 %v1860
        %1884 = vmatmul.bf16.gmra.mxu0 %v1826
        %v1885 = vpop.f32.mrf.mxu0
        %v1886 = vadd.f32 0.0, %v1885
        %v1887 = vpop.f32.mrf.mxu0
        %1888 = vdwg.mxu0
        %v1889 = vadd.f32 %v1808, %v1886
        %s1890 = scalar_lea.vmem %s3, 768
        %v1891 = vld [vmem:[%s1890] sm:$0xf]
        %v1892 = vld [vmem:[%s1890 + $0x4] sm:$0xf]
        %v1893 = vld [vmem:[%s1890 + $0x8] sm:$0xf]
        %v1894 = vld [vmem:[%s1890 + $0xc] sm:$0xf]
        %v1895 = vld [vmem:[%s1890 + $0x10] sm:$0xf]
        %v1896 = vld [vmem:[%s1890 + $0x14] sm:$0xf]
        %v1897 = vld [vmem:[%s1890 + $0x18] sm:$0xf]
        %v1898 = vld [vmem:[%s1890 + $0x1c] sm:$0xf]
        %v1899 = vld [vmem:[%s1890 + $0x20] sm:$0xf]
        %v1900 = vld [vmem:[%s1890 + $0x24] sm:$0xf]
        %v1901 = vld [vmem:[%s1890 + $0x28] sm:$0xf]
        %v1902 = vld [vmem:[%s1890 + $0x2c] sm:$0xf]
        %v1903 = vld [vmem:[%s1890 + $0x30] sm:$0xf]
        %v1904 = vld [vmem:[%s1890 + $0x34] sm:$0xf]
        %v1905 = vld [vmem:[%s1890 + $0x38] sm:$0xf]
        %v1906 = vld [vmem:[%s1890 + $0x3c] sm:$0xf]
        %v1907 = vrot.slane %v1564, 2
        %v1925 = vunpack.c.l.b16 %v1891
        %v1926 = vunpack.c.l.b16 %v1892
        %v1927 = vunpack.c.l.b16 %v1893
        %v1928 = vunpack.c.l.b16 %v1894
        %v1929 = vunpack.c.l.b16 %v1895
        %v1930 = vunpack.c.l.b16 %v1896
        %v1931 = vunpack.c.l.b16 %v1897
        %v1932 = vunpack.c.l.b16 %v1898
        %v1933 = vunpack.c.l.b16 %v1899
        %v1934 = vunpack.c.l.b16 %v1900
        %v1935 = vunpack.c.l.b16 %v1901
        %v1936 = vunpack.c.l.b16 %v1902
        %v1937 = vunpack.c.l.b16 %v1903
        %v1938 = vunpack.c.l.b16 %v1904
        %v1939 = vunpack.c.l.b16 %v1905
        %v1940 = vunpack.c.l.b16 %v1906
        %v1941 = vpack.c.b16 %v1926, %v1925
        %v1942 = vpack.c.b16 %v1928, %v1927
        %v1943 = vpack.c.b16 %v1930, %v1929
        %v1944 = vpack.c.b16 %v1932, %v1931
        %v1945 = vpack.c.b16 %v1934, %v1933
        %v1946 = vpack.c.b16 %v1936, %v1935
        %v1947 = vpack.c.b16 %v1938, %v1937
        %v1948 = vpack.c.b16 %v1940, %v1939
        %1957 = vmatpush.bf16.msra.mxu0 %v1948
        %1958 = vmatpush.bf16.msra.mxu0 %v1947
        %1959 = vmatpush.bf16.msra.mxu0 %v1946
        %1960 = vmatpush.bf16.msra.mxu0 %v1945
        %1961 = vmatpush.bf16.msra.mxu0 %v1944
        %1962 = vmatpush.bf16.msra.mxu0 %v1943
        %1963 = vmatpush.bf16.msra.mxu0 %v1942
        %1964 = vmatpush.bf16.msra.mxu0 %v1941
        %1965 = vmatmul.bf16.gmra.mxu0 %v1907
        %v1966 = vpop.f32.mrf.mxu0
        %v1967 = vadd.f32 0.0, %v1966
        %v1968 = vpop.f32.mrf.mxu0
        %1969 = vdwg.mxu0
        %v1970 = vadd.f32 %v1889, %v1967
        %s1971 = scalar_lea.vmem %s3, 832
        %v1972 = vld [vmem:[%s1971] sm:$0xf]
        %v1973 = vld [vmem:[%s1971 + $0x4] sm:$0xf]
        %v1974 = vld [vmem:[%s1971 + $0x8] sm:$0xf]
        %v1975 = vld [vmem:[%s1971 + $0xc] sm:$0xf]
        %v1976 = vld [vmem:[%s1971 + $0x10] sm:$0xf]
        %v1977 = vld [vmem:[%s1971 + $0x14] sm:$0xf]
        %v1978 = vld [vmem:[%s1971 + $0x18] sm:$0xf]
        %v1979 = vld [vmem:[%s1971 + $0x1c] sm:$0xf]
        %v1980 = vld [vmem:[%s1971 + $0x20] sm:$0xf]
        %v1981 = vld [vmem:[%s1971 + $0x24] sm:$0xf]
        %v1982 = vld [vmem:[%s1971 + $0x28] sm:$0xf]
        %v1983 = vld [vmem:[%s1971 + $0x2c] sm:$0xf]
        %v1984 = vld [vmem:[%s1971 + $0x30] sm:$0xf]
        %v1985 = vld [vmem:[%s1971 + $0x34] sm:$0xf]
        %v1986 = vld [vmem:[%s1971 + $0x38] sm:$0xf]
        %v1987 = vld [vmem:[%s1971 + $0x3c] sm:$0xf]
        %v1988 = vrot.slane %v1662, 2
        %v2006 = vunpack.c.l.b16 %v1972
        %v2007 = vunpack.c.l.b16 %v1973
        %v2008 = vunpack.c.l.b16 %v1974
        %v2009 = vunpack.c.l.b16 %v1975
        %v2010 = vunpack.c.l.b16 %v1976
        %v2011 = vunpack.c.l.b16 %v1977
        %v2012 = vunpack.c.l.b16 %v1978
        %v2013 = vunpack.c.l.b16 %v1979
        %v2014 = vunpack.c.l.b16 %v1980
        %v2015 = vunpack.c.l.b16 %v1981
        %v2016 = vunpack.c.l.b16 %v1982
        %v2017 = vunpack.c.l.b16 %v1983
        %v2018 = vunpack.c.l.b16 %v1984
        %v2019 = vunpack.c.l.b16 %v1985
        %v2020 = vunpack.c.l.b16 %v1986
        %v2021 = vunpack.c.l.b16 %v1987
        %v2022 = vpack.c.b16 %v2007, %v2006
        %v2023 = vpack.c.b16 %v2009, %v2008
        %v2024 = vpack.c.b16 %v2011, %v2010
        %v2025 = vpack.c.b16 %v2013, %v2012
        %v2026 = vpack.c.b16 %v2015, %v2014
        %v2027 = vpack.c.b16 %v2017, %v2016
        %v2028 = vpack.c.b16 %v2019, %v2018
        %v2029 = vpack.c.b16 %v2021, %v2020
        %2038 = vmatpush.bf16.msra.mxu0 %v2029
        %2039 = vmatpush.bf16.msra.mxu0 %v2028
        %2040 = vmatpush.bf16.msra.mxu0 %v2027
        %2041 = vmatpush.bf16.msra.mxu0 %v2026
        %2042 = vmatpush.bf16.msra.mxu0 %v2025
        %2043 = vmatpush.bf16.msra.mxu0 %v2024
        %2044 = vmatpush.bf16.msra.mxu0 %v2023
        %2045 = vmatpush.bf16.msra.mxu0 %v2022
        %2046 = vmatmul.bf16.gmra.mxu0 %v1988
        %v2047 = vpop.f32.mrf.mxu0
        %v2048 = vadd.f32 0.0, %v2047
        %v2049 = vpop.f32.mrf.mxu0
        %2050 = vdwg.mxu0
        %v2051 = vadd.f32 %v1970, %v2048
        %s2052 = scalar_lea.vmem %s3, 896
        %v2053 = vld [vmem:[%s2052] sm:$0xf]
        %v2054 = vld [vmem:[%s2052 + $0x4] sm:$0xf]
        %v2055 = vld [vmem:[%s2052 + $0x8] sm:$0xf]
        %v2056 = vld [vmem:[%s2052 + $0xc] sm:$0xf]
        %v2057 = vld [vmem:[%s2052 + $0x10] sm:$0xf]
        %v2058 = vld [vmem:[%s2052 + $0x14] sm:$0xf]
        %v2059 = vld [vmem:[%s2052 + $0x18] sm:$0xf]
        %v2060 = vld [vmem:[%s2052 + $0x1c] sm:$0xf]
        %v2061 = vld [vmem:[%s2052 + $0x20] sm:$0xf]
        %v2062 = vld [vmem:[%s2052 + $0x24] sm:$0xf]
        %v2063 = vld [vmem:[%s2052 + $0x28] sm:$0xf]
        %v2064 = vld [vmem:[%s2052 + $0x2c] sm:$0xf]
        %v2065 = vld [vmem:[%s2052 + $0x30] sm:$0xf]
        %v2066 = vld [vmem:[%s2052 + $0x34] sm:$0xf]
        %v2067 = vld [vmem:[%s2052 + $0x38] sm:$0xf]
        %v2068 = vld [vmem:[%s2052 + $0x3c] sm:$0xf]
        %v2069 = vrot.slane %v1564, 3
        %v2087 = vunpack.c.l.b16 %v2053
        %v2088 = vunpack.c.l.b16 %v2054
        %v2089 = vunpack.c.l.b16 %v2055
        %v2090 = vunpack.c.l.b16 %v2056
        %v2091 = vunpack.c.l.b16 %v2057
        %v2092 = vunpack.c.l.b16 %v2058
        %v2093 = vunpack.c.l.b16 %v2059
        %v2094 = vunpack.c.l.b16 %v2060
        %v2095 = vunpack.c.l.b16 %v2061
        %v2096 = vunpack.c.l.b16 %v2062
        %v2097 = vunpack.c.l.b16 %v2063
        %v2098 = vunpack.c.l.b16 %v2064
        %v2099 = vunpack.c.l.b16 %v2065
        %v2100 = vunpack.c.l.b16 %v2066
        %v2101 = vunpack.c.l.b16 %v2067
        %v2102 = vunpack.c.l.b16 %v2068
        %v2103 = vpack.c.b16 %v2088, %v2087
        %v2104 = vpack.c.b16 %v2090, %v2089
        %v2105 = vpack.c.b16 %v2092, %v2091
        %v2106 = vpack.c.b16 %v2094, %v2093
        %v2107 = vpack.c.b16 %v2096, %v2095
        %v2108 = vpack.c.b16 %v2098, %v2097
        %v2109 = vpack.c.b16 %v2100, %v2099
        %v2110 = vpack.c.b16 %v2102, %v2101
        %2119 = vmatpush.bf16.msra.mxu0 %v2110
        %2120 = vmatpush.bf16.msra.mxu0 %v2109
        %2121 = vmatpush.bf16.msra.mxu0 %v2108
        %2122 = vmatpush.bf16.msra.mxu0 %v2107
        %2123 = vmatpush.bf16.msra.mxu0 %v2106
        %2124 = vmatpush.bf16.msra.mxu0 %v2105
        %2125 = vmatpush.bf16.msra.mxu0 %v2104
        %2126 = vmatpush.bf16.msra.mxu0 %v2103
        %2127 = vmatmul.bf16.gmra.mxu0 %v2069
        %v2128 = vpop.f32.mrf.mxu0
        %v2129 = vadd.f32 0.0, %v2128
        %v2130 = vpop.f32.mrf.mxu0
        %2131 = vdwg.mxu0
        %v2132 = vadd.f32 %v2051, %v2129
        %s2133 = scalar_lea.vmem %s3, 960
        %v2134 = vld [vmem:[%s2133] sm:$0xf]
        %v2135 = vld [vmem:[%s2133 + $0x4] sm:$0xf]
        %v2136 = vld [vmem:[%s2133 + $0x8] sm:$0xf]
        %v2137 = vld [vmem:[%s2133 + $0xc] sm:$0xf]
        %v2138 = vld [vmem:[%s2133 + $0x10] sm:$0xf]
        %v2139 = vld [vmem:[%s2133 + $0x14] sm:$0xf]
        %v2140 = vld [vmem:[%s2133 + $0x18] sm:$0xf]
        %v2141 = vld [vmem:[%s2133 + $0x1c] sm:$0xf]
        %v2142 = vld [vmem:[%s2133 + $0x20] sm:$0xf]
        %v2143 = vld [vmem:[%s2133 + $0x24] sm:$0xf]
        %v2144 = vld [vmem:[%s2133 + $0x28] sm:$0xf]
        %v2145 = vld [vmem:[%s2133 + $0x2c] sm:$0xf]
        %v2146 = vld [vmem:[%s2133 + $0x30] sm:$0xf]
        %v2147 = vld [vmem:[%s2133 + $0x34] sm:$0xf]
        %v2148 = vld [vmem:[%s2133 + $0x38] sm:$0xf]
        %v2149 = vld [vmem:[%s2133 + $0x3c] sm:$0xf]
        %v2150 = vrot.slane %v1662, 3
        %v2168 = vunpack.c.l.b16 %v2134
        %v2169 = vunpack.c.l.b16 %v2135
        %v2170 = vunpack.c.l.b16 %v2136
        %v2171 = vunpack.c.l.b16 %v2137
        %v2172 = vunpack.c.l.b16 %v2138
        %v2173 = vunpack.c.l.b16 %v2139
        %v2174 = vunpack.c.l.b16 %v2140
        %v2175 = vunpack.c.l.b16 %v2141
        %v2176 = vunpack.c.l.b16 %v2142
        %v2177 = vunpack.c.l.b16 %v2143
        %v2178 = vunpack.c.l.b16 %v2144
        %v2179 = vunpack.c.l.b16 %v2145
        %v2180 = vunpack.c.l.b16 %v2146
        %v2181 = vunpack.c.l.b16 %v2147
        %v2182 = vunpack.c.l.b16 %v2148
        %v2183 = vunpack.c.l.b16 %v2149
        %v2184 = vpack.c.b16 %v2169, %v2168
        %v2185 = vpack.c.b16 %v2171, %v2170
        %v2186 = vpack.c.b16 %v2173, %v2172
        %v2187 = vpack.c.b16 %v2175, %v2174
        %v2188 = vpack.c.b16 %v2177, %v2176
        %v2189 = vpack.c.b16 %v2179, %v2178
        %v2190 = vpack.c.b16 %v2181, %v2180
        %v2191 = vpack.c.b16 %v2183, %v2182
        %2200 = vmatpush.bf16.msra.mxu0 %v2191
        %2201 = vmatpush.bf16.msra.mxu0 %v2190
        %2202 = vmatpush.bf16.msra.mxu0 %v2189
        %2203 = vmatpush.bf16.msra.mxu0 %v2188
        %2204 = vmatpush.bf16.msra.mxu0 %v2187
        %2205 = vmatpush.bf16.msra.mxu0 %v2186
        %2206 = vmatpush.bf16.msra.mxu0 %v2185
        %2207 = vmatpush.bf16.msra.mxu0 %v2184
        %2208 = vmatmul.bf16.gmra.mxu0 %v2150
        %v2209 = vpop.f32.mrf.mxu0
        %v2210 = vadd.f32 0.0, %v2209
        %v2211 = vpop.f32.mrf.mxu0
        %2212 = vdwg.mxu0
        %v2213 = vadd.f32 %v2132, %v2210
        %v2214 = vpack.c.bf16 %v912, %v912
        %s2215 = scalar_lea.vmem %s3, 1024
        %v2216 = vld [vmem:[%s2215] sm:$0xf]
        %v2217 = vld [vmem:[%s2215 + $0x4] sm:$0xf]
        %v2218 = vld [vmem:[%s2215 + $0x8] sm:$0xf]
        %v2219 = vld [vmem:[%s2215 + $0xc] sm:$0xf]
        %v2220 = vld [vmem:[%s2215 + $0x10] sm:$0xf]
        %v2221 = vld [vmem:[%s2215 + $0x14] sm:$0xf]
        %v2222 = vld [vmem:[%s2215 + $0x18] sm:$0xf]
        %v2223 = vld [vmem:[%s2215 + $0x1c] sm:$0xf]
        %v2224 = vld [vmem:[%s2215 + $0x20] sm:$0xf]
        %v2225 = vld [vmem:[%s2215 + $0x24] sm:$0xf]
        %v2226 = vld [vmem:[%s2215 + $0x28] sm:$0xf]
        %v2227 = vld [vmem:[%s2215 + $0x2c] sm:$0xf]
        %v2228 = vld [vmem:[%s2215 + $0x30] sm:$0xf]
        %v2229 = vld [vmem:[%s2215 + $0x34] sm:$0xf]
        %v2230 = vld [vmem:[%s2215 + $0x38] sm:$0xf]
        %v2231 = vld [vmem:[%s2215 + $0x3c] sm:$0xf]
        %v2248 = vunpack.c.l.b16 %v2216
        %v2249 = vunpack.c.l.b16 %v2217
        %v2250 = vunpack.c.l.b16 %v2218
        %v2251 = vunpack.c.l.b16 %v2219
        %v2252 = vunpack.c.l.b16 %v2220
        %v2253 = vunpack.c.l.b16 %v2221
        %v2254 = vunpack.c.l.b16 %v2222
        %v2255 = vunpack.c.l.b16 %v2223
        %v2256 = vunpack.c.l.b16 %v2224
        %v2257 = vunpack.c.l.b16 %v2225
        %v2258 = vunpack.c.l.b16 %v2226
        %v2259 = vunpack.c.l.b16 %v2227
        %v2260 = vunpack.c.l.b16 %v2228
        %v2261 = vunpack.c.l.b16 %v2229
        %v2262 = vunpack.c.l.b16 %v2230
        %v2263 = vunpack.c.l.b16 %v2231
        %v2264 = vpack.c.b16 %v2249, %v2248
        %v2265 = vpack.c.b16 %v2251, %v2250
        %v2266 = vpack.c.b16 %v2253, %v2252
        %v2267 = vpack.c.b16 %v2255, %v2254
        %v2268 = vpack.c.b16 %v2257, %v2256
        %v2269 = vpack.c.b16 %v2259, %v2258
        %v2270 = vpack.c.b16 %v2261, %v2260
        %v2271 = vpack.c.b16 %v2263, %v2262
        %2280 = vmatpush.bf16.msra.mxu0 %v2271
        %2281 = vmatpush.bf16.msra.mxu0 %v2270
        %2282 = vmatpush.bf16.msra.mxu0 %v2269
        %2283 = vmatpush.bf16.msra.mxu0 %v2268
        %2284 = vmatpush.bf16.msra.mxu0 %v2267
        %2285 = vmatpush.bf16.msra.mxu0 %v2266
        %2286 = vmatpush.bf16.msra.mxu0 %v2265
        %2287 = vmatpush.bf16.msra.mxu0 %v2264
        %2288 = vmatmul.bf16.gmra.mxu0 %v2214
        %v2289 = vpop.f32.mrf.mxu0
        %v2290 = vadd.f32 0.0, %v2289
        %v2291 = vpop.f32.mrf.mxu0
        %2292 = vdwg.mxu0
        %v2293 = vadd.f32 %v2213, %v2290
        %s2294 = scalar_lea.vmem %s3, 1088
        %v2295 = vld [vmem:[%s2294] sm:$0xf]
        %v2296 = vld [vmem:[%s2294 + $0x4] sm:$0xf]
        %v2297 = vld [vmem:[%s2294 + $0x8] sm:$0xf]
        %v2298 = vld [vmem:[%s2294 + $0xc] sm:$0xf]
        %v2299 = vld [vmem:[%s2294 + $0x10] sm:$0xf]
        %v2300 = vld [vmem:[%s2294 + $0x14] sm:$0xf]
        %v2301 = vld [vmem:[%s2294 + $0x18] sm:$0xf]
        %v2302 = vld [vmem:[%s2294 + $0x1c] sm:$0xf]
        %v2303 = vld [vmem:[%s2294 + $0x20] sm:$0xf]
        %v2304 = vld [vmem:[%s2294 + $0x24] sm:$0xf]
        %v2305 = vld [vmem:[%s2294 + $0x28] sm:$0xf]
        %v2306 = vld [vmem:[%s2294 + $0x2c] sm:$0xf]
        %v2307 = vld [vmem:[%s2294 + $0x30] sm:$0xf]
        %v2308 = vld [vmem:[%s2294 + $0x34] sm:$0xf]
        %v2309 = vld [vmem:[%s2294 + $0x38] sm:$0xf]
        %v2310 = vld [vmem:[%s2294 + $0x3c] sm:$0xf]
        %v2312 = vshrl.u32 %v2214, 16
        %v2331 = vunpack.c.l.b16 %v2295
        %v2332 = vunpack.c.l.b16 %v2296
        %v2333 = vunpack.c.l.b16 %v2297
        %v2334 = vunpack.c.l.b16 %v2298
        %v2335 = vunpack.c.l.b16 %v2299
        %v2336 = vunpack.c.l.b16 %v2300
        %v2337 = vunpack.c.l.b16 %v2301
        %v2338 = vunpack.c.l.b16 %v2302
        %v2339 = vunpack.c.l.b16 %v2303
        %v2340 = vunpack.c.l.b16 %v2304
        %v2341 = vunpack.c.l.b16 %v2305
        %v2342 = vunpack.c.l.b16 %v2306
        %v2343 = vunpack.c.l.b16 %v2307
        %v2344 = vunpack.c.l.b16 %v2308
        %v2345 = vunpack.c.l.b16 %v2309
        %v2346 = vunpack.c.l.b16 %v2310
        %v2347 = vpack.c.b16 %v2332, %v2331
        %v2348 = vpack.c.b16 %v2334, %v2333
        %v2349 = vpack.c.b16 %v2336, %v2335
        %v2350 = vpack.c.b16 %v2338, %v2337
        %v2351 = vpack.c.b16 %v2340, %v2339
        %v2352 = vpack.c.b16 %v2342, %v2341
        %v2353 = vpack.c.b16 %v2344, %v2343
        %v2354 = vpack.c.b16 %v2346, %v2345
        %2363 = vmatpush.bf16.msra.mxu0 %v2354
        %2364 = vmatpush.bf16.msra.mxu0 %v2353
        %2365 = vmatpush.bf16.msra.mxu0 %v2352
        %2366 = vmatpush.bf16.msra.mxu0 %v2351
        %2367 = vmatpush.bf16.msra.mxu0 %v2350
        %2368 = vmatpush.bf16.msra.mxu0 %v2349
        %2369 = vmatpush.bf16.msra.mxu0 %v2348
        %2370 = vmatpush.bf16.msra.mxu0 %v2347
        %2371 = vmatmul.bf16.gmra.mxu0 %v2312
        %v2372 = vpop.f32.mrf.mxu0
        %v2373 = vadd.f32 0.0, %v2372
        %v2374 = vpop.f32.mrf.mxu0
        %2375 = vdwg.mxu0
        %v2376 = vadd.f32 %v2293, %v2373
        %s2377 = scalar_lea.vmem %s3, 1152
        %v2378 = vld [vmem:[%s2377] sm:$0xf]
        %v2379 = vld [vmem:[%s2377 + $0x4] sm:$0xf]
        %v2380 = vld [vmem:[%s2377 + $0x8] sm:$0xf]
        %v2381 = vld [vmem:[%s2377 + $0xc] sm:$0xf]
        %v2382 = vld [vmem:[%s2377 + $0x10] sm:$0xf]
        %v2383 = vld [vmem:[%s2377 + $0x14] sm:$0xf]
        %v2384 = vld [vmem:[%s2377 + $0x18] sm:$0xf]
        %v2385 = vld [vmem:[%s2377 + $0x1c] sm:$0xf]
        %v2386 = vld [vmem:[%s2377 + $0x20] sm:$0xf]
        %v2387 = vld [vmem:[%s2377 + $0x24] sm:$0xf]
        %v2388 = vld [vmem:[%s2377 + $0x28] sm:$0xf]
        %v2389 = vld [vmem:[%s2377 + $0x2c] sm:$0xf]
        %v2390 = vld [vmem:[%s2377 + $0x30] sm:$0xf]
        %v2391 = vld [vmem:[%s2377 + $0x34] sm:$0xf]
        %v2392 = vld [vmem:[%s2377 + $0x38] sm:$0xf]
        %v2393 = vld [vmem:[%s2377 + $0x3c] sm:$0xf]
        %v2395 = vrot.slane %v2214, 1
        %v2413 = vunpack.c.l.b16 %v2378
        %v2414 = vunpack.c.l.b16 %v2379
        %v2415 = vunpack.c.l.b16 %v2380
        %v2416 = vunpack.c.l.b16 %v2381
        %v2417 = vunpack.c.l.b16 %v2382
        %v2418 = vunpack.c.l.b16 %v2383
        %v2419 = vunpack.c.l.b16 %v2384
        %v2420 = vunpack.c.l.b16 %v2385
        %v2421 = vunpack.c.l.b16 %v2386
        %v2422 = vunpack.c.l.b16 %v2387
        %v2423 = vunpack.c.l.b16 %v2388
        %v2424 = vunpack.c.l.b16 %v2389
        %v2425 = vunpack.c.l.b16 %v2390
        %v2426 = vunpack.c.l.b16 %v2391
        %v2427 = vunpack.c.l.b16 %v2392
        %v2428 = vunpack.c.l.b16 %v2393
        %v2429 = vpack.c.b16 %v2414, %v2413
        %v2430 = vpack.c.b16 %v2416, %v2415
        %v2431 = vpack.c.b16 %v2418, %v2417
        %v2432 = vpack.c.b16 %v2420, %v2419
        %v2433 = vpack.c.b16 %v2422, %v2421
        %v2434 = vpack.c.b16 %v2424, %v2423
        %v2435 = vpack.c.b16 %v2426, %v2425
        %v2436 = vpack.c.b16 %v2428, %v2427
        %2445 = vmatpush.bf16.msra.mxu0 %v2436
        %2446 = vmatpush.bf16.msra.mxu0 %v2435
        %2447 = vmatpush.bf16.msra.mxu0 %v2434
        %2448 = vmatpush.bf16.msra.mxu0 %v2433
        %2449 = vmatpush.bf16.msra.mxu0 %v2432
        %2450 = vmatpush.bf16.msra.mxu0 %v2431
        %2451 = vmatpush.bf16.msra.mxu0 %v2430
        %2452 = vmatpush.bf16.msra.mxu0 %v2429
        %2453 = vmatmul.bf16.gmra.mxu0 %v2395
        %v2454 = vpop.f32.mrf.mxu0
        %v2455 = vadd.f32 0.0, %v2454
        %v2456 = vpop.f32.mrf.mxu0
        %2457 = vdwg.mxu0
        %v2458 = vadd.f32 %v2376, %v2455
        %s2459 = scalar_lea.vmem %s3, 1216
        %v2460 = vld [vmem:[%s2459] sm:$0xf]
        %v2461 = vld [vmem:[%s2459 + $0x4] sm:$0xf]
        %v2462 = vld [vmem:[%s2459 + $0x8] sm:$0xf]
        %v2463 = vld [vmem:[%s2459 + $0xc] sm:$0xf]
        %v2464 = vld [vmem:[%s2459 + $0x10] sm:$0xf]
        %v2465 = vld [vmem:[%s2459 + $0x14] sm:$0xf]
        %v2466 = vld [vmem:[%s2459 + $0x18] sm:$0xf]
        %v2467 = vld [vmem:[%s2459 + $0x1c] sm:$0xf]
        %v2468 = vld [vmem:[%s2459 + $0x20] sm:$0xf]
        %v2469 = vld [vmem:[%s2459 + $0x24] sm:$0xf]
        %v2470 = vld [vmem:[%s2459 + $0x28] sm:$0xf]
        %v2471 = vld [vmem:[%s2459 + $0x2c] sm:$0xf]
        %v2472 = vld [vmem:[%s2459 + $0x30] sm:$0xf]
        %v2473 = vld [vmem:[%s2459 + $0x34] sm:$0xf]
        %v2474 = vld [vmem:[%s2459 + $0x38] sm:$0xf]
        %v2475 = vld [vmem:[%s2459 + $0x3c] sm:$0xf]
        %v2476 = vrot.slane %v2312, 1
        %v2494 = vunpack.c.l.b16 %v2460
        %v2495 = vunpack.c.l.b16 %v2461
        %v2496 = vunpack.c.l.b16 %v2462
        %v2497 = vunpack.c.l.b16 %v2463
        %v2498 = vunpack.c.l.b16 %v2464
        %v2499 = vunpack.c.l.b16 %v2465
        %v2500 = vunpack.c.l.b16 %v2466
        %v2501 = vunpack.c.l.b16 %v2467
        %v2502 = vunpack.c.l.b16 %v2468
        %v2503 = vunpack.c.l.b16 %v2469
        %v2504 = vunpack.c.l.b16 %v2470
        %v2505 = vunpack.c.l.b16 %v2471
        %v2506 = vunpack.c.l.b16 %v2472
        %v2507 = vunpack.c.l.b16 %v2473
        %v2508 = vunpack.c.l.b16 %v2474
        %v2509 = vunpack.c.l.b16 %v2475
        %v2510 = vpack.c.b16 %v2495, %v2494
        %v2511 = vpack.c.b16 %v2497, %v2496
        %v2512 = vpack.c.b16 %v2499, %v2498
        %v2513 = vpack.c.b16 %v2501, %v2500
        %v2514 = vpack.c.b16 %v2503, %v2502
        %v2515 = vpack.c.b16 %v2505, %v2504
        %v2516 = vpack.c.b16 %v2507, %v2506
        %v2517 = vpack.c.b16 %v2509, %v2508
        %2526 = vmatpush.bf16.msra.mxu0 %v2517
        %2527 = vmatpush.bf16.msra.mxu0 %v2516
        %2528 = vmatpush.bf16.msra.mxu0 %v2515
        %2529 = vmatpush.bf16.msra.mxu0 %v2514
        %2530 = vmatpush.bf16.msra.mxu0 %v2513
        %2531 = vmatpush.bf16.msra.mxu0 %v2512
        %2532 = vmatpush.bf16.msra.mxu0 %v2511
        %2533 = vmatpush.bf16.msra.mxu0 %v2510
        %2534 = vmatmul.bf16.gmra.mxu0 %v2476
        %v2535 = vpop.f32.mrf.mxu0
        %v2536 = vadd.f32 0.0, %v2535
        %v2537 = vpop.f32.mrf.mxu0
        %2538 = vdwg.mxu0
        %v2539 = vadd.f32 %v2458, %v2536
        %s2540 = scalar_lea.vmem %s3, 1280
        %v2541 = vld [vmem:[%s2540] sm:$0xf]
        %v2542 = vld [vmem:[%s2540 + $0x4] sm:$0xf]
        %v2543 = vld [vmem:[%s2540 + $0x8] sm:$0xf]
        %v2544 = vld [vmem:[%s2540 + $0xc] sm:$0xf]
        %v2545 = vld [vmem:[%s2540 + $0x10] sm:$0xf]
        %v2546 = vld [vmem:[%s2540 + $0x14] sm:$0xf]
        %v2547 = vld [vmem:[%s2540 + $0x18] sm:$0xf]
        %v2548 = vld [vmem:[%s2540 + $0x1c] sm:$0xf]
        %v2549 = vld [vmem:[%s2540 + $0x20] sm:$0xf]
        %v2550 = vld [vmem:[%s2540 + $0x24] sm:$0xf]
        %v2551 = vld [vmem:[%s2540 + $0x28] sm:$0xf]
        %v2552 = vld [vmem:[%s2540 + $0x2c] sm:$0xf]
        %v2553 = vld [vmem:[%s2540 + $0x30] sm:$0xf]
        %v2554 = vld [vmem:[%s2540 + $0x34] sm:$0xf]
        %v2555 = vld [vmem:[%s2540 + $0x38] sm:$0xf]
        %v2556 = vld [vmem:[%s2540 + $0x3c] sm:$0xf]
        %v2557 = vrot.slane %v2214, 2
        %v2575 = vunpack.c.l.b16 %v2541
        %v2576 = vunpack.c.l.b16 %v2542
        %v2577 = vunpack.c.l.b16 %v2543
        %v2578 = vunpack.c.l.b16 %v2544
        %v2579 = vunpack.c.l.b16 %v2545
        %v2580 = vunpack.c.l.b16 %v2546
        %v2581 = vunpack.c.l.b16 %v2547
        %v2582 = vunpack.c.l.b16 %v2548
        %v2583 = vunpack.c.l.b16 %v2549
        %v2584 = vunpack.c.l.b16 %v2550
        %v2585 = vunpack.c.l.b16 %v2551
        %v2586 = vunpack.c.l.b16 %v2552
        %v2587 = vunpack.c.l.b16 %v2553
        %v2588 = vunpack.c.l.b16 %v2554
        %v2589 = vunpack.c.l.b16 %v2555
        %v2590 = vunpack.c.l.b16 %v2556
        %v2591 = vpack.c.b16 %v2576, %v2575
        %v2592 = vpack.c.b16 %v2578, %v2577
        %v2593 = vpack.c.b16 %v2580, %v2579
        %v2594 = vpack.c.b16 %v2582, %v2581
        %v2595 = vpack.c.b16 %v2584, %v2583
        %v2596 = vpack.c.b16 %v2586, %v2585
        %v2597 = vpack.c.b16 %v2588, %v2587
        %v2598 = vpack.c.b16 %v2590, %v2589
        %2607 = vmatpush.bf16.msra.mxu0 %v2598
        %2608 = vmatpush.bf16.msra.mxu0 %v2597
        %2609 = vmatpush.bf16.msra.mxu0 %v2596
        %2610 = vmatpush.bf16.msra.mxu0 %v2595
        %2611 = vmatpush.bf16.msra.mxu0 %v2594
        %2612 = vmatpush.bf16.msra.mxu0 %v2593
        %2613 = vmatpush.bf16.msra.mxu0 %v2592
        %2614 = vmatpush.bf16.msra.mxu0 %v2591
        %2615 = vmatmul.bf16.gmra.mxu0 %v2557
        %v2616 = vpop.f32.mrf.mxu0
        %v2617 = vadd.f32 0.0, %v2616
        %v2618 = vpop.f32.mrf.mxu0
        %2619 = vdwg.mxu0
        %v2620 = vadd.f32 %v2539, %v2617
        %s2621 = scalar_lea.vmem %s3, 1344
        %v2622 = vld [vmem:[%s2621] sm:$0xf]
        %v2623 = vld [vmem:[%s2621 + $0x4] sm:$0xf]
        %v2624 = vld [vmem:[%s2621 + $0x8] sm:$0xf]
        %v2625 = vld [vmem:[%s2621 + $0xc] sm:$0xf]
        %v2626 = vld [vmem:[%s2621 + $0x10] sm:$0xf]
        %v2627 = vld [vmem:[%s2621 + $0x14] sm:$0xf]
        %v2628 = vld [vmem:[%s2621 + $0x18] sm:$0xf]
        %v2629 = vld [vmem:[%s2621 + $0x1c] sm:$0xf]
        %v2630 = vld [vmem:[%s2621 + $0x20] sm:$0xf]
        %v2631 = vld [vmem:[%s2621 + $0x24] sm:$0xf]
        %v2632 = vld [vmem:[%s2621 + $0x28] sm:$0xf]
        %v2633 = vld [vmem:[%s2621 + $0x2c] sm:$0xf]
        %v2634 = vld [vmem:[%s2621 + $0x30] sm:$0xf]
        %v2635 = vld [vmem:[%s2621 + $0x34] sm:$0xf]
        %v2636 = vld [vmem:[%s2621 + $0x38] sm:$0xf]
        %v2637 = vld [vmem:[%s2621 + $0x3c] sm:$0xf]
        %v2638 = vrot.slane %v2312, 2
        %v2656 = vunpack.c.l.b16 %v2622
        %v2657 = vunpack.c.l.b16 %v2623
        %v2658 = vunpack.c.l.b16 %v2624
        %v2659 = vunpack.c.l.b16 %v2625
        %v2660 = vunpack.c.l.b16 %v2626
        %v2661 = vunpack.c.l.b16 %v2627
        %v2662 = vunpack.c.l.b16 %v2628
        %v2663 = vunpack.c.l.b16 %v2629
        %v2664 = vunpack.c.l.b16 %v2630
        %v2665 = vunpack.c.l.b16 %v2631
        %v2666 = vunpack.c.l.b16 %v2632
        %v2667 = vunpack.c.l.b16 %v2633
        %v2668 = vunpack.c.l.b16 %v2634
        %v2669 = vunpack.c.l.b16 %v2635
        %v2670 = vunpack.c.l.b16 %v2636
        %v2671 = vunpack.c.l.b16 %v2637
        %v2672 = vpack.c.b16 %v2657, %v2656
        %v2673 = vpack.c.b16 %v2659, %v2658
        %v2674 = vpack.c.b16 %v2661, %v2660
        %v2675 = vpack.c.b16 %v2663, %v2662
        %v2676 = vpack.c.b16 %v2665, %v2664
        %v2677 = vpack.c.b16 %v2667, %v2666
        %v2678 = vpack.c.b16 %v2669, %v2668
        %v2679 = vpack.c.b16 %v2671, %v2670
        %2688 = vmatpush.bf16.msra.mxu0 %v2679
        %2689 = vmatpush.bf16.msra.mxu0 %v2678
        %2690 = vmatpush.bf16.msra.mxu0 %v2677
        %2691 = vmatpush.bf16.msra.mxu0 %v2676
        %2692 = vmatpush.bf16.msra.mxu0 %v2675
        %2693 = vmatpush.bf16.msra.mxu0 %v2674
        %2694 = vmatpush.bf16.msra.mxu0 %v2673
        %2695 = vmatpush.bf16.msra.mxu0 %v2672
        %2696 = vmatmul.bf16.gmra.mxu0 %v2638
        %v2697 = vpop.f32.mrf.mxu0
        %v2698 = vadd.f32 0.0, %v2697
        %v2699 = vpop.f32.mrf.mxu0
        %2700 = vdwg.mxu0
        %v2701 = vadd.f32 %v2620, %v2698
        %s2702 = scalar_lea.vmem %s3, 1408
        %v2703 = vld [vmem:[%s2702] sm:$0xf]
        %v2704 = vld [vmem:[%s2702 + $0x4] sm:$0xf]
        %v2705 = vld [vmem:[%s2702 + $0x8] sm:$0xf]
        %v2706 = vld [vmem:[%s2702 + $0xc] sm:$0xf]
        %v2707 = vld [vmem:[%s2702 + $0x10] sm:$0xf]
        %v2708 = vld [vmem:[%s2702 + $0x14] sm:$0xf]
        %v2709 = vld [vmem:[%s2702 + $0x18] sm:$0xf]
        %v2710 = vld [vmem:[%s2702 + $0x1c] sm:$0xf]
        %v2711 = vld [vmem:[%s2702 + $0x20] sm:$0xf]
        %v2712 = vld [vmem:[%s2702 + $0x24] sm:$0xf]
        %v2713 = vld [vmem:[%s2702 + $0x28] sm:$0xf]
        %v2714 = vld [vmem:[%s2702 + $0x2c] sm:$0xf]
        %v2715 = vld [vmem:[%s2702 + $0x30] sm:$0xf]
        %v2716 = vld [vmem:[%s2702 + $0x34] sm:$0xf]
        %v2717 = vld [vmem:[%s2702 + $0x38] sm:$0xf]
        %v2718 = vld [vmem:[%s2702 + $0x3c] sm:$0xf]
        %v2719 = vrot.slane %v2214, 3
        %v2737 = vunpack.c.l.b16 %v2703
        %v2738 = vunpack.c.l.b16 %v2704
        %v2739 = vunpack.c.l.b16 %v2705
        %v2740 = vunpack.c.l.b16 %v2706
        %v2741 = vunpack.c.l.b16 %v2707
        %v2742 = vunpack.c.l.b16 %v2708
        %v2743 = vunpack.c.l.b16 %v2709
        %v2744 = vunpack.c.l.b16 %v2710
        %v2745 = vunpack.c.l.b16 %v2711
        %v2746 = vunpack.c.l.b16 %v2712
        %v2747 = vunpack.c.l.b16 %v2713
        %v2748 = vunpack.c.l.b16 %v2714
        %v2749 = vunpack.c.l.b16 %v2715
        %v2750 = vunpack.c.l.b16 %v2716
        %v2751 = vunpack.c.l.b16 %v2717
        %v2752 = vunpack.c.l.b16 %v2718
        %v2753 = vpack.c.b16 %v2738, %v2737
        %v2754 = vpack.c.b16 %v2740, %v2739
        %v2755 = vpack.c.b16 %v2742, %v2741
        %v2756 = vpack.c.b16 %v2744, %v2743
        %v2757 = vpack.c.b16 %v2746, %v2745
        %v2758 = vpack.c.b16 %v2748, %v2747
        %v2759 = vpack.c.b16 %v2750, %v2749
        %v2760 = vpack.c.b16 %v2752, %v2751
        %2769 = vmatpush.bf16.msra.mxu0 %v2760
        %2770 = vmatpush.bf16.msra.mxu0 %v2759
        %2771 = vmatpush.bf16.msra.mxu0 %v2758
        %2772 = vmatpush.bf16.msra.mxu0 %v2757
        %2773 = vmatpush.bf16.msra.mxu0 %v2756
        %2774 = vmatpush.bf16.msra.mxu0 %v2755
        %2775 = vmatpush.bf16.msra.mxu0 %v2754
        %2776 = vmatpush.bf16.msra.mxu0 %v2753
        %2777 = vmatmul.bf16.gmra.mxu0 %v2719
        %v2778 = vpop.f32.mrf.mxu0
        %v2779 = vadd.f32 0.0, %v2778
        %v2780 = vpop.f32.mrf.mxu0
        %2781 = vdwg.mxu0
        %v2782 = vadd.f32 %v2701, %v2779
        %s2783 = scalar_lea.vmem %s3, 1472
        %v2784 = vld [vmem:[%s2783] sm:$0xf]
        %v2785 = vld [vmem:[%s2783 + $0x4] sm:$0xf]
        %v2786 = vld [vmem:[%s2783 + $0x8] sm:$0xf]
        %v2787 = vld [vmem:[%s2783 + $0xc] sm:$0xf]
        %v2788 = vld [vmem:[%s2783 + $0x10] sm:$0xf]
        %v2789 = vld [vmem:[%s2783 + $0x14] sm:$0xf]
        %v2790 = vld [vmem:[%s2783 + $0x18] sm:$0xf]
        %v2791 = vld [vmem:[%s2783 + $0x1c] sm:$0xf]
        %v2792 = vld [vmem:[%s2783 + $0x20] sm:$0xf]
        %v2793 = vld [vmem:[%s2783 + $0x24] sm:$0xf]
        %v2794 = vld [vmem:[%s2783 + $0x28] sm:$0xf]
        %v2795 = vld [vmem:[%s2783 + $0x2c] sm:$0xf]
        %v2796 = vld [vmem:[%s2783 + $0x30] sm:$0xf]
        %v2797 = vld [vmem:[%s2783 + $0x34] sm:$0xf]
        %v2798 = vld [vmem:[%s2783 + $0x38] sm:$0xf]
        %v2799 = vld [vmem:[%s2783 + $0x3c] sm:$0xf]
        %v2800 = vrot.slane %v2312, 3
        %v2818 = vunpack.c.l.b16 %v2784
        %v2819 = vunpack.c.l.b16 %v2785
        %v2820 = vunpack.c.l.b16 %v2786
        %v2821 = vunpack.c.l.b16 %v2787
        %v2822 = vunpack.c.l.b16 %v2788
        %v2823 = vunpack.c.l.b16 %v2789
        %v2824 = vunpack.c.l.b16 %v2790
        %v2825 = vunpack.c.l.b16 %v2791
        %v2826 = vunpack.c.l.b16 %v2792
        %v2827 = vunpack.c.l.b16 %v2793
        %v2828 = vunpack.c.l.b16 %v2794
        %v2829 = vunpack.c.l.b16 %v2795
        %v2830 = vunpack.c.l.b16 %v2796
        %v2831 = vunpack.c.l.b16 %v2797
        %v2832 = vunpack.c.l.b16 %v2798
        %v2833 = vunpack.c.l.b16 %v2799
        %v2834 = vpack.c.b16 %v2819, %v2818
        %v2835 = vpack.c.b16 %v2821, %v2820
        %v2836 = vpack.c.b16 %v2823, %v2822
        %v2837 = vpack.c.b16 %v2825, %v2824
        %v2838 = vpack.c.b16 %v2827, %v2826
        %v2839 = vpack.c.b16 %v2829, %v2828
        %v2840 = vpack.c.b16 %v2831, %v2830
        %v2841 = vpack.c.b16 %v2833, %v2832
        %2850 = vmatpush.bf16.msra.mxu0 %v2841
        %2851 = vmatpush.bf16.msra.mxu0 %v2840
        %2852 = vmatpush.bf16.msra.mxu0 %v2839
        %2853 = vmatpush.bf16.msra.mxu0 %v2838
        %2854 = vmatpush.bf16.msra.mxu0 %v2837
        %2855 = vmatpush.bf16.msra.mxu0 %v2836
        %2856 = vmatpush.bf16.msra.mxu0 %v2835
        %2857 = vmatpush.bf16.msra.mxu0 %v2834
        %2858 = vmatmul.bf16.gmra.mxu0 %v2800
        %v2859 = vpop.f32.mrf.mxu0
        %v2860 = vadd.f32 0.0, %v2859
        %v2861 = vpop.f32.mrf.mxu0
        %2862 = vdwg.mxu0
        %v2863 = vadd.f32 %v2782, %v2860
        %v2864 = vpack.c.bf16 %v913, %v913
        %s2865 = scalar_lea.vmem %s3, 1536
        %v2866 = vld [vmem:[%s2865] sm:$0xf]
        %v2867 = vld [vmem:[%s2865 + $0x4] sm:$0xf]
        %v2868 = vld [vmem:[%s2865 + $0x8] sm:$0xf]
        %v2869 = vld [vmem:[%s2865 + $0xc] sm:$0xf]
        %v2870 = vld [vmem:[%s2865 + $0x10] sm:$0xf]
        %v2871 = vld [vmem:[%s2865 + $0x14] sm:$0xf]
        %v2872 = vld [vmem:[%s2865 + $0x18] sm:$0xf]
        %v2873 = vld [vmem:[%s2865 + $0x1c] sm:$0xf]
        %v2874 = vld [vmem:[%s2865 + $0x20] sm:$0xf]
        %v2875 = vld [vmem:[%s2865 + $0x24] sm:$0xf]
        %v2876 = vld [vmem:[%s2865 + $0x28] sm:$0xf]
        %v2877 = vld [vmem:[%s2865 + $0x2c] sm:$0xf]
        %v2878 = vld [vmem:[%s2865 + $0x30] sm:$0xf]
        %v2879 = vld [vmem:[%s2865 + $0x34] sm:$0xf]
        %v2880 = vld [vmem:[%s2865 + $0x38] sm:$0xf]
        %v2881 = vld [vmem:[%s2865 + $0x3c] sm:$0xf]
        %v2898 = vunpack.c.l.b16 %v2866
        %v2899 = vunpack.c.l.b16 %v2867
        %v2900 = vunpack.c.l.b16 %v2868
        %v2901 = vunpack.c.l.b16 %v2869
        %v2902 = vunpack.c.l.b16 %v2870
        %v2903 = vunpack.c.l.b16 %v2871
        %v2904 = vunpack.c.l.b16 %v2872
        %v2905 = vunpack.c.l.b16 %v2873
        %v2906 = vunpack.c.l.b16 %v2874
        %v2907 = vunpack.c.l.b16 %v2875
        %v2908 = vunpack.c.l.b16 %v2876
        %v2909 = vunpack.c.l.b16 %v2877
        %v2910 = vunpack.c.l.b16 %v2878
        %v2911 = vunpack.c.l.b16 %v2879
        %v2912 = vunpack.c.l.b16 %v2880
        %v2913 = vunpack.c.l.b16 %v2881
        %v2914 = vpack.c.b16 %v2899, %v2898
        %v2915 = vpack.c.b16 %v2901, %v2900
        %v2916 = vpack.c.b16 %v2903, %v2902
        %v2917 = vpack.c.b16 %v2905, %v2904
        %v2918 = vpack.c.b16 %v2907, %v2906
        %v2919 = vpack.c.b16 %v2909, %v2908
        %v2920 = vpack.c.b16 %v2911, %v2910
        %v2921 = vpack.c.b16 %v2913, %v2912
        %2930 = vmatpush.bf16.msra.mxu0 %v2921
        %2931 = vmatpush.bf16.msra.mxu0 %v2920
        %2932 = vmatpush.bf16.msra.mxu0 %v2919
        %2933 = vmatpush.bf16.msra.mxu0 %v2918
        %2934 = vmatpush.bf16.msra.mxu0 %v2917
        %2935 = vmatpush.bf16.msra.mxu0 %v2916
        %2936 = vmatpush.bf16.msra.mxu0 %v2915
        %2937 = vmatpush.bf16.msra.mxu0 %v2914
        %2938 = vmatmul.bf16.gmra.mxu0 %v2864
        %v2939 = vpop.f32.mrf.mxu0
        %v2940 = vadd.f32 0.0, %v2939
        %v2941 = vpop.f32.mrf.mxu0
        %2942 = vdwg.mxu0
        %v2943 = vadd.f32 %v2863, %v2940
        %v2944 = vmax.f32 %v2943, 0.0
        %v2945 = vpack.c.bf16 %v2944, %v2944
        %v2946 = vld [vmem:[%s5] sm:$0xf]
        %v2947 = vld [vmem:[%s5 + $0x4] sm:$0xf]
        %v2948 = vld [vmem:[%s5 + $0x8] sm:$0xf]
        %v2949 = vld [vmem:[%s5 + $0xc] sm:$0xf]
        %v2950 = vld [vmem:[%s5 + $0x10] sm:$0xf]
        %v2951 = vld [vmem:[%s5 + $0x14] sm:$0xf]
        %v2952 = vld [vmem:[%s5 + $0x18] sm:$0xf]
        %v2953 = vld [vmem:[%s5 + $0x1c] sm:$0xf]
        %v2954 = vld [vmem:[%s5 + $0x20] sm:$0xf]
        %v2955 = vld [vmem:[%s5 + $0x24] sm:$0xf]
        %v2956 = vld [vmem:[%s5 + $0x28] sm:$0xf]
        %v2957 = vld [vmem:[%s5 + $0x2c] sm:$0xf]
        %v2958 = vld [vmem:[%s5 + $0x30] sm:$0xf]
        %v2959 = vld [vmem:[%s5 + $0x34] sm:$0xf]
        %v2960 = vld [vmem:[%s5 + $0x38] sm:$0xf]
        %v2961 = vld [vmem:[%s5 + $0x3c] sm:$0xf]
        %v2962 = vld [vmem:[%s6] sm:$0x1]
        %v2979 = vunpack.c.l.b16 %v2946
        %v2980 = vunpack.c.l.b16 %v2947
        %v2981 = vunpack.c.l.b16 %v2948
        %v2982 = vunpack.c.l.b16 %v2949
        %v2983 = vunpack.c.l.b16 %v2950
        %v2984 = vunpack.c.l.b16 %v2951
        %v2985 = vunpack.c.l.b16 %v2952
        %v2986 = vunpack.c.l.b16 %v2953
        %v2987 = vunpack.c.l.b16 %v2954
        %v2988 = vunpack.c.l.b16 %v2955
        %v2989 = vunpack.c.l.b16 %v2956
        %v2990 = vunpack.c.l.b16 %v2957
        %v2991 = vunpack.c.l.b16 %v2958
        %v2992 = vunpack.c.l.b16 %v2959
        %v2993 = vunpack.c.l.b16 %v2960
        %v2994 = vunpack.c.l.b16 %v2961
        %v2995 = vpack.c.b16 %v2980, %v2979
        %v2996 = vpack.c.b16 %v2982, %v2981
        %v2997 = vpack.c.b16 %v2984, %v2983
        %v2998 = vpack.c.b16 %v2986, %v2985
        %v2999 = vpack.c.b16 %v2988, %v2987
        %v3000 = vpack.c.b16 %v2990, %v2989
        %v3001 = vpack.c.b16 %v2992, %v2991
        %v3002 = vpack.c.b16 %v2994, %v2993
        %3011 = vmatpush.bf16.msra.mxu0 %v3002
        %3012 = vmatpush.bf16.msra.mxu0 %v3001
        %3013 = vmatpush.bf16.msra.mxu0 %v3000
        %3014 = vmatpush.bf16.msra.mxu0 %v2999
        %3015 = vmatpush.bf16.msra.mxu0 %v2998
        %3016 = vmatpush.bf16.msra.mxu0 %v2997
        %3017 = vmatpush.bf16.msra.mxu0 %v2996
        %3018 = vmatpush.bf16.msra.mxu0 %v2995
        %3019 = vmatmul.bf16.gmra.mxu0 %v2945
        %v3020 = vpop.f32.mrf.mxu0
        %v3021 = vadd.f32 %v2962, %v3020
        %v3022 = vpop.f32.mrf.mxu0
        %3023 = vdwg.mxu0
        %v3024 = vmax.f32 %v3021, 0.0
        %v3025 = vpack.c.bf16 %v3024, %v3024
        %v3026 = vld [vmem:[%s7] sm:$0xf]
        %v3027 = vld [vmem:[%s7 + $0x4] sm:$0xf]
        %v3028 = vld [vmem:[%s7 + $0x8] sm:$0xf]
        %v3029 = vld [vmem:[%s7 + $0xc] sm:$0xf]
        %v3030 = vld [vmem:[%s7 + $0x10] sm:$0xf]
        %v3031 = vld [vmem:[%s7 + $0x14] sm:$0xf]
        %v3032 = vld [vmem:[%s7 + $0x18] sm:$0xf]
        %v3033 = vld [vmem:[%s7 + $0x1c] sm:$0xf]
        %v3034 = vld [vmem:[%s7 + $0x20] sm:$0xf]
        %v3035 = vld [vmem:[%s7 + $0x24] sm:$0xf]
        %v3036 = vld [vmem:[%s7 + $0x28] sm:$0xf]
        %v3037 = vld [vmem:[%s7 + $0x2c] sm:$0xf]
        %v3038 = vld [vmem:[%s7 + $0x30] sm:$0xf]
        %v3039 = vld [vmem:[%s7 + $0x34] sm:$0xf]
        %v3040 = vld [vmem:[%s7 + $0x38] sm:$0xf]
        %v3041 = vld [vmem:[%s7 + $0x3c] sm:$0xf]
        %v3042 = vld [vmem:[%s8] sm:$0x1]
        %v3059 = vunpack.c.l.b16 %v3026
        %v3060 = vunpack.c.l.b16 %v3027
        %v3061 = vunpack.c.l.b16 %v3028
        %v3062 = vunpack.c.l.b16 %v3029
        %v3063 = vunpack.c.l.b16 %v3030
        %v3064 = vunpack.c.l.b16 %v3031
        %v3065 = vunpack.c.l.b16 %v3032
        %v3066 = vunpack.c.l.b16 %v3033
        %v3067 = vunpack.c.l.b16 %v3034
        %v3068 = vunpack.c.l.b16 %v3035
        %v3069 = vunpack.c.l.b16 %v3036
        %v3070 = vunpack.c.l.b16 %v3037
        %v3071 = vunpack.c.l.b16 %v3038
        %v3072 = vunpack.c.l.b16 %v3039
        %v3073 = vunpack.c.l.b16 %v3040
        %v3074 = vunpack.c.l.b16 %v3041
        %v3075 = vpack.c.b16 %v3060, %v3059
        %v3076 = vpack.c.b16 %v3062, %v3061
        %v3077 = vpack.c.b16 %v3064, %v3063
        %v3078 = vpack.c.b16 %v3066, %v3065
        %v3079 = vpack.c.b16 %v3068, %v3067
        %v3080 = vpack.c.b16 %v3070, %v3069
        %v3081 = vpack.c.b16 %v3072, %v3071
        %v3082 = vpack.c.b16 %v3074, %v3073
        %3091 = vmatpush.bf16.msra.mxu0 %v3082
        %3092 = vmatpush.bf16.msra.mxu0 %v3081
        %3093 = vmatpush.bf16.msra.mxu0 %v3080
        %3094 = vmatpush.bf16.msra.mxu0 %v3079
        %3095 = vmatpush.bf16.msra.mxu0 %v3078
        %3096 = vmatpush.bf16.msra.mxu0 %v3077
        %3097 = vmatpush.bf16.msra.mxu0 %v3076
        %3098 = vmatpush.bf16.msra.mxu0 %v3075
        %3099 = vmatmul.bf16.gmra.mxu0 %v3025
        %v3100 = vpop.f32.mrf.mxu0
        %v3101 = vadd.f32 %v3042, %v3100
        %v3102 = vpop.f32.mrf.mxu0
        %3103 = vdwg.mxu0
        %3104 = vst [vmem:[%s324] sm:$0x1] %v3101
        %s3105 = sand.u32 %s225, 1
        %s3106 = scalar_lea.sflag [#allocation3], %s3105
        %s3107 = sand.u32 %s225, 1
        %s3108 = scalar_lea.vmem [#allocation2], %s3107
        // Predicated region
        $region57: #{net_forward.3} parent=55 // pred_check
          %p3109 = pneg %p235
        $region58: #{net_forward.3} parent=55 // pred_check_branch
          %3111 = sbr.rel (%p3109) target = $region60
        $region59: #{net_forward.3} parent=55 // pred_region
          %3113 = vsyncadd %s3106, 0
          %s3114 = scalar_lea.hbm %s9, %s23
          %s3116 = sshll.u32 %s3108, 4
          %s3117 = int_to_ptr.vmem [resolvable:$true] %s3116
          %s3118 = sshll.u32 %s3114, 4
          %s3119 = int_to_ptr.hbm [resolvable:$true] %s3118
          %3121 = dma.vmem_to_hbm [thread:$0]  %s3117, 16, %s3119, %s3106
        $region60: #{net_forward.3} parent=55 // pred_fallthru
          _
      $region56: #{net_forward.3} parent=5 // pred_fallthru
        _
      %p3122 = scmp.le.s32.totalorder 2, %s18
      // Predicated region
      $region61: #{net_forward.3} parent=5 // pred_check
        %p3123 = pneg %p3122
      $region62: #{net_forward.3} parent=5 // pred_check_branch
        %3125 = sbr.rel (%p3123) target = $region64
      $region63: #{net_forward.3} parent=5 // pred_region
        %s3126 = ssub.s32 %s18, 2
        // Predicated region
        $region65: #{net_forward.3} parent=63 // pred_check
          %p3127 = pneg %p241
        $region66: #{net_forward.3} parent=63 // pred_check_branch
          %3129 = sbr.rel (%p3127) target = $region68
        $region67: #{net_forward.3} parent=63 // pred_region
          %s3130 = sand.u32 %s226, 1
          %s3131 = scalar_lea.sflag [#allocation3], %s3130
          %s3132 = sand.u32 %s226, 1
          %s3133 = scalar_lea.vmem [#allocation2], %s3132
          %3135 = dma.done %s3131, 16
        $region68: #{net_forward.3} parent=63 // pred_fallthru
          _
      $region64: #{net_forward.3} parent=5 // pred_fallthru
        _
    $region6: #{net_forward.3} parent=1 // loop_footer
      %s22 = sadd.s32 1, %s18
    $region7: #{net_forward.3} parent=1 // loop_footer_branch
      %17 = sbr.rel target = $region3
    $region8: #{net_forward.3} parent=1 // loop_exit
      _
    %3136 = vsyncpa [#allocation3], 1
    %s3137 = scalar_lea.sflag [#allocation3], 1
    %3138 = vsyncpa %s3137, 1

</llo_original>
